<compile_context>
chip_gen: v7x
topology: tpu7x:2x2x1
jax: 0.10.0
libtpu: 0.0.40
codegen_flags: <defaults>
</compile_context>

<pallas_src>
import numpy as np
import jax
import jax.numpy as jnp
from jax import lax
from jax.experimental import pallas as pl
from jax.experimental.pallas import tpu as pltpu


def _round_up(x, m):
    return (x + m - 1) // m * m


# ------------------------------- fused kernel -------------------------------

def _fused_kernel(starts_ref,
                  pos_ref, w1_ref, b1_ref, w2_ref, b2_ref, w3_ref, b3_ref,
                  w4a_ref, w4b_ref, b4_ref, w5_ref, b5_ref,
                  out_ref, pooled_ref):
    phase = pl.program_id(0)          # 0: mlp1 + pool   1: gather + mlp2 + pool
    i = pl.program_id(1)              # node tile index
    tn = pos_ref.shape[0]
    n_seg = out_ref.shape[0]

    tile_lo = i * tn
    tile_hi = tile_lo + tn
    row = tile_lo + lax.broadcasted_iota(jnp.int32, (tn, 1), 0)     # (TN, 1)
    pos = pos_ref[...]                                              # (TN, Ci) bf16

    @pl.when((phase == 0) & (i == 0))
    def _():
        pooled_ref[...] = jnp.full(pooled_ref.shape, -jnp.inf, pooled_ref.dtype)
        out_ref[...] = jnp.full(out_ref.shape, -jnp.inf, out_ref.dtype)

    # ---------------------------- phase 0: mlp1 ----------------------------
    @pl.when(phase == 0)
    def _():
        h = jnp.dot(pos, w1_ref[...],
                    preferred_element_type=jnp.float32) + b1_ref[...]
        h = jnp.maximum(h, 0.0)
        h = jnp.dot(h.astype(jnp.bfloat16), w2_ref[...],
                    preferred_element_type=jnp.float32) + b2_ref[...]
        h = jnp.maximum(h, 0.0)
        h = jnp.dot(h.astype(jnp.bfloat16), w3_ref[...],
                    preferred_element_type=jnp.float32) + b3_ref[...]   # (TN, C3)

        for b in range(n_seg):                       # static, tiny loop
            lo = starts_ref[b]
            hi = starts_ref[b + 1]

            @pl.when((lo < tile_hi) & (hi > tile_lo))    # segment touches tile?
            def _():
                in_seg = (row >= lo) & (row < hi)
                seg_max = jnp.max(jnp.where(in_seg, h, -jnp.inf),
                                  axis=0, keepdims=True)
                pooled_ref[b:b + 1, :] = jnp.maximum(pooled_ref[b:b + 1, :],
                                                     seg_max)

    # ---------------------- phase 1: gather + mlp2 --------------------------
    @pl.when(phase == 1)
    def _():
        # Segment id per row (rows past the last segment get id == n_seg and
        # therefore match no one-hot column -> gathered = 0, later masked out).
        seg_id = jnp.zeros((tn, 1), jnp.int32)
        for b in range(1, n_seg + 1):
            seg_id += (row >= starts_ref[b]).astype(jnp.int32)

        # Broadcast pooled[b] to every node of segment b via a tiny one-hot
        # matmul on the (otherwise idle) MXU. -inf rows (empty segments) are
        # sanitised to 0 so 0 * -inf never produces NaN; they are never
        # gathered by a real node anyway.
        pooled = pooled_ref[...]
        pooled_bf = jnp.where(pooled > -jnp.inf, pooled, 0.0).astype(jnp.bfloat16)
        onehot = (seg_id == lax.broadcasted_iota(
            jnp.int32, (tn, pooled.shape[0]), 1)).astype(jnp.bfloat16)
        gathered = jnp.dot(onehot, pooled_bf,
                           preferred_element_type=jnp.float32)          # (TN, C3)

        # mlp2 on concat([pos, gathered]) folded into split weights.
        h2 = (jnp.dot(pos, w4a_ref[...], preferred_element_type=jnp.float32)
              + jnp.dot(gathered.astype(jnp.bfloat16), w4b_ref[...],
                        preferred_element_type=jnp.float32)
              + b4_ref[...])
        h2 = jnp.maximum(h2, 0.0)
        h2 = jnp.dot(h2.astype(jnp.bfloat16), w5_ref[...],
                     preferred_element_type=jnp.float32) + b5_ref[...]  # (TN, Co)

        for b in range(n_seg):
            lo = starts_ref[b]
            hi = starts_ref[b + 1]

            @pl.when((lo < tile_hi) & (hi > tile_lo))
            def _():
                in_seg = seg_id == b
                seg_max = jnp.max(jnp.where(in_seg, h2, -jnp.inf),
                                  axis=0, keepdims=True)
                out_ref[b:b + 1, :] = jnp.maximum(out_ref[b:b + 1, :], seg_max)


# --------------------------------- wrapper -----------------------------------

def _const_spec(arr):
    """Full-array block, same block at every grid step (stays VMEM-resident)."""
    assert arr.ndim == 2
    return pl.BlockSpec(arr.shape, lambda p, i, starts: (0, 0))


def global_emd_forward(pos_emd, radius_p_batch, params, num_batches,
                       tile_n=512):
    """pos_emd: (N, Ci) f32; radius_p_batch: (N,) sorted ids in [0, num_batches).

    tile_n: node-tile size (multiple of 8). Large tiles (512-2048) amortise
    per-grid-step overhead; the working set fits VMEM on v5e/v6e/v7x.
    """
    N, Ci = pos_emd.shape
    B = int(num_batches)
    B_pad = max(8, _round_up(B, 8))            # sublane-aligned pooled scratch

    # Segment start offsets (sorted ids -> contiguous segments); scalar-prefetched.
    ids = radius_p_batch.astype(jnp.int32)
    starts = jnp.searchsorted(ids, jnp.arange(B + 1, dtype=jnp.int32),
                              side="left").astype(jnp.int32)

    # Clamp the tile for small N, keep it a multiple of 8 sublanes, and pad the
    # node axis. pos is cast to bf16 here (dominant HBM stream, read once per
    # phase); padded rows have row index >= N so they fall outside every
    # segment range and never enter a pool.
    tile_n = _round_up(min(int(tile_n), _round_up(N, 8)), 8)
    n_pad = (-N) % tile_n
    pos_bf = jnp.pad(pos_emd.astype(jnp.bfloat16), ((0, n_pad), (0, 0)))
    num_tiles = (N + n_pad) // tile_n
    n_total = N + n_pad

    # Weights in bf16 (native MXU input dtype, halves weight DMA); biases f32.
    w1 = params["w1"].astype(jnp.bfloat16); b1 = params["b1"].astype(jnp.float32)
    w2 = params["w2"].astype(jnp.bfloat16); b2 = params["b2"].astype(jnp.float32)
    w3 = params["w3"].astype(jnp.bfloat16); b3 = params["b3"].astype(jnp.float32)
    w4a = params["w4a"].astype(jnp.bfloat16)
    w4b = params["w4b"].astype(jnp.bfloat16)
    b4 = params["b4"].astype(jnp.float32)
    w5 = params["w5"].astype(jnp.bfloat16); b5 = params["b5"].astype(jnp.float32)

    C1, C2, C3 = w1.shape[1], w2.shape[1], w3.shape[1]
    Co = w5.shape[1]

    # Phase/node axes carry resident accumulators -> both "arbitrary".
    compiler_params = pltpu.CompilerParams(
        dimension_semantics=("arbitrary", "arbitrary"),
        vmem_limit_bytes=48 * 1024 * 1024)

    pos_spec = pl.BlockSpec((tile_n, Ci), lambda p, i, starts: (i, 0))

    weight_bytes = 2 * (int(w1.size) + int(w2.size) + int(w3.size)
                        + int(w4a.size) + int(w4b.size) + int(w5.size))
    bias_bytes = 4 * (int(b1.size) + int(b2.size) + int(b3.size)
                      + int(b4.size) + int(b5.size))
    cost = pl.CostEstimate(
        flops=2 * n_total * (Ci * C1 + C1 * C2 + C2 * C3
                             + B_pad * C3 + Ci * Co + C3 * Co + Co * Co),
        transcendentals=0,
        bytes_accessed=2 * int(pos_bf.size) * 2   # pos streamed once per phase
        + weight_bytes + bias_bytes + B * Co * 4)

    out = pl.pallas_call(
        _fused_kernel,
        out_shape=jax.ShapeDtypeStruct((B, Co), jnp.float32),
        grid_spec=pltpu.PrefetchScalarGridSpec(
            num_scalar_prefetch=1,
            grid=(2, num_tiles),
            in_specs=[pos_spec,
                      _const_spec(w1), _const_spec(b1),
                      _const_spec(w2), _const_spec(b2),
                      _const_spec(w3), _const_spec(b3),
                      _const_spec(w4a), _const_spec(w4b), _const_spec(b4),
                      _const_spec(w5), _const_spec(b5)],
            out_specs=pl.BlockSpec((B, Co), lambda p, i, starts: (0, 0)),
            scratch_shapes=[pltpu.VMEM((B_pad, C3), jnp.float32)]),
        compiler_params=compiler_params,
        cost_estimate=cost,
    )(starts, pos_bf, w1, b1, w2, b2, w3, b3, w4a, w4b, b4, w5, b5)

    return out


# --------------------------- params & reference ------------------------------

def init_params(key, input_c, inter_c, output_c):
    def lin(k, fan_in, fan_out):
        kw, kb = jax.random.split(k)
        w = jax.random.normal(kw, (fan_in, fan_out), jnp.float32) / jnp.sqrt(fan_in)
        b = jax.random.normal(kb, (1, fan_out), jnp.float32) * 0.01
        return w, b

    ks = jax.random.split(key, 5)
    w1, b1 = lin(ks[0], input_c, inter_c[0])
    w2, b2 = lin(ks[1], inter_c[0], inter_c[1])
    w3, b3 = lin(ks[2], inter_c[1], inter_c[2])
    w4, b4 = lin(ks[3], input_c + inter_c[2], output_c)   # acts on concat([pos, global])
    w5, b5 = lin(ks[4], output_c, output_c)
    return dict(w1=w1, b1=b1, w2=w2, b2=b2, w3=w3, b3=b3,
                w4a=w4[:input_c], w4b=w4[input_c:], b4=b4, w5=w5, b5=b5)


def reference_forward(pos_emd, ids, params, num_batches):
    relu = lambda x: jnp.maximum(x, 0.0)
    h = relu(pos_emd @ params["w1"] + params["b1"])
    h = relu(h @ params["w2"] + params["b2"])
    h = h @ params["w3"] + params["b3"]
    pooled = jax.ops.segment_max(h, ids, num_segments=num_batches)
    gathered = pooled[ids]
    cat = jnp.concatenate([pos_emd, gathered], axis=-1)
    w4 = jnp.concatenate([params["w4a"], params["w4b"]], axis=0)
    h2 = relu(cat @ w4 + params["b4"])
    h2 = h2 @ params["w5"] + params["b5"]
    return jax.ops.segment_max(h2, ids, num_segments=num_batches)


# ---------------------------------- main -------------------------------------

if __name__ == "__main__":
    # Small shapes consistent with the module (configurable Linear widths).
    N = 256          # number of points / nodes
    B = 3            # number of batch groups in radius_p_batch
    input_c = 64
    inter_c = (128, 128, 128)
    output_c = 128

    key = jax.random.PRNGKey(0)
    k_param, k_pos = jax.random.split(key)
    params = init_params(k_param, input_c, inter_c, output_c)

    pos_emd = jax.random.normal(k_pos, (N, input_c), jnp.float32)
    # Sorted batch ids (as produced by torch_geometric radius / batching).
    seg_sizes = (100, 60, 96)
    radius_p_batch = jnp.concatenate(
        [jnp.full((s,), b, jnp.int32) for b, s in enumerate(seg_sizes)])

    out = jax.block_until_ready(
        global_emd_forward(pos_emd, radius_p_batch, params, B, tile_n=512))

    ref = jax.block_until_ready(
        reference_forward(pos_emd, radius_p_batch, params, B))

    assert out.shape == (B, output_c)
    # Kernel runs the dots with bf16 MXU operands (f32 accumulation); compare
    # against the f32 reference with a bf16-appropriate tolerance.
    assert np.allclose(np.asarray(out), np.asarray(ref), atol=5e-2, rtol=5e-2), \
        "Pallas kernel does not match reference"

    print("KERNEL_OK")
</pallas_src>

<mosaic_0001>
module attributes {stable_mosaic.version = 11 : i64} {
  func.func @_fused_kernel(%arg0: i32, %arg1: i32, %arg2: memref<4xi32, #tpu.memory_space<smem>>, %arg3: memref<256x64xbf16, #tpu.memory_space<vmem>>, %arg4: memref<64x128xbf16, #tpu.memory_space<vmem>>, %arg5: memref<1x128xf32, #tpu.memory_space<vmem>>, %arg6: memref<128x128xbf16, #tpu.memory_space<vmem>>, %arg7: memref<1x128xf32, #tpu.memory_space<vmem>>, %arg8: memref<128x128xbf16, #tpu.memory_space<vmem>>, %arg9: memref<1x128xf32, #tpu.memory_space<vmem>>, %arg10: memref<64x128xbf16, #tpu.memory_space<vmem>>, %arg11: memref<128x128xbf16, #tpu.memory_space<vmem>>, %arg12: memref<1x128xf32, #tpu.memory_space<vmem>>, %arg13: memref<128x128xbf16, #tpu.memory_space<vmem>>, %arg14: memref<1x128xf32, #tpu.memory_space<vmem>>, %arg15: memref<3x128xf32, #tpu.memory_space<vmem>>, %arg16: memref<8x128xf32, #tpu.memory_space<vmem>>) attributes {dimension_semantics = [#tpu.dimension_semantics<arbitrary>, #tpu.dimension_semantics<arbitrary>], iteration_bounds = array<i64: 2, 1>, scalar_prefetch = 1 : i64, scratch_operands = 1 : i64, tpu.core_type = #tpu.core_type<tc>, window_params = [{transform_indices = @transform_0, window_bounds = array<i64: 256, 64>}, {pipeline_mode = #tpu.pipeline_mode<synchronous>, transform_indices = @transform_1, window_bounds = array<i64: 64, 128>}, {pipeline_mode = #tpu.pipeline_mode<synchronous>, transform_indices = @transform_2, window_bounds = array<i64: 1, 128>}, {pipeline_mode = #tpu.pipeline_mode<synchronous>, transform_indices = @transform_3, window_bounds = array<i64: 128, 128>}, {pipeline_mode = #tpu.pipeline_mode<synchronous>, transform_indices = @transform_4, window_bounds = array<i64: 1, 128>}, {pipeline_mode = #tpu.pipeline_mode<synchronous>, transform_indices = @transform_5, window_bounds = array<i64: 128, 128>}, {pipeline_mode = #tpu.pipeline_mode<synchronous>, transform_indices = @transform_6, window_bounds = array<i64: 1, 128>}, {pipeline_mode = #tpu.pipeline_mode<synchronous>, transform_indices = @transform_7, window_bounds = array<i64: 64, 128>}, {pipeline_mode = #tpu.pipeline_mode<synchronous>, transform_indices = @transform_8, window_bounds = array<i64: 128, 128>}, {pipeline_mode = #tpu.pipeline_mode<synchronous>, transform_indices = @transform_9, window_bounds = array<i64: 1, 128>}, {pipeline_mode = #tpu.pipeline_mode<synchronous>, transform_indices = @transform_10, window_bounds = array<i64: 128, 128>}, {pipeline_mode = #tpu.pipeline_mode<synchronous>, transform_indices = @transform_11, window_bounds = array<i64: 1, 128>}, {pipeline_mode = #tpu.pipeline_mode<synchronous>, transform_indices = @transform_12, window_bounds = array<i64: 3, 128>}]} {
    %c256_i32 = arith.constant 256 : i32
    %0 = arith.muli %arg1, %c256_i32 : i32
    %c256_i32_0 = arith.constant 256 : i32
    %1 = arith.addi %0, %c256_i32_0 : i32
    %2 = tpu.iota {dimensions = array<i32: 0>} : vector<256x1xi32>
    %3 = vector.broadcast %0 : i32 to vector<256x1xi32>
    %4 = arith.addi %3, %2 : vector<256x1xi32>
    %c0 = arith.constant 0 : index
    %c0_1 = arith.constant 0 : index
    %5 = vector.load %arg3[%c0, %c0_1] : memref<256x64xbf16, #tpu.memory_space<vmem>>, vector<256x64xbf16>
    %c0_i32 = arith.constant 0 : i32
    %6 = arith.cmpi eq, %arg0, %c0_i32 : i32
    %c0_i32_2 = arith.constant 0 : i32
    %7 = arith.cmpi eq, %arg1, %c0_i32_2 : i32
    %8 = arith.andi %6, %7 : i1
    %9 = arith.extui %8 : i1 to i32
    %c0_i32_3 = arith.constant 0 : i32
    %10 = arith.cmpi ne, %9, %c0_i32_3 : i32
    scf.if %10 {
      %cst = arith.constant 0xFF800000 : f32
      %17 = vector.broadcast %cst : f32 to vector<8x128xf32>
      %c0_7 = arith.constant 0 : index
      %c0_8 = arith.constant 0 : index
      %18 = vector.load %arg16[%c0_7, %c0_8] : memref<8x128xf32, #tpu.memory_space<vmem>>, vector<8x128xf32>
      tpu.vector_store %arg16[%c0_7, %c0_8], %17 {strides = array<i32>} : memref<8x128xf32, #tpu.memory_space<vmem>>, vector<8x128xf32>,
      %cst_9 = arith.constant 0xFF800000 : f32
      %19 = vector.broadcast %cst_9 : f32 to vector<3x128xf32>
      %c0_10 = arith.constant 0 : index
      %c0_11 = arith.constant 0 : index
      %20 = vector.load %arg15[%c0_10, %c0_11] : memref<3x128xf32, #tpu.memory_space<vmem>>, vector<3x128xf32>
      tpu.vector_store %arg15[%c0_10, %c0_11], %19 {strides = array<i32>} : memref<3x128xf32, #tpu.memory_space<vmem>>, vector<3x128xf32>,
    } else {
    }
    %c0_i32_4 = arith.constant 0 : i32
    %11 = arith.cmpi eq, %arg0, %c0_i32_4 : i32
    %12 = arith.extui %11 : i1 to i32
    %c0_i32_5 = arith.constant 0 : i32
    %13 = arith.cmpi ne, %12, %c0_i32_5 : i32
    scf.if %13 {
      %c0_7 = arith.constant 0 : index
      %c0_8 = arith.constant 0 : index
      %17 = vector.load %arg4[%c0_7, %c0_8] : memref<64x128xbf16, #tpu.memory_space<vmem>>, vector<64x128xbf16>
      %cst = arith.constant dense<0.000000e+00> : vector<256x128xf32>
      %18 = tpu.matmul %5, %17, %cst {dimension_numbers = #tpu.dot_dimension_numbers<[1], [0], [0], [1], [0, 0, 1, 1], [], []>} : vector<256x64xbf16>, vector<64x128xbf16>, vector<256x128xf32> -> vector<256x128xf32>
      %c0_9 = arith.constant 0 : index
      %c0_10 = arith.constant 0 : index
      %19 = vector.load %arg5[%c0_9, %c0_10] : memref<1x128xf32, #tpu.memory_space<vmem>>, vector<1x128xf32>
      %20 = vector.broadcast %19 : vector<1x128xf32> to vector<256x128xf32>
      %21 = arith.addf %18, %20 : vector<256x128xf32>
      %cst_11 = arith.constant 0.000000e+00 : f32
      %22 = vector.broadcast %cst_11 : f32 to vector<256x128xf32>
      %23 = arith.maximumf %21, %22 : vector<256x128xf32>
      %24 = arith.truncf %23 : vector<256x128xf32> to vector<256x128xbf16>
      %c0_12 = arith.constant 0 : index
      %c0_13 = arith.constant 0 : index
      %25 = vector.load %arg6[%c0_12, %c0_13] : memref<128x128xbf16, #tpu.memory_space<vmem>>, vector<128x128xbf16>
      %cst_14 = arith.constant dense<0.000000e+00> : vector<256x128xf32>
      %26 = tpu.matmul %24, %25, %cst_14 {dimension_numbers = #tpu.dot_dimension_numbers<[1], [0], [0], [1], [0, 0, 1, 1], [], []>} : vector<256x128xbf16>, vector<128x128xbf16>, vector<256x128xf32> -> vector<256x128xf32>
      %c0_15 = arith.constant 0 : index
      %c0_16 = arith.constant 0 : index
      %27 = vector.load %arg7[%c0_15, %c0_16] : memref<1x128xf32, #tpu.memory_space<vmem>>, vector<1x128xf32>
      %28 = vector.broadcast %27 : vector<1x128xf32> to vector<256x128xf32>
      %29 = arith.addf %26, %28 : vector<256x128xf32>
      %cst_17 = arith.constant 0.000000e+00 : f32
      %30 = vector.broadcast %cst_17 : f32 to vector<256x128xf32>
      %31 = arith.maximumf %29, %30 : vector<256x128xf32>
      %32 = arith.truncf %31 : vector<256x128xf32> to vector<256x128xbf16>
      %c0_18 = arith.constant 0 : index
      %c0_19 = arith.constant 0 : index
      %33 = vector.load %arg8[%c0_18, %c0_19] : memref<128x128xbf16, #tpu.memory_space<vmem>>, vector<128x128xbf16>
      %cst_20 = arith.constant dense<0.000000e+00> : vector<256x128xf32>
      %34 = tpu.matmul %32, %33, %cst_20 {dimension_numbers = #tpu.dot_dimension_numbers<[1], [0], [0], [1], [0, 0, 1, 1], [], []>} : vector<256x128xbf16>, vector<128x128xbf16>, vector<256x128xf32> -> vector<256x128xf32>
      %c0_21 = arith.constant 0 : index
      %c0_22 = arith.constant 0 : index
      %35 = vector.load %arg9[%c0_21, %c0_22] : memref<1x128xf32, #tpu.memory_space<vmem>>, vector<1x128xf32>
      %36 = vector.broadcast %35 : vector<1x128xf32> to vector<256x128xf32>
      %37 = arith.addf %34, %36 : vector<256x128xf32>
      %c0_23 = arith.constant 0 : index
      %38 = memref.load %arg2[%c0_23] : memref<4xi32, #tpu.memory_space<smem>>
      %c1 = arith.constant 1 : index
      %39 = memref.load %arg2[%c1] : memref<4xi32, #tpu.memory_space<smem>>
      %40 = arith.cmpi slt, %38, %1 : i32
      %41 = arith.cmpi sgt, %39, %0 : i32
      %42 = arith.andi %40, %41 : i1
      %43 = arith.extui %42 : i1 to i32
      %c0_i32_24 = arith.constant 0 : i32
      %44 = arith.cmpi ne, %43, %c0_i32_24 : i32
      scf.if %44 {
        %59 = vector.broadcast %38 : i32 to vector<256x1xi32>
        %60 = arith.cmpi sge, %4, %59 : vector<256x1xi32>
        %61 = vector.broadcast %39 : i32 to vector<256x1xi32>
        %62 = arith.cmpi slt, %4, %61 : vector<256x1xi32>
        %63 = arith.andi %60, %62 : vector<256x1xi1>
        %cst_29 = arith.constant 0xFF800000 : f32
        %64 = vector.shape_cast %63 : vector<256x1xi1> to vector<256x1xi1>
        %65 = vector.broadcast %64 : vector<256x1xi1> to vector<256x128xi1>
        %66 = vector.broadcast %cst_29 : f32 to vector<256x128xf32>
        %67 = arith.select %65, %37, %66 : vector<256x128xi1>, vector<256x128xf32>
        %cst_30 = arith.constant dense<0xFF800000> : vector<128xf32>
        %68 = vector.multi_reduction <maximumf>, %67, %cst_30 [0] : vector<256x128xf32> to vector<128xf32>
        %69 = vector.shape_cast %68 : vector<128xf32> to vector<1x128xf32>
        %c0_31 = arith.constant 0 : index
        %c0_32 = arith.constant 0 : index
        %70 = vector.load %arg16[%c0_31, %c0_32] : memref<8x128xf32, #tpu.memory_space<vmem>>, vector<1x128xf32>
        %71 = arith.maximumf %70, %69 : vector<1x128xf32>
        %c0_33 = arith.constant 0 : index
        %c0_34 = arith.constant 0 : index
        %72 = vector.load %arg16[%c0_33, %c0_34] : memref<8x128xf32, #tpu.memory_space<vmem>>, vector<1x128xf32>
        tpu.vector_store %arg16[%c0_33, %c0_34], %71 {strides = array<i32>} : memref<8x128xf32, #tpu.memory_space<vmem>>, vector<1x128xf32>,
      } else {
      }
      %c1_25 = arith.constant 1 : index
      %45 = memref.load %arg2[%c1_25] : memref<4xi32, #tpu.memory_space<smem>>
      %c2 = arith.constant 2 : index
      %46 = memref.load %arg2[%c2] : memref<4xi32, #tpu.memory_space<smem>>
      %47 = arith.cmpi slt, %45, %1 : i32
      %48 = arith.cmpi sgt, %46, %0 : i32
      %49 = arith.andi %47, %48 : i1
      %50 = arith.extui %49 : i1 to i32
      %c0_i32_26 = arith.constant 0 : i32
      %51 = arith.cmpi ne, %50, %c0_i32_26 : i32
      scf.if %51 {
        %59 = vector.broadcast %45 : i32 to vector<256x1xi32>
        %60 = arith.cmpi sge, %4, %59 : vector<256x1xi32>
        %61 = vector.broadcast %46 : i32 to vector<256x1xi32>
        %62 = arith.cmpi slt, %4, %61 : vector<256x1xi32>
        %63 = arith.andi %60, %62 : vector<256x1xi1>
        %cst_29 = arith.constant 0xFF800000 : f32
        %64 = vector.shape_cast %63 : vector<256x1xi1> to vector<256x1xi1>
        %65 = vector.broadcast %64 : vector<256x1xi1> to vector<256x128xi1>
        %66 = vector.broadcast %cst_29 : f32 to vector<256x128xf32>
        %67 = arith.select %65, %37, %66 : vector<256x128xi1>, vector<256x128xf32>
        %cst_30 = arith.constant dense<0xFF800000> : vector<128xf32>
        %68 = vector.multi_reduction <maximumf>, %67, %cst_30 [0] : vector<256x128xf32> to vector<128xf32>
        %69 = vector.shape_cast %68 : vector<128xf32> to vector<1x128xf32>
        %c1_31 = arith.constant 1 : index
        %c0_32 = arith.constant 0 : index
        %70 = vector.load %arg16[%c1_31, %c0_32] : memref<8x128xf32, #tpu.memory_space<vmem>>, vector<1x128xf32>
        %71 = arith.maximumf %70, %69 : vector<1x128xf32>
        %c1_33 = arith.constant 1 : index
        %c0_34 = arith.constant 0 : index
        %72 = vector.load %arg16[%c1_33, %c0_34] : memref<8x128xf32, #tpu.memory_space<vmem>>, vector<1x128xf32>
        tpu.vector_store %arg16[%c1_33, %c0_34], %71 {strides = array<i32>} : memref<8x128xf32, #tpu.memory_space<vmem>>, vector<1x128xf32>,
      } else {
      }
      %c2_27 = arith.constant 2 : index
      %52 = memref.load %arg2[%c2_27] : memref<4xi32, #tpu.memory_space<smem>>
      %c3 = arith.constant 3 : index
      %53 = memref.load %arg2[%c3] : memref<4xi32, #tpu.memory_space<smem>>
      %54 = arith.cmpi slt, %52, %1 : i32
      %55 = arith.cmpi sgt, %53, %0 : i32
      %56 = arith.andi %54, %55 : i1
      %57 = arith.extui %56 : i1 to i32
      %c0_i32_28 = arith.constant 0 : i32
      %58 = arith.cmpi ne, %57, %c0_i32_28 : i32
      scf.if %58 {
        %59 = vector.broadcast %52 : i32 to vector<256x1xi32>
        %60 = arith.cmpi sge, %4, %59 : vector<256x1xi32>
        %61 = vector.broadcast %53 : i32 to vector<256x1xi32>
        %62 = arith.cmpi slt, %4, %61 : vector<256x1xi32>
        %63 = arith.andi %60, %62 : vector<256x1xi1>
        %cst_29 = arith.constant 0xFF800000 : f32
        %64 = vector.shape_cast %63 : vector<256x1xi1> to vector<256x1xi1>
        %65 = vector.broadcast %64 : vector<256x1xi1> to vector<256x128xi1>
        %66 = vector.broadcast %cst_29 : f32 to vector<256x128xf32>
        %67 = arith.select %65, %37, %66 : vector<256x128xi1>, vector<256x128xf32>
        %cst_30 = arith.constant dense<0xFF800000> : vector<128xf32>
        %68 = vector.multi_reduction <maximumf>, %67, %cst_30 [0] : vector<256x128xf32> to vector<128xf32>
        %69 = vector.shape_cast %68 : vector<128xf32> to vector<1x128xf32>
        %c2_31 = arith.constant 2 : index
        %c0_32 = arith.constant 0 : index
        %70 = vector.load %arg16[%c2_31, %c0_32] : memref<8x128xf32, #tpu.memory_space<vmem>>, vector<1x128xf32>
        %71 = arith.maximumf %70, %69 : vector<1x128xf32>
        %c2_33 = arith.constant 2 : index
        %c0_34 = arith.constant 0 : index
        %72 = vector.load %arg16[%c2_33, %c0_34] : memref<8x128xf32, #tpu.memory_space<vmem>>, vector<1x128xf32>
        tpu.vector_store %arg16[%c2_33, %c0_34], %71 {strides = array<i32>} : memref<8x128xf32, #tpu.memory_space<vmem>>, vector<1x128xf32>,
      } else {
      }
    } else {
    }
    %c1_i32 = arith.constant 1 : i32
    %14 = arith.cmpi eq, %arg0, %c1_i32 : i32
    %15 = arith.extui %14 : i1 to i32
    %c0_i32_6 = arith.constant 0 : i32
    %16 = arith.cmpi ne, %15, %c0_i32_6 : i32
    scf.if %16 {
      %c0_i32_7 = arith.constant 0 : i32
      %17 = vector.broadcast %c0_i32_7 : i32 to vector<256x1xi32>
      %c1 = arith.constant 1 : index
      %18 = memref.load %arg2[%c1] : memref<4xi32, #tpu.memory_space<smem>>
      %19 = vector.broadcast %18 : i32 to vector<256x1xi32>
      %20 = arith.cmpi sge, %4, %19 : vector<256x1xi32>
      %21 = arith.extui %20 : vector<256x1xi1> to vector<256x1xi32>
      %22 = arith.addi %17, %21 : vector<256x1xi32>
      %c2 = arith.constant 2 : index
      %23 = memref.load %arg2[%c2] : memref<4xi32, #tpu.memory_space<smem>>
      %24 = vector.broadcast %23 : i32 to vector<256x1xi32>
      %25 = arith.cmpi sge, %4, %24 : vector<256x1xi32>
      %26 = arith.extui %25 : vector<256x1xi1> to vector<256x1xi32>
      %27 = arith.addi %22, %26 : vector<256x1xi32>
      %c3 = arith.constant 3 : index
      %28 = memref.load %arg2[%c3] : memref<4xi32, #tpu.memory_space<smem>>
      %29 = vector.broadcast %28 : i32 to vector<256x1xi32>
      %30 = arith.cmpi sge, %4, %29 : vector<256x1xi32>
      %31 = arith.extui %30 : vector<256x1xi1> to vector<256x1xi32>
      %32 = arith.addi %27, %31 : vector<256x1xi32>
      %c0_8 = arith.constant 0 : index
      %c0_9 = arith.constant 0 : index
      %33 = vector.load %arg16[%c0_8, %c0_9] : memref<8x128xf32, #tpu.memory_space<vmem>>, vector<8x128xf32>
      %cst = arith.constant 0xFF800000 : f32
      %34 = vector.broadcast %cst : f32 to vector<8x128xf32>
      %35 = arith.cmpf ogt, %33, %34 : vector<8x128xf32>
      %cst_10 = arith.constant 0.000000e+00 : f32
      %36 = vector.broadcast %cst_10 : f32 to vector<8x128xf32>
      %37 = arith.select %35, %33, %36 : vector<8x128xi1>, vector<8x128xf32>
      %38 = arith.truncf %37 : vector<8x128xf32> to vector<8x128xbf16>
      %39 = tpu.iota {dimensions = array<i32: 1>} : vector<256x8xi32>
      %40 = vector.broadcast %32 : vector<256x1xi32> to vector<256x8xi32>
      %41 = arith.cmpi eq, %40, %39 : vector<256x8xi32>
      %42 = arith.extui %41 : vector<256x8xi1> to vector<256x8xi32>
      %43 = arith.sitofp %42 : vector<256x8xi32> to vector<256x8xf32>
      %44 = arith.truncf %43 : vector<256x8xf32> to vector<256x8xbf16>
      %cst_11 = arith.constant dense<0.000000e+00> : vector<256x128xf32>
      %45 = tpu.matmul %44, %38, %cst_11 {dimension_numbers = #tpu.dot_dimension_numbers<[1], [0], [0], [1], [0, 0, 1, 1], [], []>} : vector<256x8xbf16>, vector<8x128xbf16>, vector<256x128xf32> -> vector<256x128xf32>
      %c0_12 = arith.constant 0 : index
      %c0_13 = arith.constant 0 : index
      %46 = vector.load %arg10[%c0_12, %c0_13] : memref<64x128xbf16, #tpu.memory_space<vmem>>, vector<64x128xbf16>
      %cst_14 = arith.constant dense<0.000000e+00> : vector<256x128xf32>
      %47 = tpu.matmul %5, %46, %cst_14 {dimension_numbers = #tpu.dot_dimension_numbers<[1], [0], [0], [1], [0, 0, 1, 1], [], []>} : vector<256x64xbf16>, vector<64x128xbf16>, vector<256x128xf32> -> vector<256x128xf32>
      %48 = arith.truncf %45 : vector<256x128xf32> to vector<256x128xbf16>
      %c0_15 = arith.constant 0 : index
      %c0_16 = arith.constant 0 : index
      %49 = vector.load %arg11[%c0_15, %c0_16] : memref<128x128xbf16, #tpu.memory_space<vmem>>, vector<128x128xbf16>
      %cst_17 = arith.constant dense<0.000000e+00> : vector<256x128xf32>
      %50 = tpu.matmul %48, %49, %cst_17 {dimension_numbers = #tpu.dot_dimension_numbers<[1], [0], [0], [1], [0, 0, 1, 1], [], []>} : vector<256x128xbf16>, vector<128x128xbf16>, vector<256x128xf32> -> vector<256x128xf32>
      %51 = arith.addf %47, %50 : vector<256x128xf32>
      %c0_18 = arith.constant 0 : index
      %c0_19 = arith.constant 0 : index
      %52 = vector.load %arg12[%c0_18, %c0_19] : memref<1x128xf32, #tpu.memory_space<vmem>>, vector<1x128xf32>
      %53 = vector.broadcast %52 : vector<1x128xf32> to vector<256x128xf32>
      %54 = arith.addf %51, %53 : vector<256x128xf32>
      %cst_20 = arith.constant 0.000000e+00 : f32
      %55 = vector.broadcast %cst_20 : f32 to vector<256x128xf32>
      %56 = arith.maximumf %54, %55 : vector<256x128xf32>
      %57 = arith.truncf %56 : vector<256x128xf32> to vector<256x128xbf16>
      %c0_21 = arith.constant 0 : index
      %c0_22 = arith.constant 0 : index
      %58 = vector.load %arg13[%c0_21, %c0_22] : memref<128x128xbf16, #tpu.memory_space<vmem>>, vector<128x128xbf16>
      %cst_23 = arith.constant dense<0.000000e+00> : vector<256x128xf32>
      %59 = tpu.matmul %57, %58, %cst_23 {dimension_numbers = #tpu.dot_dimension_numbers<[1], [0], [0], [1], [0, 0, 1, 1], [], []>} : vector<256x128xbf16>, vector<128x128xbf16>, vector<256x128xf32> -> vector<256x128xf32>
      %c0_24 = arith.constant 0 : index
      %c0_25 = arith.constant 0 : index
      %60 = vector.load %arg14[%c0_24, %c0_25] : memref<1x128xf32, #tpu.memory_space<vmem>>, vector<1x128xf32>
      %61 = vector.broadcast %60 : vector<1x128xf32> to vector<256x128xf32>
      %62 = arith.addf %59, %61 : vector<256x128xf32>
      %c0_26 = arith.constant 0 : index
      %63 = memref.load %arg2[%c0_26] : memref<4xi32, #tpu.memory_space<smem>>
      %c1_27 = arith.constant 1 : index
      %64 = memref.load %arg2[%c1_27] : memref<4xi32, #tpu.memory_space<smem>>
      %65 = arith.cmpi slt, %63, %1 : i32
      %66 = arith.cmpi sgt, %64, %0 : i32
      %67 = arith.andi %65, %66 : i1
      %68 = arith.extui %67 : i1 to i32
      %c0_i32_28 = arith.constant 0 : i32
      %69 = arith.cmpi ne, %68, %c0_i32_28 : i32
      scf.if %69 {
        %c0_i32_35 = arith.constant 0 : i32
        %84 = vector.broadcast %c0_i32_35 : i32 to vector<256x1xi32>
        %85 = arith.cmpi eq, %32, %84 : vector<256x1xi32>
        %cst_36 = arith.constant 0xFF800000 : f32
        %86 = vector.shape_cast %85 : vector<256x1xi1> to vector<256x1xi1>
        %87 = vector.broadcast %86 : vector<256x1xi1> to vector<256x128xi1>
        %88 = vector.broadcast %cst_36 : f32 to vector<256x128xf32>
        %89 = arith.select %87, %62, %88 : vector<256x128xi1>, vector<256x128xf32>
        %cst_37 = arith.constant dense<0xFF800000> : vector<128xf32>
        %90 = vector.multi_reduction <maximumf>, %89, %cst_37 [0] : vector<256x128xf32> to vector<128xf32>
        %91 = vector.shape_cast %90 : vector<128xf32> to vector<1x128xf32>
        %c0_38 = arith.constant 0 : index
        %c0_39 = arith.constant 0 : index
        %92 = vector.load %arg15[%c0_38, %c0_39] : memref<3x128xf32, #tpu.memory_space<vmem>>, vector<1x128xf32>
        %93 = arith.maximumf %92, %91 : vector<1x128xf32>
        %c0_40 = arith.constant 0 : index
        %c0_41 = arith.constant 0 : index
        %94 = vector.load %arg15[%c0_40, %c0_41] : memref<3x128xf32, #tpu.memory_space<vmem>>, vector<1x128xf32>
        tpu.vector_store %arg15[%c0_40, %c0_41], %93 {strides = array<i32>} : memref<3x128xf32, #tpu.memory_space<vmem>>, vector<1x128xf32>,
      } else {
      }
      %c1_29 = arith.constant 1 : index
      %70 = memref.load %arg2[%c1_29] : memref<4xi32, #tpu.memory_space<smem>>
      %c2_30 = arith.constant 2 : index
      %71 = memref.load %arg2[%c2_30] : memref<4xi32, #tpu.memory_space<smem>>
      %72 = arith.cmpi slt, %70, %1 : i32
      %73 = arith.cmpi sgt, %71, %0 : i32
      %74 = arith.andi %72, %73 : i1
      %75 = arith.extui %74 : i1 to i32
      %c0_i32_31 = arith.constant 0 : i32
      %76 = arith.cmpi ne, %75, %c0_i32_31 : i32
      scf.if %76 {
        %c1_i32_35 = arith.constant 1 : i32
        %84 = vector.broadcast %c1_i32_35 : i32 to vector<256x1xi32>
        %85 = arith.cmpi eq, %32, %84 : vector<256x1xi32>
        %cst_36 = arith.constant 0xFF800000 : f32
        %86 = vector.shape_cast %85 : vector<256x1xi1> to vector<256x1xi1>
        %87 = vector.broadcast %86 : vector<256x1xi1> to vector<256x128xi1>
        %88 = vector.broadcast %cst_36 : f32 to vector<256x128xf32>
        %89 = arith.select %87, %62, %88 : vector<256x128xi1>, vector<256x128xf32>
        %cst_37 = arith.constant dense<0xFF800000> : vector<128xf32>
        %90 = vector.multi_reduction <maximumf>, %89, %cst_37 [0] : vector<256x128xf32> to vector<128xf32>
        %91 = vector.shape_cast %90 : vector<128xf32> to vector<1x128xf32>
        %c1_38 = arith.constant 1 : index
        %c0_39 = arith.constant 0 : index
        %92 = vector.load %arg15[%c1_38, %c0_39] : memref<3x128xf32, #tpu.memory_space<vmem>>, vector<1x128xf32>
        %93 = arith.maximumf %92, %91 : vector<1x128xf32>
        %c1_40 = arith.constant 1 : index
        %c0_41 = arith.constant 0 : index
        %94 = vector.load %arg15[%c1_40, %c0_41] : memref<3x128xf32, #tpu.memory_space<vmem>>, vector<1x128xf32>
        tpu.vector_store %arg15[%c1_40, %c0_41], %93 {strides = array<i32>} : memref<3x128xf32, #tpu.memory_space<vmem>>, vector<1x128xf32>,
      } else {
      }
      %c2_32 = arith.constant 2 : index
      %77 = memref.load %arg2[%c2_32] : memref<4xi32, #tpu.memory_space<smem>>
      %c3_33 = arith.constant 3 : index
      %78 = memref.load %arg2[%c3_33] : memref<4xi32, #tpu.memory_space<smem>>
      %79 = arith.cmpi slt, %77, %1 : i32
      %80 = arith.cmpi sgt, %78, %0 : i32
      %81 = arith.andi %79, %80 : i1
      %82 = arith.extui %81 : i1 to i32
      %c0_i32_34 = arith.constant 0 : i32
      %83 = arith.cmpi ne, %82, %c0_i32_34 : i32
      scf.if %83 {
        %c2_i32 = arith.constant 2 : i32
        %84 = vector.broadcast %c2_i32 : i32 to vector<256x1xi32>
        %85 = arith.cmpi eq, %32, %84 : vector<256x1xi32>
        %cst_35 = arith.constant 0xFF800000 : f32
        %86 = vector.shape_cast %85 : vector<256x1xi1> to vector<256x1xi1>
        %87 = vector.broadcast %86 : vector<256x1xi1> to vector<256x128xi1>
        %88 = vector.broadcast %cst_35 : f32 to vector<256x128xf32>
        %89 = arith.select %87, %62, %88 : vector<256x128xi1>, vector<256x128xf32>
        %cst_36 = arith.constant dense<0xFF800000> : vector<128xf32>
        %90 = vector.multi_reduction <maximumf>, %89, %cst_36 [0] : vector<256x128xf32> to vector<128xf32>
        %91 = vector.shape_cast %90 : vector<128xf32> to vector<1x128xf32>
        %c2_37 = arith.constant 2 : index
        %c0_38 = arith.constant 0 : index
        %92 = vector.load %arg15[%c2_37, %c0_38] : memref<3x128xf32, #tpu.memory_space<vmem>>, vector<1x128xf32>
        %93 = arith.maximumf %92, %91 : vector<1x128xf32>
        %c2_39 = arith.constant 2 : index
        %c0_40 = arith.constant 0 : index
        %94 = vector.load %arg15[%c2_39, %c0_40] : memref<3x128xf32, #tpu.memory_space<vmem>>, vector<1x128xf32>
        tpu.vector_store %arg15[%c2_39, %c0_40], %93 {strides = array<i32>} : memref<3x128xf32, #tpu.memory_space<vmem>>, vector<1x128xf32>,
      } else {
      }
    } else {
    }
    return
  }
  func.func @transform_0(%arg0: i32, %arg1: i32, %arg2: memref<4xi32, #tpu.memory_space<smem>>) -> (i32, i32) {
    %c0_i32 = arith.constant 0 : i32
    %c0_i32_0 = arith.constant 0 : i32
    return %arg1, %c0_i32 : i32, i32
  }
  func.func @transform_1(%arg0: i32, %arg1: i32, %arg2: memref<4xi32, #tpu.memory_space<smem>>) -> (i32, i32) {
    %c0_i32 = arith.constant 0 : i32
    %c0_i32_0 = arith.constant 0 : i32
    %c0_i32_1 = arith.constant 0 : i32
    return %c0_i32, %c0_i32_0 : i32, i32
  }
  func.func @transform_2(%arg0: i32, %arg1: i32, %arg2: memref<4xi32, #tpu.memory_space<smem>>) -> (i32, i32) {
    %c0_i32 = arith.constant 0 : i32
    %c0_i32_0 = arith.constant 0 : i32
    %c0_i32_1 = arith.constant 0 : i32
    return %c0_i32, %c0_i32_0 : i32, i32
  }
  func.func @transform_3(%arg0: i32, %arg1: i32, %arg2: memref<4xi32, #tpu.memory_space<smem>>) -> (i32, i32) {
    %c0_i32 = arith.constant 0 : i32
    %c0_i32_0 = arith.constant 0 : i32
    %c0_i32_1 = arith.constant 0 : i32
    return %c0_i32, %c0_i32_0 : i32, i32
  }
  func.func @transform_4(%arg0: i32, %arg1: i32, %arg2: memref<4xi32, #tpu.memory_space<smem>>) -> (i32, i32) {
    %c0_i32 = arith.constant 0 : i32
    %c0_i32_0 = arith.constant 0 : i32
    %c0_i32_1 = arith.constant 0 : i32
    return %c0_i32, %c0_i32_0 : i32, i32
  }
  func.func @transform_5(%arg0: i32, %arg1: i32, %arg2: memref<4xi32, #tpu.memory_space<smem>>) -> (i32, i32) {
    %c0_i32 = arith.constant 0 : i32
    %c0_i32_0 = arith.constant 0 : i32
    %c0_i32_1 = arith.constant 0 : i32
    return %c0_i32, %c0_i32_0 : i32, i32
  }
  func.func @transform_6(%arg0: i32, %arg1: i32, %arg2: memref<4xi32, #tpu.memory_space<smem>>) -> (i32, i32) {
    %c0_i32 = arith.constant 0 : i32
    %c0_i32_0 = arith.constant 0 : i32
    %c0_i32_1 = arith.constant 0 : i32
    return %c0_i32, %c0_i32_0 : i32, i32
  }
  func.func @transform_7(%arg0: i32, %arg1: i32, %arg2: memref<4xi32, #tpu.memory_space<smem>>) -> (i32, i32) {
    %c0_i32 = arith.constant 0 : i32
    %c0_i32_0 = arith.constant 0 : i32
    %c0_i32_1 = arith.constant 0 : i32
    return %c0_i32, %c0_i32_0 : i32, i32
  }
  func.func @transform_8(%arg0: i32, %arg1: i32, %arg2: memref<4xi32, #tpu.memory_space<smem>>) -> (i32, i32) {
    %c0_i32 = arith.constant 0 : i32
    %c0_i32_0 = arith.constant 0 : i32
    %c0_i32_1 = arith.constant 0 : i32
    return %c0_i32, %c0_i32_0 : i32, i32
  }
  func.func @transform_9(%arg0: i32, %arg1: i32, %arg2: memref<4xi32, #tpu.memory_space<smem>>) -> (i32, i32) {
    %c0_i32 = arith.constant 0 : i32
    %c0_i32_0 = arith.constant 0 : i32
    %c0_i32_1 = arith.constant 0 : i32
    return %c0_i32, %c0_i32_0 : i32, i32
  }
  func.func @transform_10(%arg0: i32, %arg1: i32, %arg2: memref<4xi32, #tpu.memory_space<smem>>) -> (i32, i32) {
    %c0_i32 = arith.constant 0 : i32
    %c0_i32_0 = arith.constant 0 : i32
    %c0_i32_1 = arith.constant 0 : i32
    return %c0_i32, %c0_i32_0 : i32, i32
  }
  func.func @transform_11(%arg0: i32, %arg1: i32, %arg2: memref<4xi32, #tpu.memory_space<smem>>) -> (i32, i32) {
    %c0_i32 = arith.constant 0 : i32
    %c0_i32_0 = arith.constant 0 : i32
    %c0_i32_1 = arith.constant 0 : i32
    return %c0_i32, %c0_i32_0 : i32, i32
  }
  func.func @transform_12(%arg0: i32, %arg1: i32, %arg2: memref<4xi32, #tpu.memory_space<smem>>) -> (i32, i32) {
    %c0_i32 = arith.constant 0 : i32
    %c0_i32_0 = arith.constant 0 : i32
    %c0_i32_1 = arith.constant 0 : i32
    return %c0_i32, %c0_i32_0 : i32, i32
  }
}

</mosaic_0001>

<llo_original>
// kernel: tpu_custom_call.1
$region0: #{tpu_custom_call.1}
  #allocation0 [shape = 'u32[]', space=smem, size = 0x4, offset = 0x4, fixed_abs, tag = 'smem constant byte address 0x4 - core index']
  #allocation1 [shape = 'u32[144,128]{1,0:T(1,128)}', space=vmem, size = 0x12000, scoped, tag = 'internal scratch']
  #allocation2 [shape = 'f32[8,128]{1,0:T(8,128)}', space=vmem, size = 0x1000, scoped, tag = 'scratch operand']
  #allocation3 [shape = 's32[1]{0}', space=sflag, size = 0x4, scoped, tag = 'scoped memory for tpu_custom_call.1']
  #allocation4 [shape = 'u8[512]{0}', space=smem, size = 0x200, scoped, tag = 'prefetched SMEM operand 0']
  %s0 = inlined_call_operand.hbm [shape: s32[4], index: 0, kind: input, shape index: {}]
  %s1 = inlined_call_operand.vmem [shape: bf16[256,64], index: 1, kind: input, shape index: {}]
  %s2 = inlined_call_operand.hbm [shape: bf16[64,128], index: 2, kind: input, shape index: {}]
  %s3 = inlined_call_operand.vmem [shape: f32[1,128], index: 3, kind: input, shape index: {}]
  %s4 = inlined_call_operand.vmem [shape: bf16[128,128], index: 4, kind: input, shape index: {}]
  %s5 = inlined_call_operand.vmem [shape: f32[1,128], index: 5, kind: input, shape index: {}]
  %s6 = inlined_call_operand.vmem [shape: bf16[128,128], index: 6, kind: input, shape index: {}]
  %s7 = inlined_call_operand.vmem [shape: f32[1,128], index: 7, kind: input, shape index: {}]
  %s8 = inlined_call_operand.hbm [shape: bf16[64,128], index: 8, kind: input, shape index: {}]
  %s9 = inlined_call_operand.vmem [shape: bf16[128,128], index: 9, kind: input, shape index: {}]
  %s10 = inlined_call_operand.vmem [shape: f32[1,128], index: 10, kind: input, shape index: {}]
  %s11 = inlined_call_operand.hbm [shape: bf16[128,128], index: 11, kind: input, shape index: {}]
  %s12 = inlined_call_operand.vmem [shape: f32[1,128], index: 12, kind: input, shape index: {}]
  %s13 = inlined_call_operand.hbm [shape: f32[3,128], index: 13, kind: output, shape index: {}]
  %s14 = sld [smem:[#allocation0]]
  $region129: #{tpu_custom_call.1} parent=0
    _
  %s16 = ssub.s32 1, %s14
  %s17 = scalar_select 0, %s16, %s14
  %19 = dma.hbm_to_smem %s0, 16, [#allocation4], [#allocation3]
  %20 = dma.done [#allocation3], 16
  %21 = sfence
  $region1: #{tpu_custom_call.1} parent=0
    #allocation5 [shape = 'u8[16384]{0}', space=vmem, size = 0x4000, scoped, tag = 'input window, operand 2, single buffered']
    #allocation6 [shape = 's32[2]{0}', space=sflag, size = 0x8, scoped, tag = 'scoped memory for tpu_custom_call.1']
    #allocation7 [shape = 's32[2]{0}', space=sflag, size = 0x8, scoped, tag = 'scoped memory for tpu_custom_call.1']
    #allocation8 [shape = 'u8[16384]{0}', space=vmem, size = 0x4000, scoped, tag = 'input window, operand 8, single buffered']
    #allocation9 [shape = 's32[1]{0}', space=sflag, size = 0x4, scoped, tag = 'scoped memory for tpu_custom_call.1']
    #allocation10 [shape = 'u8[32768]{0}', space=vmem, size = 0x8000, scoped, tag = 'input window, operand 11, single buffered']
    #allocation11 [shape = 'u8[2048]{0}', space=vmem, size = 0x800, scoped, tag = 'output window, operand 0, single buffered']
    %22 = vsyncpa [#allocation6], 0
    %23 = vsyncpa [#allocation9], 0
    %24 = vsyncpa [#allocation7], 0
    loop: start=0, step=1, limit=4
    $region2: #{tpu_custom_call.1} parent=1 // loop_pre_header
      _
    $region3: #{tpu_custom_call.1} parent=1 // loop_header
      %s26 = sphi 0, %s30
      %p27 = scmp.ge.s32.totalorder %s26, 4
      %s33 = sphi 0, %s45
      %s34 = sphi 0, %s41
      %s35 = sphi 0, %s33
      %s36 = sphi 0, %s34
      %s37 = sphi 0, %s35
      %s38 = sphi 0, %s36
      %s48 = sphi 0, %s50
      %s51 = sphi 0, %s48
      %s52 = sphi 0, %s51
      %s68 = sphi 0, %s52
      %s72 = sphi 0, %s72
      %s74 = sphi 0, %s72
      %s75 = sphi 0, %s74
      %s89 = sphi 0, %s75
      %s93 = sphi 0, %s93
      %s95 = sphi 0, %s93
      %s96 = sphi 0, %s95
      %s110 = sphi 0, %s96
      %s114 = sphi 0, %s114
      %s116 = sphi 0, %s114
      %s117 = sphi 0, %s116
      %s131 = sphi 0, %s117
      %s135 = sphi 0, %s135
      %s137 = sphi 0, %s135
      %s138 = sphi 0, %s137
      %s152 = sphi 0, %s138
      %s156 = sphi 0, %s156
      %s158 = sphi 0, %s156
      %s159 = sphi 0, %s158
      %s173 = sphi 0, %s159
      %s177 = sphi 0, %s177
      %s179 = sphi 0, %s177
      %s180 = sphi 0, %s179
      %s194 = sphi 0, %s180
      %s198 = sphi 0, %s198
      %s200 = sphi 0, %s198
      %s201 = sphi 0, %s200
      %s215 = sphi 0, %s201
      %s219 = sphi 0, %s219
      %s221 = sphi 0, %s219
      %s222 = sphi 0, %s221
      %s236 = sphi 0, %s222
      %s240 = sphi 0, %s240
      %s242 = sphi 0, %s240
      %s243 = sphi 0, %s242
      %s257 = sphi 0, %s243
      %s261 = sphi 0, %s261
      %s263 = sphi 0, %s261
      %s264 = sphi 0, %s263
      %s278 = sphi 0, %s264
      %s282 = sphi 0, %s282
      %s284 = sphi 0, %s282
      %s285 = sphi 0, %s284
      %s299 = sphi 0, %s285
      %s303 = sphi 0, %s303
      %s305 = sphi 0, %s303
      %s306 = sphi 0, %s305
      %s320 = sphi 0, %s306
    $region4: #{tpu_custom_call.1} parent=1 // loop_header_branch
      %29 = sbr.rel (%p27) target = $region8
    $region5: #{tpu_custom_call.1} parent=1 // loop_body
      %s31 = ssub.s32 %s26, 1
      %s32 = ssub.s32 %s26, 2
      %s39 = sadd.s32 1, %s34
      %p40 = scmp.ge.s32.totalorder %s39, 1
      %s41 = scalar_select %p40, 0, %s39
      %s42 = sadd.s32 1, %s33
      %s43 = scalar_select %p40, %s42, %s33
      %p44 = scmp.ge.s32.totalorder %s43, 2
      %s45 = scalar_select %p44, 0, %s43
      %s46 = ssub.s32 %s34, %s41
      %p47 = scmp.eq.s32.totalorder %s46, 0
      %s49 = sadd.s32 %s48, 1
      %s50 = scalar_select %p47, %s48, %s49
      %p53 = pneg %p47
      %p54 = scmp.eq.s32.totalorder %s26, 1
      %p55 = por %p53, %p54
      %p56 = scmp.ne.s32.totalorder %s48, %s51
      %p57 = scmp.eq.s32.totalorder %s26, 0
      %p58 = por %p56, %p57
      %p59 = scmp.ne.s32.totalorder %s48, %s51
      %p60 = scmp.eq.s32.totalorder %s31, 1
      %p61 = por %p59, %p60
      %p62 = scmp.ne.s32.totalorder %s51, %s52
      %p63 = scmp.eq.s32.totalorder %s31, 0
      %p64 = por %p62, %p63
      %p65 = scmp.ne.s32.totalorder %s51, %s52
      %p66 = scmp.eq.s32.totalorder %s32, 1
      %p67 = por %p65, %p66
      %p69 = scmp.ne.s32.totalorder %s52, %s68
      %p70 = scmp.eq.s32.totalorder %s32, 0
      %p71 = por %p69, %p70
      %s73 = sadd.s32 %s72, 1
      %p76 = scmp.eq.s32.totalorder %s26, 1
      %p77 = scmp.ne.s32.totalorder %s72, %s74
      %p78 = scmp.eq.s32.totalorder %s26, 0
      %p79 = por %p77, %p78
      %p80 = scmp.ne.s32.totalorder %s72, %s74
      %p81 = scmp.eq.s32.totalorder %s31, 1
      %p82 = por %p80, %p81
      %p83 = scmp.ne.s32.totalorder %s74, %s75
      %p84 = scmp.eq.s32.totalorder %s31, 0
      %p85 = por %p83, %p84
      %p86 = scmp.ne.s32.totalorder %s74, %s75
      %p87 = scmp.eq.s32.totalorder %s32, 1
      %p88 = por %p86, %p87
      %p90 = scmp.ne.s32.totalorder %s75, %s89
      %p91 = scmp.eq.s32.totalorder %s32, 0
      %p92 = por %p90, %p91
      %s94 = sadd.s32 %s93, 1
      %p97 = scmp.eq.s32.totalorder %s26, 1
      %p98 = scmp.ne.s32.totalorder %s93, %s95
      %p99 = scmp.eq.s32.totalorder %s26, 0
      %p100 = por %p98, %p99
      %p101 = scmp.ne.s32.totalorder %s93, %s95
      %p102 = scmp.eq.s32.totalorder %s31, 1
      %p103 = por %p101, %p102
      %p104 = scmp.ne.s32.totalorder %s95, %s96
      %p105 = scmp.eq.s32.totalorder %s31, 0
      %p106 = por %p104, %p105
      %p107 = scmp.ne.s32.totalorder %s95, %s96
      %p108 = scmp.eq.s32.totalorder %s32, 1
      %p109 = por %p107, %p108
      %p111 = scmp.ne.s32.totalorder %s96, %s110
      %p112 = scmp.eq.s32.totalorder %s32, 0
      %p113 = por %p111, %p112
      %s115 = sadd.s32 %s114, 1
      %p118 = scmp.eq.s32.totalorder %s26, 1
      %p119 = scmp.ne.s32.totalorder %s114, %s116
      %p120 = scmp.eq.s32.totalorder %s26, 0
      %p121 = por %p119, %p120
      %p122 = scmp.ne.s32.totalorder %s114, %s116
      %p123 = scmp.eq.s32.totalorder %s31, 1
      %p124 = por %p122, %p123
      %p125 = scmp.ne.s32.totalorder %s116, %s117
      %p126 = scmp.eq.s32.totalorder %s31, 0
      %p127 = por %p125, %p126
      %p128 = scmp.ne.s32.totalorder %s116, %s117
      %p129 = scmp.eq.s32.totalorder %s32, 1
      %p130 = por %p128, %p129
      %p132 = scmp.ne.s32.totalorder %s117, %s131
      %p133 = scmp.eq.s32.totalorder %s32, 0
      %p134 = por %p132, %p133
      %s136 = sadd.s32 %s135, 1
      %p139 = scmp.eq.s32.totalorder %s26, 1
      %p140 = scmp.ne.s32.totalorder %s135, %s137
      %p141 = scmp.eq.s32.totalorder %s26, 0
      %p142 = por %p140, %p141
      %p143 = scmp.ne.s32.totalorder %s135, %s137
      %p144 = scmp.eq.s32.totalorder %s31, 1
      %p145 = por %p143, %p144
      %p146 = scmp.ne.s32.totalorder %s137, %s138
      %p147 = scmp.eq.s32.totalorder %s31, 0
      %p148 = por %p146, %p147
      %p149 = scmp.ne.s32.totalorder %s137, %s138
      %p150 = scmp.eq.s32.totalorder %s32, 1
      %p151 = por %p149, %p150
      %p153 = scmp.ne.s32.totalorder %s138, %s152
      %p154 = scmp.eq.s32.totalorder %s32, 0
      %p155 = por %p153, %p154
      %s157 = sadd.s32 %s156, 1
      %p160 = scmp.eq.s32.totalorder %s26, 1
      %p161 = scmp.ne.s32.totalorder %s156, %s158
      %p162 = scmp.eq.s32.totalorder %s26, 0
      %p163 = por %p161, %p162
      %p164 = scmp.ne.s32.totalorder %s156, %s158
      %p165 = scmp.eq.s32.totalorder %s31, 1
      %p166 = por %p164, %p165
      %p167 = scmp.ne.s32.totalorder %s158, %s159
      %p168 = scmp.eq.s32.totalorder %s31, 0
      %p169 = por %p167, %p168
      %p170 = scmp.ne.s32.totalorder %s158, %s159
      %p171 = scmp.eq.s32.totalorder %s32, 1
      %p172 = por %p170, %p171
      %p174 = scmp.ne.s32.totalorder %s159, %s173
      %p175 = scmp.eq.s32.totalorder %s32, 0
      %p176 = por %p174, %p175
      %s178 = sadd.s32 %s177, 1
      %p181 = scmp.eq.s32.totalorder %s26, 1
      %p182 = scmp.ne.s32.totalorder %s177, %s179
      %p183 = scmp.eq.s32.totalorder %s26, 0
      %p184 = por %p182, %p183
      %p185 = scmp.ne.s32.totalorder %s177, %s179
      %p186 = scmp.eq.s32.totalorder %s31, 1
      %p187 = por %p185, %p186
      %p188 = scmp.ne.s32.totalorder %s179, %s180
      %p189 = scmp.eq.s32.totalorder %s31, 0
      %p190 = por %p188, %p189
      %p191 = scmp.ne.s32.totalorder %s179, %s180
      %p192 = scmp.eq.s32.totalorder %s32, 1
      %p193 = por %p191, %p192
      %p195 = scmp.ne.s32.totalorder %s180, %s194
      %p196 = scmp.eq.s32.totalorder %s32, 0
      %p197 = por %p195, %p196
      %s199 = sadd.s32 %s198, 1
      %p202 = scmp.eq.s32.totalorder %s26, 1
      %p203 = scmp.ne.s32.totalorder %s198, %s200
      %p204 = scmp.eq.s32.totalorder %s26, 0
      %p205 = por %p203, %p204
      %p206 = scmp.ne.s32.totalorder %s198, %s200
      %p207 = scmp.eq.s32.totalorder %s31, 1
      %p208 = por %p206, %p207
      %p209 = scmp.ne.s32.totalorder %s200, %s201
      %p210 = scmp.eq.s32.totalorder %s31, 0
      %p211 = por %p209, %p210
      %p212 = scmp.ne.s32.totalorder %s200, %s201
      %p213 = scmp.eq.s32.totalorder %s32, 1
      %p214 = por %p212, %p213
      %p216 = scmp.ne.s32.totalorder %s201, %s215
      %p217 = scmp.eq.s32.totalorder %s32, 0
      %p218 = por %p216, %p217
      %s220 = sadd.s32 %s219, 1
      %p223 = scmp.eq.s32.totalorder %s26, 1
      %p224 = scmp.ne.s32.totalorder %s219, %s221
      %p225 = scmp.eq.s32.totalorder %s26, 0
      %p226 = por %p224, %p225
      %p227 = scmp.ne.s32.totalorder %s219, %s221
      %p228 = scmp.eq.s32.totalorder %s31, 1
      %p229 = por %p227, %p228
      %p230 = scmp.ne.s32.totalorder %s221, %s222
      %p231 = scmp.eq.s32.totalorder %s31, 0
      %p232 = por %p230, %p231
      %p233 = scmp.ne.s32.totalorder %s221, %s222
      %p234 = scmp.eq.s32.totalorder %s32, 1
      %p235 = por %p233, %p234
      %p237 = scmp.ne.s32.totalorder %s222, %s236
      %p238 = scmp.eq.s32.totalorder %s32, 0
      %p239 = por %p237, %p238
      %s241 = sadd.s32 %s240, 1
      %p244 = scmp.eq.s32.totalorder %s26, 1
      %p245 = scmp.ne.s32.totalorder %s240, %s242
      %p246 = scmp.eq.s32.totalorder %s26, 0
      %p247 = por %p245, %p246
      %p248 = scmp.ne.s32.totalorder %s240, %s242
      %p249 = scmp.eq.s32.totalorder %s31, 1
      %p250 = por %p248, %p249
      %p251 = scmp.ne.s32.totalorder %s242, %s243
      %p252 = scmp.eq.s32.totalorder %s31, 0
      %p253 = por %p251, %p252
      %p254 = scmp.ne.s32.totalorder %s242, %s243
      %p255 = scmp.eq.s32.totalorder %s32, 1
      %p256 = por %p254, %p255
      %p258 = scmp.ne.s32.totalorder %s243, %s257
      %p259 = scmp.eq.s32.totalorder %s32, 0
      %p260 = por %p258, %p259
      %s262 = sadd.s32 %s261, 1
      %p265 = scmp.eq.s32.totalorder %s26, 1
      %p266 = scmp.ne.s32.totalorder %s261, %s263
      %p267 = scmp.eq.s32.totalorder %s26, 0
      %p268 = por %p266, %p267
      %p269 = scmp.ne.s32.totalorder %s261, %s263
      %p270 = scmp.eq.s32.totalorder %s31, 1
      %p271 = por %p269, %p270
      %p272 = scmp.ne.s32.totalorder %s263, %s264
      %p273 = scmp.eq.s32.totalorder %s31, 0
      %p274 = por %p272, %p273
      %p275 = scmp.ne.s32.totalorder %s263, %s264
      %p276 = scmp.eq.s32.totalorder %s32, 1
      %p277 = por %p275, %p276
      %p279 = scmp.ne.s32.totalorder %s264, %s278
      %p280 = scmp.eq.s32.totalorder %s32, 0
      %p281 = por %p279, %p280
      %s283 = sadd.s32 %s282, 1
      %p286 = scmp.eq.s32.totalorder %s26, 1
      %p287 = scmp.ne.s32.totalorder %s282, %s284
      %p288 = scmp.eq.s32.totalorder %s26, 0
      %p289 = por %p287, %p288
      %p290 = scmp.ne.s32.totalorder %s282, %s284
      %p291 = scmp.eq.s32.totalorder %s31, 1
      %p292 = por %p290, %p291
      %p293 = scmp.ne.s32.totalorder %s284, %s285
      %p294 = scmp.eq.s32.totalorder %s31, 0
      %p295 = por %p293, %p294
      %p296 = scmp.ne.s32.totalorder %s284, %s285
      %p297 = scmp.eq.s32.totalorder %s32, 1
      %p298 = por %p296, %p297
      %p300 = scmp.ne.s32.totalorder %s285, %s299
      %p301 = scmp.eq.s32.totalorder %s32, 0
      %p302 = por %p300, %p301
      %s304 = sadd.s32 %s303, 1
      %p307 = scmp.eq.s32.totalorder %s26, 1
      %p308 = scmp.ne.s32.totalorder %s303, %s305
      %p309 = scmp.eq.s32.totalorder %s26, 0
      %p310 = por %p308, %p309
      %p311 = scmp.ne.s32.totalorder %s303, %s305
      %p312 = scmp.eq.s32.totalorder %s31, 1
      %p313 = por %p311, %p312
      %p314 = scmp.ne.s32.totalorder %s305, %s306
      %p315 = scmp.eq.s32.totalorder %s31, 0
      %p316 = por %p314, %p315
      %p317 = scmp.ne.s32.totalorder %s305, %s306
      %p318 = scmp.eq.s32.totalorder %s32, 1
      %p319 = por %p317, %p318
      %p321 = scmp.ne.s32.totalorder %s306, %s320
      %p322 = scmp.eq.s32.totalorder %s32, 0
      %p323 = por %p321, %p322
      %p324 = scmp.le.s32.totalorder 1, %s26
      %p325 = scmp.lt.s32.totalorder %s26, 3
      %p326 = pnand %p324, %p325
      %p327 = pneg %p326
      // Predicated region
      $region9: #{tpu_custom_call.1} parent=5 // pred_check
        _
      $region10: #{tpu_custom_call.1} parent=5 // pred_check_branch
        %329 = sbr.rel (%p326) target = $region12
      $region11: #{tpu_custom_call.1} parent=5 // pred_region
        %s330 = ssub.s32 %s26, 1
        // Predicated region
        $region13: #{tpu_custom_call.1} parent=11 // pred_check
          %p331 = pneg %p64
        $region14: #{tpu_custom_call.1} parent=11 // pred_check_branch
          %333 = sbr.rel (%p331) target = $region16
        $region15: #{tpu_custom_call.1} parent=11 // pred_region
          %s334 = smul.u32 32, %s36
          %p335 = scmp.lt.s32.totalorder %s334, 31
          %s336 = scalar_select %p335, %s334, 31
          %s337 = smul.addr %s336, 4
          %s338 = scalar_lea.vmem %s1, %s337
          %s339 = smul.u32 32, %s36
        $region16: #{tpu_custom_call.1} parent=11 // pred_fallthru
          _
        // Predicated region
        $region17: #{tpu_custom_call.1} parent=11 // pred_check
          %p340 = pneg %p85
        $region18: #{tpu_custom_call.1} parent=11 // pred_check_branch
          %342 = sbr.rel (%p340) target = $region20
        $region19: #{tpu_custom_call.1} parent=11 // pred_region
          %s344 = ssub.s32 512, 512
          %345 = vsyncadd [#allocation6], %s344
          %s346 = sshll.u32 [#allocation5], 4
          %s347 = int_to_ptr.vmem [resolvable:$true] %s346
          %352 = dma.hbm_to_vmem [thread:$0]  %s2, 512, %s347, [#allocation6], 64, 64, 4
        $region20: #{tpu_custom_call.1} parent=11 // pred_fallthru
          _
        // Predicated region
        $region21: #{tpu_custom_call.1} parent=11 // pred_check
          %p353 = pneg %p106
        $region22: #{tpu_custom_call.1} parent=11 // pred_check_branch
          %355 = sbr.rel (%p353) target = $region24
        $region23: #{tpu_custom_call.1} parent=11 // pred_region
          _
        $region24: #{tpu_custom_call.1} parent=11 // pred_fallthru
          _
        // Predicated region
        $region25: #{tpu_custom_call.1} parent=11 // pred_check
          %p356 = pneg %p127
        $region26: #{tpu_custom_call.1} parent=11 // pred_check_branch
          %358 = sbr.rel (%p356) target = $region28
        $region27: #{tpu_custom_call.1} parent=11 // pred_region
          _
        $region28: #{tpu_custom_call.1} parent=11 // pred_fallthru
          _
        // Predicated region
        $region29: #{tpu_custom_call.1} parent=11 // pred_check
          %p359 = pneg %p148
        $region30: #{tpu_custom_call.1} parent=11 // pred_check_branch
          %361 = sbr.rel (%p359) target = $region32
        $region31: #{tpu_custom_call.1} parent=11 // pred_region
          _
        $region32: #{tpu_custom_call.1} parent=11 // pred_fallthru
          _
        // Predicated region
        $region33: #{tpu_custom_call.1} parent=11 // pred_check
          %p362 = pneg %p169
        $region34: #{tpu_custom_call.1} parent=11 // pred_check_branch
          %364 = sbr.rel (%p362) target = $region36
        $region35: #{tpu_custom_call.1} parent=11 // pred_region
          _
        $region36: #{tpu_custom_call.1} parent=11 // pred_fallthru
          _
        // Predicated region
        $region37: #{tpu_custom_call.1} parent=11 // pred_check
          %p365 = pneg %p190
        $region38: #{tpu_custom_call.1} parent=11 // pred_check_branch
          %367 = sbr.rel (%p365) target = $region40
        $region39: #{tpu_custom_call.1} parent=11 // pred_region
          _
        $region40: #{tpu_custom_call.1} parent=11 // pred_fallthru
          _
        // Predicated region
        $region41: #{tpu_custom_call.1} parent=11 // pred_check
          %p368 = pneg %p211
        $region42: #{tpu_custom_call.1} parent=11 // pred_check_branch
          %370 = sbr.rel (%p368) target = $region44
        $region43: #{tpu_custom_call.1} parent=11 // pred_region
          %s372 = ssub.s32 512, 512
          %373 = vsyncadd [#allocation9], %s372
          %s374 = sshll.u32 [#allocation8], 4
          %s375 = int_to_ptr.vmem [resolvable:$true] %s374
          %380 = dma.hbm_to_vmem [thread:$0]  %s8, 512, %s375, [#allocation9], 64, 64, 4
        $region44: #{tpu_custom_call.1} parent=11 // pred_fallthru
          _
        // Predicated region
        $region45: #{tpu_custom_call.1} parent=11 // pred_check
          %p381 = pneg %p232
        $region46: #{tpu_custom_call.1} parent=11 // pred_check_branch
          %383 = sbr.rel (%p381) target = $region48
        $region47: #{tpu_custom_call.1} parent=11 // pred_region
          _
        $region48: #{tpu_custom_call.1} parent=11 // pred_fallthru
          _
        // Predicated region
        $region49: #{tpu_custom_call.1} parent=11 // pred_check
          %p384 = pneg %p253
        $region50: #{tpu_custom_call.1} parent=11 // pred_check_branch
          %386 = sbr.rel (%p384) target = $region52
        $region51: #{tpu_custom_call.1} parent=11 // pred_region
          _
        $region52: #{tpu_custom_call.1} parent=11 // pred_fallthru
          _
        // Predicated region
        $region53: #{tpu_custom_call.1} parent=11 // pred_check
          %p387 = pneg %p274
        $region54: #{tpu_custom_call.1} parent=11 // pred_check_branch
          %389 = sbr.rel (%p387) target = $region56
        $region55: #{tpu_custom_call.1} parent=11 // pred_region
          %s391 = ssub.s32 1024, 1024
          %392 = vsyncadd [#allocation9], %s391
          %s393 = sshll.u32 [#allocation10], 4
          %s394 = int_to_ptr.vmem [resolvable:$true] %s393
          %399 = dma.hbm_to_vmem [thread:$0]  %s11, 1024, %s394, [#allocation9], 64, 64, 4
        $region56: #{tpu_custom_call.1} parent=11 // pred_fallthru
          _
        // Predicated region
        $region57: #{tpu_custom_call.1} parent=11 // pred_check
          %p400 = pneg %p295
        $region58: #{tpu_custom_call.1} parent=11 // pred_check_branch
          %402 = sbr.rel (%p400) target = $region60
        $region59: #{tpu_custom_call.1} parent=11 // pred_region
          _
        $region60: #{tpu_custom_call.1} parent=11 // pred_fallthru
          _
      $region12: #{tpu_custom_call.1} parent=5 // pred_fallthru
        _
      %p403 = scmp.lt.s32.totalorder %s26, 2
      // Predicated region
      $region61: #{tpu_custom_call.1} parent=5 // pred_check
        %p404 = pneg %p403
      $region62: #{tpu_custom_call.1} parent=5 // pred_check_branch
        %406 = sbr.rel (%p404) target = $region64
      $region63: #{tpu_custom_call.1} parent=5 // pred_region
        _
      $region64: #{tpu_custom_call.1} parent=5 // pred_fallthru
        _
      %p407 = scmp.le.s32.totalorder 1, %s26
      %p408 = scmp.lt.s32.totalorder %s26, 3
      %p409 = pnand %p407, %p408
      %p410 = pneg %p409
      // Predicated region
      $region65: #{tpu_custom_call.1} parent=5 // pred_check
        _
      $region66: #{tpu_custom_call.1} parent=5 // pred_check_branch
        %412 = sbr.rel (%p409) target = $region68
      $region67: #{tpu_custom_call.1} parent=5 // pred_region
        %s413 = ssub.s32 %s26, 1
        // Predicated region
        $region69: #{tpu_custom_call.1} parent=67 // pred_check
          %p414 = pneg %p85
        $region70: #{tpu_custom_call.1} parent=67 // pred_check_branch
          %416 = sbr.rel (%p414) target = $region72
        $region71: #{tpu_custom_call.1} parent=67 // pred_region
          %417 = dma.done [#allocation6], 512
        $region72: #{tpu_custom_call.1} parent=67 // pred_fallthru
          _
        // Predicated region
        $region73: #{tpu_custom_call.1} parent=67 // pred_check
          %p418 = pneg %p211
        $region74: #{tpu_custom_call.1} parent=67 // pred_check_branch
          %420 = sbr.rel (%p418) target = $region76
        $region75: #{tpu_custom_call.1} parent=67 // pred_region
          %421 = dma.done [#allocation9], 512
        $region76: #{tpu_custom_call.1} parent=67 // pred_fallthru
          _
        // Predicated region
        $region77: #{tpu_custom_call.1} parent=67 // pred_check
          %p422 = pneg %p274
        $region78: #{tpu_custom_call.1} parent=67 // pred_check_branch
          %424 = sbr.rel (%p422) target = $region80
        $region79: #{tpu_custom_call.1} parent=67 // pred_region
          %425 = dma.done [#allocation9], 1024
        $region80: #{tpu_custom_call.1} parent=67 // pred_fallthru
          _
        %s426 = smul.u32 32, %s36
        %p427 = scmp.lt.s32.totalorder %s426, 31
        %s428 = scalar_select %p427, %s426, 31
        %s429 = smul.addr %s428, 4
        %s430 = scalar_lea.vmem %s1, %s429
        %p431 = pneg %p64
        %p432 = pneg %p61
        %p433 = pneg %p85
        %p434 = pneg %p82
        %p435 = pneg %p106
        %p436 = pneg %p103
        %p437 = pneg %p127
        %p438 = pneg %p124
        %p439 = pneg %p148
        %p440 = pneg %p145
        %p441 = pneg %p169
        %p442 = pneg %p166
        %p443 = pneg %p190
        %p444 = pneg %p187
        %p445 = pneg %p211
        %p446 = pneg %p208
        %p447 = pneg %p232
        %p448 = pneg %p229
        %p449 = pneg %p253
        %p450 = pneg %p250
        %p451 = pneg %p274
        %p452 = pneg %p271
        %p453 = pneg %p295
        %p454 = pneg %p292
        %p455 = pneg %p316
        %p456 = pneg %p313
        %s457 = smul.u32 32, %s36
        %p458 = scmp.lt.s32.totalorder %s457, 31
        %s459 = scalar_select %p458, %s457, 31
        %s460 = smul.addr %s459, 4
        %s461 = scalar_lea.vmem %s1, %s460
        %s462 = smul.u32 32, %s36
        %s464 = smul.u32 %s36, 256
        %s465 = sadd.s32 %s464, 256
        %v466 = vlaneseq
        %v467 = vshrl.u32 %v466, 7
        %v468 = vadd.s32 %v467, 8
        %v469 = vadd.s32 %v467, 16
        %v470 = vadd.s32 %v467, 24
        %v471 = vadd.s32 %v467, 32
        %v472 = vadd.s32 %v467, 40
        %v473 = vadd.s32 %v467, 48
        %v474 = vadd.s32 %v467, 56
        %v475 = vadd.s32 %v467, 64
        %v476 = vadd.s32 %v467, 72
        %v477 = vadd.s32 %v467, 80
        %v478 = vadd.s32 %v467, 88
        %v479 = vadd.s32 %v467, 96
        %v480 = vadd.s32 %v467, 104
        %v481 = vadd.s32 %v467, 112
        %v482 = vadd.s32 %v467, 120
        %v483 = vadd.s32 %v467, 128
        %v484 = vadd.s32 %v467, 136
        %v485 = vadd.s32 %v467, 144
        %v486 = vadd.s32 %v467, 152
        %v487 = vadd.s32 %v467, 160
        %v488 = vadd.s32 %v467, 168
        %v489 = vadd.s32 %v467, 176
        %v490 = vadd.s32 %v467, 184
        %v491 = vadd.s32 %v467, 192
        %v492 = vadd.s32 %v467, 200
        %v493 = vadd.s32 %v467, 208
        %v494 = vadd.s32 %v467, 216
        %v495 = vadd.s32 %v467, 224
        %v496 = vadd.s32 %v467, 232
        %v497 = vadd.s32 %v467, 240
        %v498 = vadd.s32 %v467, 248
        %v499 = vstv %s464
        %v500 = vadd.s32 %v499, %v467
        %v501 = vadd.s32 %v499, %v468
        %v502 = vadd.s32 %v499, %v469
        %v503 = vadd.s32 %v499, %v470
        %v504 = vadd.s32 %v499, %v471
        %v505 = vadd.s32 %v499, %v472
        %v506 = vadd.s32 %v499, %v473
        %v507 = vadd.s32 %v499, %v474
        %v508 = vadd.s32 %v499, %v475
        %v509 = vadd.s32 %v499, %v476
        %v510 = vadd.s32 %v499, %v477
        %v511 = vadd.s32 %v499, %v478
        %v512 = vadd.s32 %v499, %v479
        %v513 = vadd.s32 %v499, %v480
        %v514 = vadd.s32 %v499, %v481
        %v515 = vadd.s32 %v499, %v482
        %v516 = vadd.s32 %v499, %v483
        %v517 = vadd.s32 %v499, %v484
        %v518 = vadd.s32 %v499, %v485
        %v519 = vadd.s32 %v499, %v486
        %v520 = vadd.s32 %v499, %v487
        %v521 = vadd.s32 %v499, %v488
        %v522 = vadd.s32 %v499, %v489
        %v523 = vadd.s32 %v499, %v490
        %v524 = vadd.s32 %v499, %v491
        %v525 = vadd.s32 %v499, %v492
        %v526 = vadd.s32 %v499, %v493
        %v527 = vadd.s32 %v499, %v494
        %v528 = vadd.s32 %v499, %v495
        %v529 = vadd.s32 %v499, %v496
        %v530 = vadd.s32 %v499, %v497
        %v531 = vadd.s32 %v499, %v498
        %v532 = vld [vmem:[%s461] sm:$0xf]
        %v533 = vld [vmem:[%s461 + $0x4] sm:$0xf]
        %v534 = vld [vmem:[%s461 + $0x8] sm:$0xf]
        %v535 = vld [vmem:[%s461 + $0xc] sm:$0xf]
        %v536 = vld [vmem:[%s461 + $0x10] sm:$0xf]
        %v537 = vld [vmem:[%s461 + $0x14] sm:$0xf]
        %v538 = vld [vmem:[%s461 + $0x18] sm:$0xf]
        %v539 = vld [vmem:[%s461 + $0x1c] sm:$0xf]
        %v540 = vld [vmem:[%s461 + $0x20] sm:$0xf]
        %v541 = vld [vmem:[%s461 + $0x24] sm:$0xf]
        %v542 = vld [vmem:[%s461 + $0x28] sm:$0xf]
        %v543 = vld [vmem:[%s461 + $0x2c] sm:$0xf]
        %v544 = vld [vmem:[%s461 + $0x30] sm:$0xf]
        %v545 = vld [vmem:[%s461 + $0x34] sm:$0xf]
        %v546 = vld [vmem:[%s461 + $0x38] sm:$0xf]
        %v547 = vld [vmem:[%s461 + $0x3c] sm:$0xf]
        %v548 = vld [vmem:[%s461 + $0x40] sm:$0xf]
        %v549 = vld [vmem:[%s461 + $0x44] sm:$0xf]
        %v550 = vld [vmem:[%s461 + $0x48] sm:$0xf]
        %v551 = vld [vmem:[%s461 + $0x4c] sm:$0xf]
        %v552 = vld [vmem:[%s461 + $0x50] sm:$0xf]
        %v553 = vld [vmem:[%s461 + $0x54] sm:$0xf]
        %v554 = vld [vmem:[%s461 + $0x58] sm:$0xf]
        %v555 = vld [vmem:[%s461 + $0x5c] sm:$0xf]
        %v556 = vld [vmem:[%s461 + $0x60] sm:$0xf]
        %v557 = vld [vmem:[%s461 + $0x64] sm:$0xf]
        %v558 = vld [vmem:[%s461 + $0x68] sm:$0xf]
        %v559 = vld [vmem:[%s461 + $0x6c] sm:$0xf]
        %v560 = vld [vmem:[%s461 + $0x70] sm:$0xf]
        %v561 = vld [vmem:[%s461 + $0x74] sm:$0xf]
        %v562 = vld [vmem:[%s461 + $0x78] sm:$0xf]
        %v563 = vld [vmem:[%s461 + $0x7c] sm:$0xf]
        %p564 = scmp.eq.s32.totalorder %s35, 0
        %p565 = scmp.eq.s32.totalorder %s36, 0
        %p566 = pnand %p564, %p565
        %p567 = pneg %p566
        // Predicated region
        $region81: #{tpu_custom_call.1} parent=67 // pred_check
          _
        $region82: #{tpu_custom_call.1} parent=67 // pred_check_branch
          %569 = sbr.rel (%p566) target = $region84
        $region83: #{tpu_custom_call.1} parent=67 // pred_region
          %570 = vst [vmem:[#allocation2] sm:$0xff] -inf
          %571 = vst [vmem:[#allocation11] sm:$0x7] -inf
        $region84: #{tpu_custom_call.1} parent=67 // pred_fallthru
          _
        // Predicated region
        $region85: #{tpu_custom_call.1} parent=67 // pred_check
          %p572 = pneg %p564
        $region86: #{tpu_custom_call.1} parent=67 // pred_check_branch
          %574 = sbr.rel (%p572) target = $region88
        $region87: #{tpu_custom_call.1} parent=67 // pred_region
          %v575 = vld [vmem:[#allocation5] sm:$0xf]
          %v576 = vld [vmem:[#allocation5 + $0x4] sm:$0xf]
          %v577 = vld [vmem:[#allocation5 + $0x8] sm:$0xf]
          %v578 = vld [vmem:[#allocation5 + $0xc] sm:$0xf]
          %v579 = vld [vmem:[#allocation5 + $0x10] sm:$0xf]
          %v580 = vld [vmem:[#allocation5 + $0x14] sm:$0xf]
          %v581 = vld [vmem:[#allocation5 + $0x18] sm:$0xf]
          %v582 = vld [vmem:[#allocation5 + $0x1c] sm:$0xf]
          %v583 = vld [vmem:[%s3] sm:$0x1]
          %v585 = vlaneseq
          %v586 = vshrl.u32 %v585, 7
          %v587 = vsub.s32 0, %v586
          %v588 = vrot.slane %v583, %v587
          %v622 = vunpack.c.l.b16 %v532
          %v623 = vunpack.c.l.b16 %v533
          %v624 = vunpack.c.l.b16 %v534
          %v625 = vunpack.c.l.b16 %v535
          %v626 = vunpack.c.l.b16 %v536
          %v627 = vunpack.c.l.b16 %v537
          %v628 = vunpack.c.l.b16 %v538
          %v629 = vunpack.c.l.b16 %v539
          %v630 = vunpack.c.l.b16 %v540
          %v631 = vunpack.c.l.b16 %v541
          %v632 = vunpack.c.l.b16 %v542
          %v633 = vunpack.c.l.b16 %v543
          %v634 = vunpack.c.l.b16 %v544
          %v635 = vunpack.c.l.b16 %v545
          %v636 = vunpack.c.l.b16 %v546
          %v637 = vunpack.c.l.b16 %v547
          %v638 = vunpack.c.l.b16 %v548
          %v639 = vunpack.c.l.b16 %v549
          %v640 = vunpack.c.l.b16 %v550
          %v641 = vunpack.c.l.b16 %v551
          %v642 = vunpack.c.l.b16 %v552
          %v643 = vunpack.c.l.b16 %v553
          %v644 = vunpack.c.l.b16 %v554
          %v645 = vunpack.c.l.b16 %v555
          %v646 = vunpack.c.l.b16 %v556
          %v647 = vunpack.c.l.b16 %v557
          %v648 = vunpack.c.l.b16 %v558
          %v649 = vunpack.c.l.b16 %v559
          %v650 = vunpack.c.l.b16 %v560
          %v651 = vunpack.c.l.b16 %v561
          %v652 = vunpack.c.l.b16 %v562
          %v653 = vunpack.c.l.b16 %v563
          %v654 = vpack.c.b16 %v623, %v622
          %v655 = vpack.c.b16 %v625, %v624
          %v656 = vpack.c.b16 %v627, %v626
          %v657 = vpack.c.b16 %v629, %v628
          %v658 = vpack.c.b16 %v631, %v630
          %v659 = vpack.c.b16 %v633, %v632
          %v660 = vpack.c.b16 %v635, %v634
          %v661 = vpack.c.b16 %v637, %v636
          %v662 = vpack.c.b16 %v639, %v638
          %v663 = vpack.c.b16 %v641, %v640
          %v664 = vpack.c.b16 %v643, %v642
          %v665 = vpack.c.b16 %v645, %v644
          %v666 = vpack.c.b16 %v647, %v646
          %v667 = vpack.c.b16 %v649, %v648
          %v668 = vpack.c.b16 %v651, %v650
          %v669 = vpack.c.b16 %v653, %v652
          %v678 = vunpack.c.l.b16 %v575
          %v679 = vunpack.c.l.b16 %v576
          %v680 = vunpack.c.l.b16 %v577
          %v681 = vunpack.c.l.b16 %v578
          %v682 = vunpack.c.l.b16 %v579
          %v683 = vunpack.c.l.b16 %v580
          %v684 = vunpack.c.l.b16 %v581
          %v685 = vunpack.c.l.b16 %v582
          %v686 = vpack.c.b16 %v679, %v678
          %v687 = vpack.c.b16 %v681, %v680
          %v688 = vpack.c.b16 %v683, %v682
          %v689 = vpack.c.b16 %v685, %v684
          %vm694 = vcmask 523264
          %v696 = vsel %vm694, %v654, 0
          %v699 = vsel %vm694, %v655, 0
          %v702 = vsel %vm694, %v656, 0
          %v705 = vsel %vm694, %v657, 0
          %v708 = vsel %vm694, %v658, 0
          %v711 = vsel %vm694, %v659, 0
          %v714 = vsel %vm694, %v660, 0
          %v717 = vsel %vm694, %v661, 0
          %v720 = vsel %vm694, %v662, 0
          %v723 = vsel %vm694, %v663, 0
          %v726 = vsel %vm694, %v664, 0
          %v729 = vsel %vm694, %v665, 0
          %v732 = vsel %vm694, %v666, 0
          %v735 = vsel %vm694, %v667, 0
          %v738 = vsel %vm694, %v668, 0
          %v741 = vsel %vm694, %v669, 0
          %743 = vmatprep.subr.bf16.mxu0 0
          %744 = vmatpush1.bf16.msra.mxu0 %v686
          %745 = vmatprep.subr.bf16.mxu0 0
          %746 = vmatpush1.bf16.msra.mxu0 %v687
          %747 = vmatprep.subr.bf16.mxu0 0
          %748 = vmatpush1.bf16.msra.mxu0 %v688
          %749 = vmatprep.subr.bf16.mxu0 0
          %750 = vmatpush1.bf16.msra.mxu0 %v689
          %751 = vmatprep.subr.bf16.mxu0 0
          %752 = vmatpush1.bf16.msra.mxu0 0
          %753 = vmatprep.subr.bf16.mxu0 0
          %754 = vmatpush1.bf16.msra.mxu0 0
          %755 = vmatprep.subr.bf16.mxu0 0
          %756 = vmatpush1.bf16.msra.mxu0 0
          %757 = vmatprep.subr.bf16.mxu0 0
          %758 = vmatpush1.bf16.msra.mxu0 0
          %759 = vmatprep.subr.bf16.mxu0 0
          %760 = vmatpush1.bf16.msra.mxu0 0
          %761 = vmatprep.subr.bf16.mxu0 0
          %762 = vmatpush1.bf16.msra.mxu0 0
          %763 = vmatprep.subr.bf16.mxu0 0
          %764 = vmatpush1.bf16.msra.mxu0 0
          %765 = vmatprep.subr.bf16.mxu0 0
          %766 = vmatpush1.bf16.msra.mxu0 0
          %767 = vmatprep.subr.bf16.mxu0 0
          %768 = vmatpush1.bf16.msra.mxu0 0
          %769 = vmatprep.subr.bf16.mxu0 0
          %770 = vmatpush1.bf16.msra.mxu0 0
          %771 = vmatprep.subr.bf16.mxu0 0
          %772 = vmatpush1.bf16.msra.mxu0 0
          %773 = vmatprep.subr.bf16.mxu0 0
          %774 = vmatpush1.bf16.msra.mxu0 0
          %775 = vmatprep.mubr.bf16.mxu0 0
          %776 = vmatmul.mubr.bf16.gmra.mrb[0].mxu0 %v696
          %v777 = vpop.f32.mrb[0].mxu0
          %v778 = vadd.f32 %v588, %v777
          %v779 = vpop.f32.mrb[0].mxu0
          %v780 = vpop.f32.mrb[0].mxu0
          %v781 = vadd.f32 %v588, %v780
          %v782 = vpop.f32.mrb[0].mxu0
          %783 = vmatprep.mubr.bf16.mxu0 0
          %784 = vmatmul.mubr.bf16.gmra.mrb[0].mxu0 %v699
          %v785 = vpop.f32.mrb[0].mxu0
          %v786 = vadd.f32 %v588, %v785
          %v787 = vpop.f32.mrb[0].mxu0
          %v788 = vpop.f32.mrb[0].mxu0
          %v789 = vadd.f32 %v588, %v788
          %v790 = vpop.f32.mrb[0].mxu0
          %791 = vmatprep.mubr.bf16.mxu0 0
          %792 = vmatmul.mubr.bf16.gmra.mrb[0].mxu0 %v702
          %v793 = vpop.f32.mrb[0].mxu0
          %v794 = vadd.f32 %v588, %v793
          %v795 = vpop.f32.mrb[0].mxu0
          %v796 = vpop.f32.mrb[0].mxu0
          %v797 = vadd.f32 %v588, %v796
          %v798 = vpop.f32.mrb[0].mxu0
          %799 = vmatprep.mubr.bf16.mxu0 0
          %800 = vmatmul.mubr.bf16.gmra.mrb[0].mxu0 %v705
          %v801 = vpop.f32.mrb[0].mxu0
          %v802 = vadd.f32 %v588, %v801
          %v803 = vpop.f32.mrb[0].mxu0
          %v804 = vpop.f32.mrb[0].mxu0
          %v805 = vadd.f32 %v588, %v804
          %v806 = vpop.f32.mrb[0].mxu0
          %807 = vmatprep.mubr.bf16.mxu0 0
          %808 = vmatmul.mubr.bf16.gmra.mrb[0].mxu0 %v708
          %v809 = vpop.f32.mrb[0].mxu0
          %v810 = vadd.f32 %v588, %v809
          %v811 = vpop.f32.mrb[0].mxu0
          %v812 = vpop.f32.mrb[0].mxu0
          %v813 = vadd.f32 %v588, %v812
          %v814 = vpop.f32.mrb[0].mxu0
          %815 = vmatprep.mubr.bf16.mxu0 0
          %816 = vmatmul.mubr.bf16.gmra.mrb[0].mxu0 %v711
          %v817 = vpop.f32.mrb[0].mxu0
          %v818 = vadd.f32 %v588, %v817
          %v819 = vpop.f32.mrb[0].mxu0
          %v820 = vpop.f32.mrb[0].mxu0
          %v821 = vadd.f32 %v588, %v820
          %v822 = vpop.f32.mrb[0].mxu0
          %823 = vmatprep.mubr.bf16.mxu0 0
          %824 = vmatmul.mubr.bf16.gmra.mrb[0].mxu0 %v714
          %v825 = vpop.f32.mrb[0].mxu0
          %v826 = vadd.f32 %v588, %v825
          %v827 = vpop.f32.mrb[0].mxu0
          %v828 = vpop.f32.mrb[0].mxu0
          %v829 = vadd.f32 %v588, %v828
          %v830 = vpop.f32.mrb[0].mxu0
          %831 = vmatprep.mubr.bf16.mxu0 0
          %832 = vmatmul.mubr.bf16.gmra.mrb[0].mxu0 %v717
          %v833 = vpop.f32.mrb[0].mxu0
          %v834 = vadd.f32 %v588, %v833
          %v835 = vpop.f32.mrb[0].mxu0
          %v836 = vpop.f32.mrb[0].mxu0
          %v837 = vadd.f32 %v588, %v836
          %v838 = vpop.f32.mrb[0].mxu0
          %839 = vmatprep.mubr.bf16.mxu0 0
          %840 = vmatmul.mubr.bf16.gmra.mrb[0].mxu0 %v720
          %v841 = vpop.f32.mrb[0].mxu0
          %v842 = vadd.f32 %v588, %v841
          %v843 = vpop.f32.mrb[0].mxu0
          %v844 = vpop.f32.mrb[0].mxu0
          %v845 = vadd.f32 %v588, %v844
          %v846 = vpop.f32.mrb[0].mxu0
          %847 = vmatprep.mubr.bf16.mxu0 0
          %848 = vmatmul.mubr.bf16.gmra.mrb[0].mxu0 %v723
          %v849 = vpop.f32.mrb[0].mxu0
          %v850 = vadd.f32 %v588, %v849
          %v851 = vpop.f32.mrb[0].mxu0
          %v852 = vpop.f32.mrb[0].mxu0
          %v853 = vadd.f32 %v588, %v852
          %v854 = vpop.f32.mrb[0].mxu0
          %855 = vmatprep.mubr.bf16.mxu0 0
          %856 = vmatmul.mubr.bf16.gmra.mrb[0].mxu0 %v726
          %v857 = vpop.f32.mrb[0].mxu0
          %v858 = vadd.f32 %v588, %v857
          %v859 = vpop.f32.mrb[0].mxu0
          %v860 = vpop.f32.mrb[0].mxu0
          %v861 = vadd.f32 %v588, %v860
          %v862 = vpop.f32.mrb[0].mxu0
          %863 = vmatprep.mubr.bf16.mxu0 0
          %864 = vmatmul.mubr.bf16.gmra.mrb[0].mxu0 %v729
          %v865 = vpop.f32.mrb[0].mxu0
          %v866 = vadd.f32 %v588, %v865
          %v867 = vpop.f32.mrb[0].mxu0
          %v868 = vpop.f32.mrb[0].mxu0
          %v869 = vadd.f32 %v588, %v868
          %v870 = vpop.f32.mrb[0].mxu0
          %871 = vmatprep.mubr.bf16.mxu0 0
          %872 = vmatmul.mubr.bf16.gmra.mrb[0].mxu0 %v732
          %v873 = vpop.f32.mrb[0].mxu0
          %v874 = vadd.f32 %v588, %v873
          %v875 = vpop.f32.mrb[0].mxu0
          %v876 = vpop.f32.mrb[0].mxu0
          %v877 = vadd.f32 %v588, %v876
          %v878 = vpop.f32.mrb[0].mxu0
          %879 = vmatprep.mubr.bf16.mxu0 0
          %880 = vmatmul.mubr.bf16.gmra.mrb[0].mxu0 %v735
          %v881 = vpop.f32.mrb[0].mxu0
          %v882 = vadd.f32 %v588, %v881
          %v883 = vpop.f32.mrb[0].mxu0
          %v884 = vpop.f32.mrb[0].mxu0
          %v885 = vadd.f32 %v588, %v884
          %v886 = vpop.f32.mrb[0].mxu0
          %887 = vmatprep.mubr.bf16.mxu0 0
          %888 = vmatmul.mubr.bf16.gmra.mrb[0].mxu0 %v738
          %v889 = vpop.f32.mrb[0].mxu0
          %v890 = vadd.f32 %v588, %v889
          %v891 = vpop.f32.mrb[0].mxu0
          %v892 = vpop.f32.mrb[0].mxu0
          %v893 = vadd.f32 %v588, %v892
          %v894 = vpop.f32.mrb[0].mxu0
          %895 = vmatprep.mubr.bf16.mxu0 0
          %896 = vmatmul.mubr.bf16.gmra.mrb[0].mxu0 %v741
          %v897 = vpop.f32.mrb[0].mxu0
          %v898 = vadd.f32 %v588, %v897
          %v899 = vpop.f32.mrb[0].mxu0
          %v900 = vpop.f32.mrb[0].mxu0
          %v901 = vadd.f32 %v588, %v900
          %v902 = vpop.f32.mrb[0].mxu0
          %903 = vdwg.mxu0
          %v904 = vmax.f32 %v778, 0.0
          %v905 = vmax.f32 %v781, 0.0
          %v906 = vmax.f32 %v786, 0.0
          %v907 = vmax.f32 %v789, 0.0
          %v908 = vmax.f32 %v794, 0.0
          %v909 = vmax.f32 %v797, 0.0
          %v910 = vmax.f32 %v802, 0.0
          %v911 = vmax.f32 %v805, 0.0
          %v912 = vmax.f32 %v810, 0.0
          %v913 = vmax.f32 %v813, 0.0
          %v914 = vmax.f32 %v818, 0.0
          %v915 = vmax.f32 %v821, 0.0
          %v916 = vmax.f32 %v826, 0.0
          %v917 = vmax.f32 %v829, 0.0
          %v918 = vmax.f32 %v834, 0.0
          %v919 = vmax.f32 %v837, 0.0
          %v920 = vmax.f32 %v842, 0.0
          %v921 = vmax.f32 %v845, 0.0
          %v922 = vmax.f32 %v850, 0.0
          %v923 = vmax.f32 %v853, 0.0
          %v924 = vmax.f32 %v858, 0.0
          %v925 = vmax.f32 %v861, 0.0
          %v926 = vmax.f32 %v866, 0.0
          %v927 = vmax.f32 %v869, 0.0
          %v928 = vmax.f32 %v874, 0.0
          %v929 = vmax.f32 %v877, 0.0
          %v930 = vmax.f32 %v882, 0.0
          %v931 = vmax.f32 %v885, 0.0
          %v932 = vmax.f32 %v890, 0.0
          %v933 = vmax.f32 %v893, 0.0
          %v934 = vmax.f32 %v898, 0.0
          %v935 = vmax.f32 %v901, 0.0
          %v936 = vpack.c.bf16 %v905, %v904
          %v937 = vpack.c.bf16 %v907, %v906
          %v938 = vpack.c.bf16 %v909, %v908
          %v939 = vpack.c.bf16 %v911, %v910
          %v940 = vpack.c.bf16 %v913, %v912
          %v941 = vpack.c.bf16 %v915, %v914
          %v942 = vpack.c.bf16 %v917, %v916
          %v943 = vpack.c.bf16 %v919, %v918
          %v944 = vpack.c.bf16 %v921, %v920
          %v945 = vpack.c.bf16 %v923, %v922
          %v946 = vpack.c.bf16 %v925, %v924
          %v947 = vpack.c.bf16 %v927, %v926
          %v948 = vpack.c.bf16 %v929, %v928
          %v949 = vpack.c.bf16 %v931, %v930
          %v950 = vpack.c.bf16 %v933, %v932
          %v951 = vpack.c.bf16 %v935, %v934
          %v952 = vld [vmem:[%s4] sm:$0xf]
          %v953 = vld [vmem:[%s4 + $0x4] sm:$0xf]
          %v954 = vld [vmem:[%s4 + $0x8] sm:$0xf]
          %v955 = vld [vmem:[%s4 + $0xc] sm:$0xf]
          %v956 = vld [vmem:[%s4 + $0x10] sm:$0xf]
          %v957 = vld [vmem:[%s4 + $0x14] sm:$0xf]
          %v958 = vld [vmem:[%s4 + $0x18] sm:$0xf]
          %v959 = vld [vmem:[%s4 + $0x1c] sm:$0xf]
          %v960 = vld [vmem:[%s4 + $0x20] sm:$0xf]
          %v961 = vld [vmem:[%s4 + $0x24] sm:$0xf]
          %v962 = vld [vmem:[%s4 + $0x28] sm:$0xf]
          %v963 = vld [vmem:[%s4 + $0x2c] sm:$0xf]
          %v964 = vld [vmem:[%s4 + $0x30] sm:$0xf]
          %v965 = vld [vmem:[%s4 + $0x34] sm:$0xf]
          %v966 = vld [vmem:[%s4 + $0x38] sm:$0xf]
          %v967 = vld [vmem:[%s4 + $0x3c] sm:$0xf]
          %v968 = vld [vmem:[%s5] sm:$0x1]
          %v970 = vlaneseq
          %v971 = vshrl.u32 %v970, 7
          %v972 = vsub.s32 0, %v971
          %v973 = vrot.slane %v968, %v972
          %v991 = vunpack.c.l.b16 %v952
          %v992 = vunpack.c.l.b16 %v953
          %v993 = vunpack.c.l.b16 %v954
          %v994 = vunpack.c.l.b16 %v955
          %v995 = vunpack.c.l.b16 %v956
          %v996 = vunpack.c.l.b16 %v957
          %v997 = vunpack.c.l.b16 %v958
          %v998 = vunpack.c.l.b16 %v959
          %v999 = vunpack.c.l.b16 %v960
          %v1000 = vunpack.c.l.b16 %v961
          %v1001 = vunpack.c.l.b16 %v962
          %v1002 = vunpack.c.l.b16 %v963
          %v1003 = vunpack.c.l.b16 %v964
          %v1004 = vunpack.c.l.b16 %v965
          %v1005 = vunpack.c.l.b16 %v966
          %v1006 = vunpack.c.l.b16 %v967
          %v1007 = vpack.c.b16 %v992, %v991
          %v1008 = vpack.c.b16 %v994, %v993
          %v1009 = vpack.c.b16 %v996, %v995
          %v1010 = vpack.c.b16 %v998, %v997
          %v1011 = vpack.c.b16 %v1000, %v999
          %v1012 = vpack.c.b16 %v1002, %v1001
          %v1013 = vpack.c.b16 %v1004, %v1003
          %v1014 = vpack.c.b16 %v1006, %v1005
          %1023 = vmatprep.subr.bf16.mxu0 0
          %1024 = vmatpush1.bf16.msra.mxu0 %v1007
          %1025 = vmatprep.subr.bf16.mxu0 0
          %1026 = vmatpush1.bf16.msra.mxu0 %v1008
          %1027 = vmatprep.subr.bf16.mxu0 0
          %1028 = vmatpush1.bf16.msra.mxu0 %v1009
          %1029 = vmatprep.subr.bf16.mxu0 0
          %1030 = vmatpush1.bf16.msra.mxu0 %v1010
          %1031 = vmatprep.subr.bf16.mxu0 0
          %1032 = vmatpush1.bf16.msra.mxu0 %v1011
          %1033 = vmatprep.subr.bf16.mxu0 0
          %1034 = vmatpush1.bf16.msra.mxu0 %v1012
          %1035 = vmatprep.subr.bf16.mxu0 0
          %1036 = vmatpush1.bf16.msra.mxu0 %v1013
          %1037 = vmatprep.subr.bf16.mxu0 0
          %1038 = vmatpush1.bf16.msra.mxu0 %v1014
          %1039 = vmatprep.subr.bf16.mxu0 0
          %1040 = vmatpush1.bf16.msra.mxu0 0
          %1041 = vmatprep.subr.bf16.mxu0 0
          %1042 = vmatpush1.bf16.msra.mxu0 0
          %1043 = vmatprep.subr.bf16.mxu0 0
          %1044 = vmatpush1.bf16.msra.mxu0 0
          %1045 = vmatprep.subr.bf16.mxu0 0
          %1046 = vmatpush1.bf16.msra.mxu0 0
          %1047 = vmatprep.subr.bf16.mxu0 0
          %1048 = vmatpush1.bf16.msra.mxu0 0
          %1049 = vmatprep.subr.bf16.mxu0 0
          %1050 = vmatpush1.bf16.msra.mxu0 0
          %1051 = vmatprep.subr.bf16.mxu0 0
          %1052 = vmatpush1.bf16.msra.mxu0 0
          %1053 = vmatprep.subr.bf16.mxu0 0
          %1054 = vmatpush1.bf16.msra.mxu0 0
          %1055 = vmatprep.mubr.bf16.mxu0 0
          %1056 = vmatmul.mubr.bf16.gmra.mrb[0].mxu0 %v936
          %v1057 = vpop.f32.mrb[0].mxu0
          %v1058 = vadd.f32 %v973, %v1057
          %v1059 = vpop.f32.mrb[0].mxu0
          %v1060 = vpop.f32.mrb[0].mxu0
          %v1061 = vadd.f32 %v973, %v1060
          %v1062 = vpop.f32.mrb[0].mxu0
          %1063 = vmatprep.mubr.bf16.mxu0 0
          %1064 = vmatmul.mubr.bf16.gmra.mrb[0].mxu0 %v937
          %v1065 = vpop.f32.mrb[0].mxu0
          %v1066 = vadd.f32 %v973, %v1065
          %v1067 = vpop.f32.mrb[0].mxu0
          %v1068 = vpop.f32.mrb[0].mxu0
          %v1069 = vadd.f32 %v973, %v1068
          %v1070 = vpop.f32.mrb[0].mxu0
          %1071 = vmatprep.mubr.bf16.mxu0 0
          %1072 = vmatmul.mubr.bf16.gmra.mrb[0].mxu0 %v938
          %v1073 = vpop.f32.mrb[0].mxu0
          %v1074 = vadd.f32 %v973, %v1073
          %v1075 = vpop.f32.mrb[0].mxu0
          %v1076 = vpop.f32.mrb[0].mxu0
          %v1077 = vadd.f32 %v973, %v1076
          %v1078 = vpop.f32.mrb[0].mxu0
          %1079 = vmatprep.mubr.bf16.mxu0 0
          %1080 = vmatmul.mubr.bf16.gmra.mrb[0].mxu0 %v939
          %v1081 = vpop.f32.mrb[0].mxu0
          %v1082 = vadd.f32 %v973, %v1081
          %v1083 = vpop.f32.mrb[0].mxu0
          %v1084 = vpop.f32.mrb[0].mxu0
          %v1085 = vadd.f32 %v973, %v1084
          %v1086 = vpop.f32.mrb[0].mxu0
          %1087 = vmatprep.mubr.bf16.mxu0 0
          %1088 = vmatmul.mubr.bf16.gmra.mrb[0].mxu0 %v940
          %v1089 = vpop.f32.mrb[0].mxu0
          %v1090 = vadd.f32 %v973, %v1089
          %v1091 = vpop.f32.mrb[0].mxu0
          %v1092 = vpop.f32.mrb[0].mxu0
          %v1093 = vadd.f32 %v973, %v1092
          %v1094 = vpop.f32.mrb[0].mxu0
          %1095 = vmatprep.mubr.bf16.mxu0 0
          %1096 = vmatmul.mubr.bf16.gmra.mrb[0].mxu0 %v941
          %v1097 = vpop.f32.mrb[0].mxu0
          %v1098 = vadd.f32 %v973, %v1097
          %v1099 = vpop.f32.mrb[0].mxu0
          %v1100 = vpop.f32.mrb[0].mxu0
          %v1101 = vadd.f32 %v973, %v1100
          %v1102 = vpop.f32.mrb[0].mxu0
          %1103 = vmatprep.mubr.bf16.mxu0 0
          %1104 = vmatmul.mubr.bf16.gmra.mrb[0].mxu0 %v942
          %v1105 = vpop.f32.mrb[0].mxu0
          %v1106 = vadd.f32 %v973, %v1105
          %v1107 = vpop.f32.mrb[0].mxu0
          %v1108 = vpop.f32.mrb[0].mxu0
          %v1109 = vadd.f32 %v973, %v1108
          %v1110 = vpop.f32.mrb[0].mxu0
          %1111 = vmatprep.mubr.bf16.mxu0 0
          %1112 = vmatmul.mubr.bf16.gmra.mrb[0].mxu0 %v943
          %v1113 = vpop.f32.mrb[0].mxu0
          %v1114 = vadd.f32 %v973, %v1113
          %v1115 = vpop.f32.mrb[0].mxu0
          %v1116 = vpop.f32.mrb[0].mxu0
          %v1117 = vadd.f32 %v973, %v1116
          %v1118 = vpop.f32.mrb[0].mxu0
          %1119 = vmatprep.mubr.bf16.mxu0 0
          %1120 = vmatmul.mubr.bf16.gmra.mrb[0].mxu0 %v944
          %v1121 = vpop.f32.mrb[0].mxu0
          %v1122 = vadd.f32 %v973, %v1121
          %v1123 = vpop.f32.mrb[0].mxu0
          %v1124 = vpop.f32.mrb[0].mxu0
          %v1125 = vadd.f32 %v973, %v1124
          %v1126 = vpop.f32.mrb[0].mxu0
          %1127 = vmatprep.mubr.bf16.mxu0 0
          %1128 = vmatmul.mubr.bf16.gmra.mrb[0].mxu0 %v945
          %v1129 = vpop.f32.mrb[0].mxu0
          %v1130 = vadd.f32 %v973, %v1129
          %v1131 = vpop.f32.mrb[0].mxu0
          %v1132 = vpop.f32.mrb[0].mxu0
          %v1133 = vadd.f32 %v973, %v1132
          %v1134 = vpop.f32.mrb[0].mxu0
          %1135 = vmatprep.mubr.bf16.mxu0 0
          %1136 = vmatmul.mubr.bf16.gmra.mrb[0].mxu0 %v946
          %v1137 = vpop.f32.mrb[0].mxu0
          %v1138 = vadd.f32 %v973, %v1137
          %v1139 = vpop.f32.mrb[0].mxu0
          %v1140 = vpop.f32.mrb[0].mxu0
          %v1141 = vadd.f32 %v973, %v1140
          %v1142 = vpop.f32.mrb[0].mxu0
          %1143 = vmatprep.mubr.bf16.mxu0 0
          %1144 = vmatmul.mubr.bf16.gmra.mrb[0].mxu0 %v947
          %v1145 = vpop.f32.mrb[0].mxu0
          %v1146 = vadd.f32 %v973, %v1145
          %v1147 = vpop.f32.mrb[0].mxu0
          %v1148 = vpop.f32.mrb[0].mxu0
          %v1149 = vadd.f32 %v973, %v1148
          %v1150 = vpop.f32.mrb[0].mxu0
          %1151 = vmatprep.mubr.bf16.mxu0 0
          %1152 = vmatmul.mubr.bf16.gmra.mrb[0].mxu0 %v948
          %v1153 = vpop.f32.mrb[0].mxu0
          %v1154 = vadd.f32 %v973, %v1153
          %v1155 = vpop.f32.mrb[0].mxu0
          %v1156 = vpop.f32.mrb[0].mxu0
          %v1157 = vadd.f32 %v973, %v1156
          %v1158 = vpop.f32.mrb[0].mxu0
          %1159 = vmatprep.mubr.bf16.mxu0 0
          %1160 = vmatmul.mubr.bf16.gmra.mrb[0].mxu0 %v949
          %v1161 = vpop.f32.mrb[0].mxu0
          %v1162 = vadd.f32 %v973, %v1161
          %v1163 = vpop.f32.mrb[0].mxu0
          %v1164 = vpop.f32.mrb[0].mxu0
          %v1165 = vadd.f32 %v973, %v1164
          %v1166 = vpop.f32.mrb[0].mxu0
          %1167 = vmatprep.mubr.bf16.mxu0 0
          %1168 = vmatmul.mubr.bf16.gmra.mrb[0].mxu0 %v950
          %v1169 = vpop.f32.mrb[0].mxu0
          %v1170 = vadd.f32 %v973, %v1169
          %v1171 = vpop.f32.mrb[0].mxu0
          %v1172 = vpop.f32.mrb[0].mxu0
          %v1173 = vadd.f32 %v973, %v1172
          %v1174 = vpop.f32.mrb[0].mxu0
          %1175 = vmatprep.mubr.bf16.mxu0 0
          %1176 = vmatmul.mubr.bf16.gmra.mrb[0].mxu0 %v951
          %v1177 = vpop.f32.mrb[0].mxu0
          %v1178 = vadd.f32 %v973, %v1177
          %v1179 = vpop.f32.mrb[0].mxu0
          %v1180 = vpop.f32.mrb[0].mxu0
          %v1181 = vadd.f32 %v973, %v1180
          %v1182 = vpop.f32.mrb[0].mxu0
          %1183 = vdwg.mxu0
          %v1184 = vmax.f32 %v1058, 0.0
          %v1185 = vmax.f32 %v1061, 0.0
          %v1186 = vmax.f32 %v1066, 0.0
          %v1187 = vmax.f32 %v1069, 0.0
          %v1188 = vmax.f32 %v1074, 0.0
          %v1189 = vmax.f32 %v1077, 0.0
          %v1190 = vmax.f32 %v1082, 0.0
          %v1191 = vmax.f32 %v1085, 0.0
          %v1192 = vmax.f32 %v1090, 0.0
          %v1193 = vmax.f32 %v1093, 0.0
          %v1194 = vmax.f32 %v1098, 0.0
          %v1195 = vmax.f32 %v1101, 0.0
          %v1196 = vmax.f32 %v1106, 0.0
          %v1197 = vmax.f32 %v1109, 0.0
          %v1198 = vmax.f32 %v1114, 0.0
          %v1199 = vmax.f32 %v1117, 0.0
          %v1200 = vmax.f32 %v1122, 0.0
          %v1201 = vmax.f32 %v1125, 0.0
          %v1202 = vmax.f32 %v1130, 0.0
          %v1203 = vmax.f32 %v1133, 0.0
          %v1204 = vmax.f32 %v1138, 0.0
          %v1205 = vmax.f32 %v1141, 0.0
          %v1206 = vmax.f32 %v1146, 0.0
          %v1207 = vmax.f32 %v1149, 0.0
          %v1208 = vmax.f32 %v1154, 0.0
          %v1209 = vmax.f32 %v1157, 0.0
          %v1210 = vmax.f32 %v1162, 0.0
          %v1211 = vmax.f32 %v1165, 0.0
          %v1212 = vmax.f32 %v1170, 0.0
          %v1213 = vmax.f32 %v1173, 0.0
          %v1214 = vmax.f32 %v1178, 0.0
          %v1215 = vmax.f32 %v1181, 0.0
          %v1216 = vpack.c.bf16 %v1185, %v1184
          %v1217 = vpack.c.bf16 %v1187, %v1186
          %v1218 = vpack.c.bf16 %v1189, %v1188
          %v1219 = vpack.c.bf16 %v1191, %v1190
          %v1220 = vpack.c.bf16 %v1193, %v1192
          %v1221 = vpack.c.bf16 %v1195, %v1194
          %v1222 = vpack.c.bf16 %v1197, %v1196
          %v1223 = vpack.c.bf16 %v1199, %v1198
          %v1224 = vpack.c.bf16 %v1201, %v1200
          %v1225 = vpack.c.bf16 %v1203, %v1202
          %v1226 = vpack.c.bf16 %v1205, %v1204
          %v1227 = vpack.c.bf16 %v1207, %v1206
          %v1228 = vpack.c.bf16 %v1209, %v1208
          %v1229 = vpack.c.bf16 %v1211, %v1210
          %v1230 = vpack.c.bf16 %v1213, %v1212
          %v1231 = vpack.c.bf16 %v1215, %v1214
          %v1232 = vld [vmem:[%s6] sm:$0xf]
          %v1233 = vld [vmem:[%s6 + $0x4] sm:$0xf]
          %v1234 = vld [vmem:[%s6 + $0x8] sm:$0xf]
          %v1235 = vld [vmem:[%s6 + $0xc] sm:$0xf]
          %v1236 = vld [vmem:[%s6 + $0x10] sm:$0xf]
          %v1237 = vld [vmem:[%s6 + $0x14] sm:$0xf]
          %v1238 = vld [vmem:[%s6 + $0x18] sm:$0xf]
          %v1239 = vld [vmem:[%s6 + $0x1c] sm:$0xf]
          %v1240 = vld [vmem:[%s6 + $0x20] sm:$0xf]
          %v1241 = vld [vmem:[%s6 + $0x24] sm:$0xf]
          %v1242 = vld [vmem:[%s6 + $0x28] sm:$0xf]
          %v1243 = vld [vmem:[%s6 + $0x2c] sm:$0xf]
          %v1244 = vld [vmem:[%s6 + $0x30] sm:$0xf]
          %v1245 = vld [vmem:[%s6 + $0x34] sm:$0xf]
          %v1246 = vld [vmem:[%s6 + $0x38] sm:$0xf]
          %v1247 = vld [vmem:[%s6 + $0x3c] sm:$0xf]
          %v1248 = vld [vmem:[%s7] sm:$0x1]
          %v1250 = vlaneseq
          %v1251 = vshrl.u32 %v1250, 7
          %v1252 = vsub.s32 0, %v1251
          %v1253 = vrot.slane %v1248, %v1252
          %v1271 = vunpack.c.l.b16 %v1232
          %v1272 = vunpack.c.l.b16 %v1233
          %v1273 = vunpack.c.l.b16 %v1234
          %v1274 = vunpack.c.l.b16 %v1235
          %v1275 = vunpack.c.l.b16 %v1236
          %v1276 = vunpack.c.l.b16 %v1237
          %v1277 = vunpack.c.l.b16 %v1238
          %v1278 = vunpack.c.l.b16 %v1239
          %v1279 = vunpack.c.l.b16 %v1240
          %v1280 = vunpack.c.l.b16 %v1241
          %v1281 = vunpack.c.l.b16 %v1242
          %v1282 = vunpack.c.l.b16 %v1243
          %v1283 = vunpack.c.l.b16 %v1244
          %v1284 = vunpack.c.l.b16 %v1245
          %v1285 = vunpack.c.l.b16 %v1246
          %v1286 = vunpack.c.l.b16 %v1247
          %v1287 = vpack.c.b16 %v1272, %v1271
          %v1288 = vpack.c.b16 %v1274, %v1273
          %v1289 = vpack.c.b16 %v1276, %v1275
          %v1290 = vpack.c.b16 %v1278, %v1277
          %v1291 = vpack.c.b16 %v1280, %v1279
          %v1292 = vpack.c.b16 %v1282, %v1281
          %v1293 = vpack.c.b16 %v1284, %v1283
          %v1294 = vpack.c.b16 %v1286, %v1285
          %1303 = vmatprep.subr.bf16.mxu0 0
          %1304 = vmatpush1.bf16.msra.mxu0 %v1287
          %1305 = vmatprep.subr.bf16.mxu0 0
          %1306 = vmatpush1.bf16.msra.mxu0 %v1288
          %1307 = vmatprep.subr.bf16.mxu0 0
          %1308 = vmatpush1.bf16.msra.mxu0 %v1289
          %1309 = vmatprep.subr.bf16.mxu0 0
          %1310 = vmatpush1.bf16.msra.mxu0 %v1290
          %1311 = vmatprep.subr.bf16.mxu0 0
          %1312 = vmatpush1.bf16.msra.mxu0 %v1291
          %1313 = vmatprep.subr.bf16.mxu0 0
          %1314 = vmatpush1.bf16.msra.mxu0 %v1292
          %1315 = vmatprep.subr.bf16.mxu0 0
          %1316 = vmatpush1.bf16.msra.mxu0 %v1293
          %1317 = vmatprep.subr.bf16.mxu0 0
          %1318 = vmatpush1.bf16.msra.mxu0 %v1294
          %1319 = vmatprep.subr.bf16.mxu0 0
          %1320 = vmatpush1.bf16.msra.mxu0 0
          %1321 = vmatprep.subr.bf16.mxu0 0
          %1322 = vmatpush1.bf16.msra.mxu0 0
          %1323 = vmatprep.subr.bf16.mxu0 0
          %1324 = vmatpush1.bf16.msra.mxu0 0
          %1325 = vmatprep.subr.bf16.mxu0 0
          %1326 = vmatpush1.bf16.msra.mxu0 0
          %1327 = vmatprep.subr.bf16.mxu0 0
          %1328 = vmatpush1.bf16.msra.mxu0 0
          %1329 = vmatprep.subr.bf16.mxu0 0
          %1330 = vmatpush1.bf16.msra.mxu0 0
          %1331 = vmatprep.subr.bf16.mxu0 0
          %1332 = vmatpush1.bf16.msra.mxu0 0
          %1333 = vmatprep.subr.bf16.mxu0 0
          %1334 = vmatpush1.bf16.msra.mxu0 0
          %1335 = vmatprep.mubr.bf16.mxu0 0
          %1336 = vmatmul.mubr.bf16.gmra.mrb[0].mxu0 %v1216
          %v1337 = vpop.f32.mrb[0].mxu0
          %v1338 = vadd.f32 %v1253, %v1337
          %v1339 = vpop.f32.mrb[0].mxu0
          %v1340 = vpop.f32.mrb[0].mxu0
          %v1341 = vadd.f32 %v1253, %v1340
          %v1342 = vpop.f32.mrb[0].mxu0
          %1343 = vmatprep.mubr.bf16.mxu0 0
          %1344 = vmatmul.mubr.bf16.gmra.mrb[0].mxu0 %v1217
          %v1345 = vpop.f32.mrb[0].mxu0
          %v1346 = vadd.f32 %v1253, %v1345
          %v1347 = vpop.f32.mrb[0].mxu0
          %v1348 = vpop.f32.mrb[0].mxu0
          %v1349 = vadd.f32 %v1253, %v1348
          %v1350 = vpop.f32.mrb[0].mxu0
          %1351 = vmatprep.mubr.bf16.mxu0 0
          %1352 = vmatmul.mubr.bf16.gmra.mrb[0].mxu0 %v1218
          %v1353 = vpop.f32.mrb[0].mxu0
          %v1354 = vadd.f32 %v1253, %v1353
          %v1355 = vpop.f32.mrb[0].mxu0
          %v1356 = vpop.f32.mrb[0].mxu0
          %v1357 = vadd.f32 %v1253, %v1356
          %v1358 = vpop.f32.mrb[0].mxu0
          %1359 = vmatprep.mubr.bf16.mxu0 0
          %1360 = vmatmul.mubr.bf16.gmra.mrb[0].mxu0 %v1219
          %v1361 = vpop.f32.mrb[0].mxu0
          %v1362 = vadd.f32 %v1253, %v1361
          %v1363 = vpop.f32.mrb[0].mxu0
          %v1364 = vpop.f32.mrb[0].mxu0
          %v1365 = vadd.f32 %v1253, %v1364
          %v1366 = vpop.f32.mrb[0].mxu0
          %1367 = vmatprep.mubr.bf16.mxu0 0
          %1368 = vmatmul.mubr.bf16.gmra.mrb[0].mxu0 %v1220
          %v1369 = vpop.f32.mrb[0].mxu0
          %v1370 = vadd.f32 %v1253, %v1369
          %v1371 = vpop.f32.mrb[0].mxu0
          %v1372 = vpop.f32.mrb[0].mxu0
          %v1373 = vadd.f32 %v1253, %v1372
          %v1374 = vpop.f32.mrb[0].mxu0
          %1375 = vmatprep.mubr.bf16.mxu0 0
          %1376 = vmatmul.mubr.bf16.gmra.mrb[0].mxu0 %v1221
          %v1377 = vpop.f32.mrb[0].mxu0
          %v1378 = vadd.f32 %v1253, %v1377
          %v1379 = vpop.f32.mrb[0].mxu0
          %v1380 = vpop.f32.mrb[0].mxu0
          %v1381 = vadd.f32 %v1253, %v1380
          %v1382 = vpop.f32.mrb[0].mxu0
          %1383 = vmatprep.mubr.bf16.mxu0 0
          %1384 = vmatmul.mubr.bf16.gmra.mrb[0].mxu0 %v1222
          %v1385 = vpop.f32.mrb[0].mxu0
          %v1386 = vadd.f32 %v1253, %v1385
          %v1387 = vpop.f32.mrb[0].mxu0
          %v1388 = vpop.f32.mrb[0].mxu0
          %v1389 = vadd.f32 %v1253, %v1388
          %v1390 = vpop.f32.mrb[0].mxu0
          %1391 = vmatprep.mubr.bf16.mxu0 0
          %1392 = vmatmul.mubr.bf16.gmra.mrb[0].mxu0 %v1223
          %v1393 = vpop.f32.mrb[0].mxu0
          %v1394 = vadd.f32 %v1253, %v1393
          %v1395 = vpop.f32.mrb[0].mxu0
          %v1396 = vpop.f32.mrb[0].mxu0
          %v1397 = vadd.f32 %v1253, %v1396
          %v1398 = vpop.f32.mrb[0].mxu0
          %1399 = vmatprep.mubr.bf16.mxu0 0
          %1400 = vmatmul.mubr.bf16.gmra.mrb[0].mxu0 %v1224
          %v1401 = vpop.f32.mrb[0].mxu0
          %v1402 = vadd.f32 %v1253, %v1401
          %v1403 = vpop.f32.mrb[0].mxu0
          %v1404 = vpop.f32.mrb[0].mxu0
          %v1405 = vadd.f32 %v1253, %v1404
          %v1406 = vpop.f32.mrb[0].mxu0
          %1407 = vmatprep.mubr.bf16.mxu0 0
          %1408 = vmatmul.mubr.bf16.gmra.mrb[0].mxu0 %v1225
          %v1409 = vpop.f32.mrb[0].mxu0
          %v1410 = vadd.f32 %v1253, %v1409
          %v1411 = vpop.f32.mrb[0].mxu0
          %v1412 = vpop.f32.mrb[0].mxu0
          %v1413 = vadd.f32 %v1253, %v1412
          %v1414 = vpop.f32.mrb[0].mxu0
          %1415 = vmatprep.mubr.bf16.mxu0 0
          %1416 = vmatmul.mubr.bf16.gmra.mrb[0].mxu0 %v1226
          %v1417 = vpop.f32.mrb[0].mxu0
          %v1418 = vadd.f32 %v1253, %v1417
          %v1419 = vpop.f32.mrb[0].mxu0
          %v1420 = vpop.f32.mrb[0].mxu0
          %v1421 = vadd.f32 %v1253, %v1420
          %v1422 = vpop.f32.mrb[0].mxu0
          %1423 = vmatprep.mubr.bf16.mxu0 0
          %1424 = vmatmul.mubr.bf16.gmra.mrb[0].mxu0 %v1227
          %v1425 = vpop.f32.mrb[0].mxu0
          %v1426 = vadd.f32 %v1253, %v1425
          %v1427 = vpop.f32.mrb[0].mxu0
          %v1428 = vpop.f32.mrb[0].mxu0
          %v1429 = vadd.f32 %v1253, %v1428
          %v1430 = vpop.f32.mrb[0].mxu0
          %1431 = vmatprep.mubr.bf16.mxu0 0
          %1432 = vmatmul.mubr.bf16.gmra.mrb[0].mxu0 %v1228
          %v1433 = vpop.f32.mrb[0].mxu0
          %v1434 = vadd.f32 %v1253, %v1433
          %v1435 = vpop.f32.mrb[0].mxu0
          %v1436 = vpop.f32.mrb[0].mxu0
          %v1437 = vadd.f32 %v1253, %v1436
          %v1438 = vpop.f32.mrb[0].mxu0
          %1439 = vmatprep.mubr.bf16.mxu0 0
          %1440 = vmatmul.mubr.bf16.gmra.mrb[0].mxu0 %v1229
          %v1441 = vpop.f32.mrb[0].mxu0
          %v1442 = vadd.f32 %v1253, %v1441
          %v1443 = vpop.f32.mrb[0].mxu0
          %v1444 = vpop.f32.mrb[0].mxu0
          %v1445 = vadd.f32 %v1253, %v1444
          %v1446 = vpop.f32.mrb[0].mxu0
          %1447 = vmatprep.mubr.bf16.mxu0 0
          %1448 = vmatmul.mubr.bf16.gmra.mrb[0].mxu0 %v1230
          %v1449 = vpop.f32.mrb[0].mxu0
          %v1450 = vadd.f32 %v1253, %v1449
          %v1451 = vpop.f32.mrb[0].mxu0
          %v1452 = vpop.f32.mrb[0].mxu0
          %v1453 = vadd.f32 %v1253, %v1452
          %v1454 = vpop.f32.mrb[0].mxu0
          %1455 = vmatprep.mubr.bf16.mxu0 0
          %1456 = vmatmul.mubr.bf16.gmra.mrb[0].mxu0 %v1231
          %v1457 = vpop.f32.mrb[0].mxu0
          %v1458 = vadd.f32 %v1253, %v1457
          %v1459 = vpop.f32.mrb[0].mxu0
          %v1460 = vpop.f32.mrb[0].mxu0
          %v1461 = vadd.f32 %v1253, %v1460
          %v1462 = vpop.f32.mrb[0].mxu0
          %1463 = vdwg.mxu0
          %s1464 = sld [smem:[#allocation4]]
          %s1465 = sld [smem:[#allocation4 + $0x1]]
          %p1466 = scmp.lt.s32.totalorder %s1464, %s465
          %p1467 = scmp.gt.s32.totalorder %s1465, %s464
          %p1468 = pnand %p1466, %p1467
          %p1469 = pneg %p1468
          // Predicated region
          $region89: #{tpu_custom_call.1} parent=87 // pred_check
            _
          $region90: #{tpu_custom_call.1} parent=87 // pred_check_branch
            %1471 = sbr.rel (%p1468) target = $region92
          $region91: #{tpu_custom_call.1} parent=87 // pred_region
            %v1472 = vstv %s1464
            %vm1473 = vcmp.ge.s32.totalorder %v500, %v1472
            %vm1474 = vcmp.ge.s32.totalorder %v501, %v1472
            %vm1475 = vcmp.ge.s32.totalorder %v502, %v1472
            %vm1476 = vcmp.ge.s32.totalorder %v503, %v1472
            %vm1477 = vcmp.ge.s32.totalorder %v504, %v1472
            %vm1478 = vcmp.ge.s32.totalorder %v505, %v1472
            %vm1479 = vcmp.ge.s32.totalorder %v506, %v1472
            %vm1480 = vcmp.ge.s32.totalorder %v507, %v1472
            %vm1481 = vcmp.ge.s32.totalorder %v508, %v1472
            %vm1482 = vcmp.ge.s32.totalorder %v509, %v1472
            %vm1483 = vcmp.ge.s32.totalorder %v510, %v1472
            %vm1484 = vcmp.ge.s32.totalorder %v511, %v1472
            %vm1485 = vcmp.ge.s32.totalorder %v512, %v1472
            %vm1486 = vcmp.ge.s32.totalorder %v513, %v1472
            %vm1487 = vcmp.ge.s32.totalorder %v514, %v1472
            %vm1488 = vcmp.ge.s32.totalorder %v515, %v1472
            %vm1489 = vcmp.ge.s32.totalorder %v516, %v1472
            %vm1490 = vcmp.ge.s32.totalorder %v517, %v1472
            %vm1491 = vcmp.ge.s32.totalorder %v518, %v1472
            %vm1492 = vcmp.ge.s32.totalorder %v519, %v1472
            %vm1493 = vcmp.ge.s32.totalorder %v520, %v1472
            %vm1494 = vcmp.ge.s32.totalorder %v521, %v1472
            %vm1495 = vcmp.ge.s32.totalorder %v522, %v1472
            %vm1496 = vcmp.ge.s32.totalorder %v523, %v1472
            %vm1497 = vcmp.ge.s32.totalorder %v524, %v1472
            %vm1498 = vcmp.ge.s32.totalorder %v525, %v1472
            %vm1499 = vcmp.ge.s32.totalorder %v526, %v1472
            %vm1500 = vcmp.ge.s32.totalorder %v527, %v1472
            %vm1501 = vcmp.ge.s32.totalorder %v528, %v1472
            %vm1502 = vcmp.ge.s32.totalorder %v529, %v1472
            %vm1503 = vcmp.ge.s32.totalorder %v530, %v1472
            %vm1504 = vcmp.ge.s32.totalorder %v531, %v1472
            %v1505 = vstv %s1465
            %vm1506 = vcmp.lt.s32.totalorder %v500, %v1505
            %vm1507 = vcmp.lt.s32.totalorder %v501, %v1505
            %vm1508 = vcmp.lt.s32.totalorder %v502, %v1505
            %vm1509 = vcmp.lt.s32.totalorder %v503, %v1505
            %vm1510 = vcmp.lt.s32.totalorder %v504, %v1505
            %vm1511 = vcmp.lt.s32.totalorder %v505, %v1505
            %vm1512 = vcmp.lt.s32.totalorder %v506, %v1505
            %vm1513 = vcmp.lt.s32.totalorder %v507, %v1505
            %vm1514 = vcmp.lt.s32.totalorder %v508, %v1505
            %vm1515 = vcmp.lt.s32.totalorder %v509, %v1505
            %vm1516 = vcmp.lt.s32.totalorder %v510, %v1505
            %vm1517 = vcmp.lt.s32.totalorder %v511, %v1505
            %vm1518 = vcmp.lt.s32.totalorder %v512, %v1505
            %vm1519 = vcmp.lt.s32.totalorder %v513, %v1505
            %vm1520 = vcmp.lt.s32.totalorder %v514, %v1505
            %vm1521 = vcmp.lt.s32.totalorder %v515, %v1505
            %vm1522 = vcmp.lt.s32.totalorder %v516, %v1505
            %vm1523 = vcmp.lt.s32.totalorder %v517, %v1505
            %vm1524 = vcmp.lt.s32.totalorder %v518, %v1505
            %vm1525 = vcmp.lt.s32.totalorder %v519, %v1505
            %vm1526 = vcmp.lt.s32.totalorder %v520, %v1505
            %vm1527 = vcmp.lt.s32.totalorder %v521, %v1505
            %vm1528 = vcmp.lt.s32.totalorder %v522, %v1505
            %vm1529 = vcmp.lt.s32.totalorder %v523, %v1505
            %vm1530 = vcmp.lt.s32.totalorder %v524, %v1505
            %vm1531 = vcmp.lt.s32.totalorder %v525, %v1505
            %vm1532 = vcmp.lt.s32.totalorder %v526, %v1505
            %vm1533 = vcmp.lt.s32.totalorder %v527, %v1505
            %vm1534 = vcmp.lt.s32.totalorder %v528, %v1505
            %vm1535 = vcmp.lt.s32.totalorder %v529, %v1505
            %vm1536 = vcmp.lt.s32.totalorder %v530, %v1505
            %vm1537 = vcmp.lt.s32.totalorder %v531, %v1505
            %vm1538 = vmand %vm1473, %vm1506
            %vm1539 = vmand %vm1474, %vm1507
            %vm1540 = vmand %vm1475, %vm1508
            %vm1541 = vmand %vm1476, %vm1509
            %vm1542 = vmand %vm1477, %vm1510
            %vm1543 = vmand %vm1478, %vm1511
            %vm1544 = vmand %vm1479, %vm1512
            %vm1545 = vmand %vm1480, %vm1513
            %vm1546 = vmand %vm1481, %vm1514
            %vm1547 = vmand %vm1482, %vm1515
            %vm1548 = vmand %vm1483, %vm1516
            %vm1549 = vmand %vm1484, %vm1517
            %vm1550 = vmand %vm1485, %vm1518
            %vm1551 = vmand %vm1486, %vm1519
            %vm1552 = vmand %vm1487, %vm1520
            %vm1553 = vmand %vm1488, %vm1521
            %vm1554 = vmand %vm1489, %vm1522
            %vm1555 = vmand %vm1490, %vm1523
            %vm1556 = vmand %vm1491, %vm1524
            %vm1557 = vmand %vm1492, %vm1525
            %vm1558 = vmand %vm1493, %vm1526
            %vm1559 = vmand %vm1494, %vm1527
            %vm1560 = vmand %vm1495, %vm1528
            %vm1561 = vmand %vm1496, %vm1529
            %vm1562 = vmand %vm1497, %vm1530
            %vm1563 = vmand %vm1498, %vm1531
            %vm1564 = vmand %vm1499, %vm1532
            %vm1565 = vmand %vm1500, %vm1533
            %vm1566 = vmand %vm1501, %vm1534
            %vm1567 = vmand %vm1502, %vm1535
            %vm1568 = vmand %vm1503, %vm1536
            %vm1569 = vmand %vm1504, %vm1537
            %v1570 = vsel %vm1538, 1, 0
            %v1571 = vsel %vm1539, 1, 0
            %v1572 = vsel %vm1540, 1, 0
            %v1573 = vsel %vm1541, 1, 0
            %v1574 = vsel %vm1542, 1, 0
            %v1575 = vsel %vm1543, 1, 0
            %v1576 = vsel %vm1544, 1, 0
            %v1577 = vsel %vm1545, 1, 0
            %v1578 = vsel %vm1546, 1, 0
            %v1579 = vsel %vm1547, 1, 0
            %v1580 = vsel %vm1548, 1, 0
            %v1581 = vsel %vm1549, 1, 0
            %v1582 = vsel %vm1550, 1, 0
            %v1583 = vsel %vm1551, 1, 0
            %v1584 = vsel %vm1552, 1, 0
            %v1585 = vsel %vm1553, 1, 0
            %v1586 = vsel %vm1554, 1, 0
            %v1587 = vsel %vm1555, 1, 0
            %v1588 = vsel %vm1556, 1, 0
            %v1589 = vsel %vm1557, 1, 0
            %v1590 = vsel %vm1558, 1, 0
            %v1591 = vsel %vm1559, 1, 0
            %v1592 = vsel %vm1560, 1, 0
            %v1593 = vsel %vm1561, 1, 0
            %v1594 = vsel %vm1562, 1, 0
            %v1595 = vsel %vm1563, 1, 0
            %v1596 = vsel %vm1564, 1, 0
            %v1597 = vsel %vm1565, 1, 0
            %v1598 = vsel %vm1566, 1, 0
            %v1599 = vsel %vm1567, 1, 0
            %v1600 = vsel %vm1568, 1, 0
            %v1601 = vsel %vm1569, 1, 0
            %vm1602 = vcmp.eq.s32.totalorder %v1570, 1
            %vm1603 = vcmp.eq.s32.totalorder %v1571, 1
            %vm1604 = vcmp.eq.s32.totalorder %v1572, 1
            %vm1605 = vcmp.eq.s32.totalorder %v1573, 1
            %vm1606 = vcmp.eq.s32.totalorder %v1574, 1
            %vm1607 = vcmp.eq.s32.totalorder %v1575, 1
            %vm1608 = vcmp.eq.s32.totalorder %v1576, 1
            %vm1609 = vcmp.eq.s32.totalorder %v1577, 1
            %vm1610 = vcmp.eq.s32.totalorder %v1578, 1
            %vm1611 = vcmp.eq.s32.totalorder %v1579, 1
            %vm1612 = vcmp.eq.s32.totalorder %v1580, 1
            %vm1613 = vcmp.eq.s32.totalorder %v1581, 1
            %vm1614 = vcmp.eq.s32.totalorder %v1582, 1
            %vm1615 = vcmp.eq.s32.totalorder %v1583, 1
            %vm1616 = vcmp.eq.s32.totalorder %v1584, 1
            %vm1617 = vcmp.eq.s32.totalorder %v1585, 1
            %vm1618 = vcmp.eq.s32.totalorder %v1586, 1
            %vm1619 = vcmp.eq.s32.totalorder %v1587, 1
            %vm1620 = vcmp.eq.s32.totalorder %v1588, 1
            %vm1621 = vcmp.eq.s32.totalorder %v1589, 1
            %vm1622 = vcmp.eq.s32.totalorder %v1590, 1
            %vm1623 = vcmp.eq.s32.totalorder %v1591, 1
            %vm1624 = vcmp.eq.s32.totalorder %v1592, 1
            %vm1625 = vcmp.eq.s32.totalorder %v1593, 1
            %vm1626 = vcmp.eq.s32.totalorder %v1594, 1
            %vm1627 = vcmp.eq.s32.totalorder %v1595, 1
            %vm1628 = vcmp.eq.s32.totalorder %v1596, 1
            %vm1629 = vcmp.eq.s32.totalorder %v1597, 1
            %vm1630 = vcmp.eq.s32.totalorder %v1598, 1
            %vm1631 = vcmp.eq.s32.totalorder %v1599, 1
            %vm1632 = vcmp.eq.s32.totalorder %v1600, 1
            %vm1633 = vcmp.eq.s32.totalorder %v1601, 1
            %v1634 = vsel %vm1602, %v1338, -inf
            %v1635 = vsel %vm1603, %v1341, -inf
            %v1636 = vsel %vm1604, %v1346, -inf
            %v1637 = vsel %vm1605, %v1349, -inf
            %v1638 = vsel %vm1606, %v1354, -inf
            %v1639 = vsel %vm1607, %v1357, -inf
            %v1640 = vsel %vm1608, %v1362, -inf
            %v1641 = vsel %vm1609, %v1365, -inf
            %v1642 = vsel %vm1610, %v1370, -inf
            %v1643 = vsel %vm1611, %v1373, -inf
            %v1644 = vsel %vm1612, %v1378, -inf
            %v1645 = vsel %vm1613, %v1381, -inf
            %v1646 = vsel %vm1614, %v1386, -inf
            %v1647 = vsel %vm1615, %v1389, -inf
            %v1648 = vsel %vm1616, %v1394, -inf
            %v1649 = vsel %vm1617, %v1397, -inf
            %v1650 = vsel %vm1618, %v1402, -inf
            %v1651 = vsel %vm1619, %v1405, -inf
            %v1652 = vsel %vm1620, %v1410, -inf
            %v1653 = vsel %vm1621, %v1413, -inf
            %v1654 = vsel %vm1622, %v1418, -inf
            %v1655 = vsel %vm1623, %v1421, -inf
            %v1656 = vsel %vm1624, %v1426, -inf
            %v1657 = vsel %vm1625, %v1429, -inf
            %v1658 = vsel %vm1626, %v1434, -inf
            %v1659 = vsel %vm1627, %v1437, -inf
            %v1660 = vsel %vm1628, %v1442, -inf
            %v1661 = vsel %vm1629, %v1445, -inf
            %v1662 = vsel %vm1630, %v1450, -inf
            %v1663 = vsel %vm1631, %v1453, -inf
            %v1664 = vsel %vm1632, %v1458, -inf
            %v1665 = vsel %vm1633, %v1461, -inf
            %v1666 = vmax.f32 %v1634, %v1638
            %v1667 = vmax.f32 %v1635, %v1639
            %v1668 = vmax.f32 %v1636, %v1640
            %v1669 = vmax.f32 %v1637, %v1641
            %v1670 = vmax.f32 %v1666, %v1642
            %v1671 = vmax.f32 %v1667, %v1643
            %v1672 = vmax.f32 %v1668, %v1644
            %v1673 = vmax.f32 %v1669, %v1645
            %v1674 = vmax.f32 %v1670, %v1646
            %v1675 = vmax.f32 %v1671, %v1647
            %v1676 = vmax.f32 %v1672, %v1648
            %v1677 = vmax.f32 %v1673, %v1649
            %v1678 = vmax.f32 %v1674, %v1650
            %v1679 = vmax.f32 %v1675, %v1651
            %v1680 = vmax.f32 %v1676, %v1652
            %v1681 = vmax.f32 %v1677, %v1653
            %v1682 = vmax.f32 %v1678, %v1654
            %v1683 = vmax.f32 %v1679, %v1655
            %v1684 = vmax.f32 %v1680, %v1656
            %v1685 = vmax.f32 %v1681, %v1657
            %v1686 = vmax.f32 %v1682, %v1658
            %v1687 = vmax.f32 %v1683, %v1659
            %v1688 = vmax.f32 %v1684, %v1660
            %v1689 = vmax.f32 %v1685, %v1661
            %v1690 = vmax.f32 %v1686, %v1662
            %v1691 = vmax.f32 %v1687, %v1663
            %v1692 = vmax.f32 %v1688, %v1664
            %v1693 = vmax.f32 %v1689, %v1665
            %v1694 = vmax.f32 %v1690, %v1691
            %v1695 = vmax.f32 %v1692, %v1693
            %v1696 = vmax.f32 %v1694, %v1695
            %v1697 = vrot.slane %v1696, 4
            %v1698 = vmax.f32 %v1696, %v1697
            %v1699 = vrot.slane %v1698, 2
            %v1700 = vmax.f32 %v1698, %v1699
            %v1701 = vrot.slane %v1700, 1
            %v1702 = vmax.f32 %v1700, %v1701
            %v1703 = vld [vmem:[#allocation2] sm:$0x1]
            %v1704 = vmax.f32 %v1703, %v1702
            %1705 = vst [vmem:[#allocation2] sm:$0x1] %v1704
          $region92: #{tpu_custom_call.1} parent=87 // pred_fallthru
            _
          %s1706 = sld [smem:[#allocation4 + $0x1]]
          %s1707 = sld [smem:[#allocation4 + $0x2]]
          %p1708 = scmp.lt.s32.totalorder %s1706, %s465
          %p1709 = scmp.gt.s32.totalorder %s1707, %s464
          %p1710 = pnand %p1708, %p1709
          %p1711 = pneg %p1710
          // Predicated region
          $region93: #{tpu_custom_call.1} parent=87 // pred_check
            _
          $region94: #{tpu_custom_call.1} parent=87 // pred_check_branch
            %1713 = sbr.rel (%p1710) target = $region96
          $region95: #{tpu_custom_call.1} parent=87 // pred_region
            %v1714 = vstv %s1706
            %vm1715 = vcmp.ge.s32.totalorder %v500, %v1714
            %vm1716 = vcmp.ge.s32.totalorder %v501, %v1714
            %vm1717 = vcmp.ge.s32.totalorder %v502, %v1714
            %vm1718 = vcmp.ge.s32.totalorder %v503, %v1714
            %vm1719 = vcmp.ge.s32.totalorder %v504, %v1714
            %vm1720 = vcmp.ge.s32.totalorder %v505, %v1714
            %vm1721 = vcmp.ge.s32.totalorder %v506, %v1714
            %vm1722 = vcmp.ge.s32.totalorder %v507, %v1714
            %vm1723 = vcmp.ge.s32.totalorder %v508, %v1714
            %vm1724 = vcmp.ge.s32.totalorder %v509, %v1714
            %vm1725 = vcmp.ge.s32.totalorder %v510, %v1714
            %vm1726 = vcmp.ge.s32.totalorder %v511, %v1714
            %vm1727 = vcmp.ge.s32.totalorder %v512, %v1714
            %vm1728 = vcmp.ge.s32.totalorder %v513, %v1714
            %vm1729 = vcmp.ge.s32.totalorder %v514, %v1714
            %vm1730 = vcmp.ge.s32.totalorder %v515, %v1714
            %vm1731 = vcmp.ge.s32.totalorder %v516, %v1714
            %vm1732 = vcmp.ge.s32.totalorder %v517, %v1714
            %vm1733 = vcmp.ge.s32.totalorder %v518, %v1714
            %vm1734 = vcmp.ge.s32.totalorder %v519, %v1714
            %vm1735 = vcmp.ge.s32.totalorder %v520, %v1714
            %vm1736 = vcmp.ge.s32.totalorder %v521, %v1714
            %vm1737 = vcmp.ge.s32.totalorder %v522, %v1714
            %vm1738 = vcmp.ge.s32.totalorder %v523, %v1714
            %vm1739 = vcmp.ge.s32.totalorder %v524, %v1714
            %vm1740 = vcmp.ge.s32.totalorder %v525, %v1714
            %vm1741 = vcmp.ge.s32.totalorder %v526, %v1714
            %vm1742 = vcmp.ge.s32.totalorder %v527, %v1714
            %vm1743 = vcmp.ge.s32.totalorder %v528, %v1714
            %vm1744 = vcmp.ge.s32.totalorder %v529, %v1714
            %vm1745 = vcmp.ge.s32.totalorder %v530, %v1714
            %vm1746 = vcmp.ge.s32.totalorder %v531, %v1714
            %v1747 = vstv %s1707
            %vm1748 = vcmp.lt.s32.totalorder %v500, %v1747
            %vm1749 = vcmp.lt.s32.totalorder %v501, %v1747
            %vm1750 = vcmp.lt.s32.totalorder %v502, %v1747
            %vm1751 = vcmp.lt.s32.totalorder %v503, %v1747
            %vm1752 = vcmp.lt.s32.totalorder %v504, %v1747
            %vm1753 = vcmp.lt.s32.totalorder %v505, %v1747
            %vm1754 = vcmp.lt.s32.totalorder %v506, %v1747
            %vm1755 = vcmp.lt.s32.totalorder %v507, %v1747
            %vm1756 = vcmp.lt.s32.totalorder %v508, %v1747
            %vm1757 = vcmp.lt.s32.totalorder %v509, %v1747
            %vm1758 = vcmp.lt.s32.totalorder %v510, %v1747
            %vm1759 = vcmp.lt.s32.totalorder %v511, %v1747
            %vm1760 = vcmp.lt.s32.totalorder %v512, %v1747
            %vm1761 = vcmp.lt.s32.totalorder %v513, %v1747
            %vm1762 = vcmp.lt.s32.totalorder %v514, %v1747
            %vm1763 = vcmp.lt.s32.totalorder %v515, %v1747
            %vm1764 = vcmp.lt.s32.totalorder %v516, %v1747
            %vm1765 = vcmp.lt.s32.totalorder %v517, %v1747
            %vm1766 = vcmp.lt.s32.totalorder %v518, %v1747
            %vm1767 = vcmp.lt.s32.totalorder %v519, %v1747
            %vm1768 = vcmp.lt.s32.totalorder %v520, %v1747
            %vm1769 = vcmp.lt.s32.totalorder %v521, %v1747
            %vm1770 = vcmp.lt.s32.totalorder %v522, %v1747
            %vm1771 = vcmp.lt.s32.totalorder %v523, %v1747
            %vm1772 = vcmp.lt.s32.totalorder %v524, %v1747
            %vm1773 = vcmp.lt.s32.totalorder %v525, %v1747
            %vm1774 = vcmp.lt.s32.totalorder %v526, %v1747
            %vm1775 = vcmp.lt.s32.totalorder %v527, %v1747
            %vm1776 = vcmp.lt.s32.totalorder %v528, %v1747
            %vm1777 = vcmp.lt.s32.totalorder %v529, %v1747
            %vm1778 = vcmp.lt.s32.totalorder %v530, %v1747
            %vm1779 = vcmp.lt.s32.totalorder %v531, %v1747
            %vm1780 = vmand %vm1715, %vm1748
            %vm1781 = vmand %vm1716, %vm1749
            %vm1782 = vmand %vm1717, %vm1750
            %vm1783 = vmand %vm1718, %vm1751
            %vm1784 = vmand %vm1719, %vm1752
            %vm1785 = vmand %vm1720, %vm1753
            %vm1786 = vmand %vm1721, %vm1754
            %vm1787 = vmand %vm1722, %vm1755
            %vm1788 = vmand %vm1723, %vm1756
            %vm1789 = vmand %vm1724, %vm1757
            %vm1790 = vmand %vm1725, %vm1758
            %vm1791 = vmand %vm1726, %vm1759
            %vm1792 = vmand %vm1727, %vm1760
            %vm1793 = vmand %vm1728, %vm1761
            %vm1794 = vmand %vm1729, %vm1762
            %vm1795 = vmand %vm1730, %vm1763
            %vm1796 = vmand %vm1731, %vm1764
            %vm1797 = vmand %vm1732, %vm1765
            %vm1798 = vmand %vm1733, %vm1766
            %vm1799 = vmand %vm1734, %vm1767
            %vm1800 = vmand %vm1735, %vm1768
            %vm1801 = vmand %vm1736, %vm1769
            %vm1802 = vmand %vm1737, %vm1770
            %vm1803 = vmand %vm1738, %vm1771
            %vm1804 = vmand %vm1739, %vm1772
            %vm1805 = vmand %vm1740, %vm1773
            %vm1806 = vmand %vm1741, %vm1774
            %vm1807 = vmand %vm1742, %vm1775
            %vm1808 = vmand %vm1743, %vm1776
            %vm1809 = vmand %vm1744, %vm1777
            %vm1810 = vmand %vm1745, %vm1778
            %vm1811 = vmand %vm1746, %vm1779
            %v1812 = vsel %vm1780, 1, 0
            %v1813 = vsel %vm1781, 1, 0
            %v1814 = vsel %vm1782, 1, 0
            %v1815 = vsel %vm1783, 1, 0
            %v1816 = vsel %vm1784, 1, 0
            %v1817 = vsel %vm1785, 1, 0
            %v1818 = vsel %vm1786, 1, 0
            %v1819 = vsel %vm1787, 1, 0
            %v1820 = vsel %vm1788, 1, 0
            %v1821 = vsel %vm1789, 1, 0
            %v1822 = vsel %vm1790, 1, 0
            %v1823 = vsel %vm1791, 1, 0
            %v1824 = vsel %vm1792, 1, 0
            %v1825 = vsel %vm1793, 1, 0
            %v1826 = vsel %vm1794, 1, 0
            %v1827 = vsel %vm1795, 1, 0
            %v1828 = vsel %vm1796, 1, 0
            %v1829 = vsel %vm1797, 1, 0
            %v1830 = vsel %vm1798, 1, 0
            %v1831 = vsel %vm1799, 1, 0
            %v1832 = vsel %vm1800, 1, 0
            %v1833 = vsel %vm1801, 1, 0
            %v1834 = vsel %vm1802, 1, 0
            %v1835 = vsel %vm1803, 1, 0
            %v1836 = vsel %vm1804, 1, 0
            %v1837 = vsel %vm1805, 1, 0
            %v1838 = vsel %vm1806, 1, 0
            %v1839 = vsel %vm1807, 1, 0
            %v1840 = vsel %vm1808, 1, 0
            %v1841 = vsel %vm1809, 1, 0
            %v1842 = vsel %vm1810, 1, 0
            %v1843 = vsel %vm1811, 1, 0
            %vm1844 = vcmp.eq.s32.totalorder %v1812, 1
            %vm1845 = vcmp.eq.s32.totalorder %v1813, 1
            %vm1846 = vcmp.eq.s32.totalorder %v1814, 1
            %vm1847 = vcmp.eq.s32.totalorder %v1815, 1
            %vm1848 = vcmp.eq.s32.totalorder %v1816, 1
            %vm1849 = vcmp.eq.s32.totalorder %v1817, 1
            %vm1850 = vcmp.eq.s32.totalorder %v1818, 1
            %vm1851 = vcmp.eq.s32.totalorder %v1819, 1
            %vm1852 = vcmp.eq.s32.totalorder %v1820, 1
            %vm1853 = vcmp.eq.s32.totalorder %v1821, 1
            %vm1854 = vcmp.eq.s32.totalorder %v1822, 1
            %vm1855 = vcmp.eq.s32.totalorder %v1823, 1
            %vm1856 = vcmp.eq.s32.totalorder %v1824, 1
            %vm1857 = vcmp.eq.s32.totalorder %v1825, 1
            %vm1858 = vcmp.eq.s32.totalorder %v1826, 1
            %vm1859 = vcmp.eq.s32.totalorder %v1827, 1
            %vm1860 = vcmp.eq.s32.totalorder %v1828, 1
            %vm1861 = vcmp.eq.s32.totalorder %v1829, 1
            %vm1862 = vcmp.eq.s32.totalorder %v1830, 1
            %vm1863 = vcmp.eq.s32.totalorder %v1831, 1
            %vm1864 = vcmp.eq.s32.totalorder %v1832, 1
            %vm1865 = vcmp.eq.s32.totalorder %v1833, 1
            %vm1866 = vcmp.eq.s32.totalorder %v1834, 1
            %vm1867 = vcmp.eq.s32.totalorder %v1835, 1
            %vm1868 = vcmp.eq.s32.totalorder %v1836, 1
            %vm1869 = vcmp.eq.s32.totalorder %v1837, 1
            %vm1870 = vcmp.eq.s32.totalorder %v1838, 1
            %vm1871 = vcmp.eq.s32.totalorder %v1839, 1
            %vm1872 = vcmp.eq.s32.totalorder %v1840, 1
            %vm1873 = vcmp.eq.s32.totalorder %v1841, 1
            %vm1874 = vcmp.eq.s32.totalorder %v1842, 1
            %vm1875 = vcmp.eq.s32.totalorder %v1843, 1
            %v1876 = vsel %vm1844, %v1338, -inf
            %v1877 = vsel %vm1845, %v1341, -inf
            %v1878 = vsel %vm1846, %v1346, -inf
            %v1879 = vsel %vm1847, %v1349, -inf
            %v1880 = vsel %vm1848, %v1354, -inf
            %v1881 = vsel %vm1849, %v1357, -inf
            %v1882 = vsel %vm1850, %v1362, -inf
            %v1883 = vsel %vm1851, %v1365, -inf
            %v1884 = vsel %vm1852, %v1370, -inf
            %v1885 = vsel %vm1853, %v1373, -inf
            %v1886 = vsel %vm1854, %v1378, -inf
            %v1887 = vsel %vm1855, %v1381, -inf
            %v1888 = vsel %vm1856, %v1386, -inf
            %v1889 = vsel %vm1857, %v1389, -inf
            %v1890 = vsel %vm1858, %v1394, -inf
            %v1891 = vsel %vm1859, %v1397, -inf
            %v1892 = vsel %vm1860, %v1402, -inf
            %v1893 = vsel %vm1861, %v1405, -inf
            %v1894 = vsel %vm1862, %v1410, -inf
            %v1895 = vsel %vm1863, %v1413, -inf
            %v1896 = vsel %vm1864, %v1418, -inf
            %v1897 = vsel %vm1865, %v1421, -inf
            %v1898 = vsel %vm1866, %v1426, -inf
            %v1899 = vsel %vm1867, %v1429, -inf
            %v1900 = vsel %vm1868, %v1434, -inf
            %v1901 = vsel %vm1869, %v1437, -inf
            %v1902 = vsel %vm1870, %v1442, -inf
            %v1903 = vsel %vm1871, %v1445, -inf
            %v1904 = vsel %vm1872, %v1450, -inf
            %v1905 = vsel %vm1873, %v1453, -inf
            %v1906 = vsel %vm1874, %v1458, -inf
            %v1907 = vsel %vm1875, %v1461, -inf
            %v1908 = vmax.f32 %v1876, %v1880
            %v1909 = vmax.f32 %v1877, %v1881
            %v1910 = vmax.f32 %v1878, %v1882
            %v1911 = vmax.f32 %v1879, %v1883
            %v1912 = vmax.f32 %v1908, %v1884
            %v1913 = vmax.f32 %v1909, %v1885
            %v1914 = vmax.f32 %v1910, %v1886
            %v1915 = vmax.f32 %v1911, %v1887
            %v1916 = vmax.f32 %v1912, %v1888
            %v1917 = vmax.f32 %v1913, %v1889
            %v1918 = vmax.f32 %v1914, %v1890
            %v1919 = vmax.f32 %v1915, %v1891
            %v1920 = vmax.f32 %v1916, %v1892
            %v1921 = vmax.f32 %v1917, %v1893
            %v1922 = vmax.f32 %v1918, %v1894
            %v1923 = vmax.f32 %v1919, %v1895
            %v1924 = vmax.f32 %v1920, %v1896
            %v1925 = vmax.f32 %v1921, %v1897
            %v1926 = vmax.f32 %v1922, %v1898
            %v1927 = vmax.f32 %v1923, %v1899
            %v1928 = vmax.f32 %v1924, %v1900
            %v1929 = vmax.f32 %v1925, %v1901
            %v1930 = vmax.f32 %v1926, %v1902
            %v1931 = vmax.f32 %v1927, %v1903
            %v1932 = vmax.f32 %v1928, %v1904
            %v1933 = vmax.f32 %v1929, %v1905
            %v1934 = vmax.f32 %v1930, %v1906
            %v1935 = vmax.f32 %v1931, %v1907
            %v1936 = vmax.f32 %v1932, %v1933
            %v1937 = vmax.f32 %v1934, %v1935
            %v1938 = vmax.f32 %v1936, %v1937
            %v1939 = vrot.slane %v1938, 4
            %v1940 = vmax.f32 %v1938, %v1939
            %v1941 = vrot.slane %v1940, 2
            %v1942 = vmax.f32 %v1940, %v1941
            %v1943 = vrot.slane %v1942, 1
            %v1944 = vmax.f32 %v1942, %v1943
            %v1945 = vld [vmem:[#allocation2 + $0x1] sm:$0x1]
            %v1946 = vmax.f32 %v1945, %v1944
            %1947 = vst [vmem:[#allocation2 + $0x1] sm:$0x1] %v1946
          $region96: #{tpu_custom_call.1} parent=87 // pred_fallthru
            _
          %s1948 = sld [smem:[#allocation4 + $0x2]]
          %s1949 = sld [smem:[#allocation4 + $0x3]]
          %p1950 = scmp.lt.s32.totalorder %s1948, %s465
          %p1951 = scmp.gt.s32.totalorder %s1949, %s464
          %p1952 = pnand %p1950, %p1951
          %p1953 = pneg %p1952
          // Predicated region
          $region97: #{tpu_custom_call.1} parent=87 // pred_check
            _
          $region98: #{tpu_custom_call.1} parent=87 // pred_check_branch
            %1955 = sbr.rel (%p1952) target = $region100
          $region99: #{tpu_custom_call.1} parent=87 // pred_region
            %v1956 = vstv %s1948
            %vm1957 = vcmp.ge.s32.totalorder %v500, %v1956
            %vm1958 = vcmp.ge.s32.totalorder %v501, %v1956
            %vm1959 = vcmp.ge.s32.totalorder %v502, %v1956
            %vm1960 = vcmp.ge.s32.totalorder %v503, %v1956
            %vm1961 = vcmp.ge.s32.totalorder %v504, %v1956
            %vm1962 = vcmp.ge.s32.totalorder %v505, %v1956
            %vm1963 = vcmp.ge.s32.totalorder %v506, %v1956
            %vm1964 = vcmp.ge.s32.totalorder %v507, %v1956
            %vm1965 = vcmp.ge.s32.totalorder %v508, %v1956
            %vm1966 = vcmp.ge.s32.totalorder %v509, %v1956
            %vm1967 = vcmp.ge.s32.totalorder %v510, %v1956
            %vm1968 = vcmp.ge.s32.totalorder %v511, %v1956
            %vm1969 = vcmp.ge.s32.totalorder %v512, %v1956
            %vm1970 = vcmp.ge.s32.totalorder %v513, %v1956
            %vm1971 = vcmp.ge.s32.totalorder %v514, %v1956
            %vm1972 = vcmp.ge.s32.totalorder %v515, %v1956
            %vm1973 = vcmp.ge.s32.totalorder %v516, %v1956
            %vm1974 = vcmp.ge.s32.totalorder %v517, %v1956
            %vm1975 = vcmp.ge.s32.totalorder %v518, %v1956
            %vm1976 = vcmp.ge.s32.totalorder %v519, %v1956
            %vm1977 = vcmp.ge.s32.totalorder %v520, %v1956
            %vm1978 = vcmp.ge.s32.totalorder %v521, %v1956
            %vm1979 = vcmp.ge.s32.totalorder %v522, %v1956
            %vm1980 = vcmp.ge.s32.totalorder %v523, %v1956
            %vm1981 = vcmp.ge.s32.totalorder %v524, %v1956
            %vm1982 = vcmp.ge.s32.totalorder %v525, %v1956
            %vm1983 = vcmp.ge.s32.totalorder %v526, %v1956
            %vm1984 = vcmp.ge.s32.totalorder %v527, %v1956
            %vm1985 = vcmp.ge.s32.totalorder %v528, %v1956
            %vm1986 = vcmp.ge.s32.totalorder %v529, %v1956
            %vm1987 = vcmp.ge.s32.totalorder %v530, %v1956
            %vm1988 = vcmp.ge.s32.totalorder %v531, %v1956
            %v1989 = vstv %s1949
            %vm1990 = vcmp.lt.s32.totalorder %v500, %v1989
            %vm1991 = vcmp.lt.s32.totalorder %v501, %v1989
            %vm1992 = vcmp.lt.s32.totalorder %v502, %v1989
            %vm1993 = vcmp.lt.s32.totalorder %v503, %v1989
            %vm1994 = vcmp.lt.s32.totalorder %v504, %v1989
            %vm1995 = vcmp.lt.s32.totalorder %v505, %v1989
            %vm1996 = vcmp.lt.s32.totalorder %v506, %v1989
            %vm1997 = vcmp.lt.s32.totalorder %v507, %v1989
            %vm1998 = vcmp.lt.s32.totalorder %v508, %v1989
            %vm1999 = vcmp.lt.s32.totalorder %v509, %v1989
            %vm2000 = vcmp.lt.s32.totalorder %v510, %v1989
            %vm2001 = vcmp.lt.s32.totalorder %v511, %v1989
            %vm2002 = vcmp.lt.s32.totalorder %v512, %v1989
            %vm2003 = vcmp.lt.s32.totalorder %v513, %v1989
            %vm2004 = vcmp.lt.s32.totalorder %v514, %v1989
            %vm2005 = vcmp.lt.s32.totalorder %v515, %v1989
            %vm2006 = vcmp.lt.s32.totalorder %v516, %v1989
            %vm2007 = vcmp.lt.s32.totalorder %v517, %v1989
            %vm2008 = vcmp.lt.s32.totalorder %v518, %v1989
            %vm2009 = vcmp.lt.s32.totalorder %v519, %v1989
            %vm2010 = vcmp.lt.s32.totalorder %v520, %v1989
            %vm2011 = vcmp.lt.s32.totalorder %v521, %v1989
            %vm2012 = vcmp.lt.s32.totalorder %v522, %v1989
            %vm2013 = vcmp.lt.s32.totalorder %v523, %v1989
            %vm2014 = vcmp.lt.s32.totalorder %v524, %v1989
            %vm2015 = vcmp.lt.s32.totalorder %v525, %v1989
            %vm2016 = vcmp.lt.s32.totalorder %v526, %v1989
            %vm2017 = vcmp.lt.s32.totalorder %v527, %v1989
            %vm2018 = vcmp.lt.s32.totalorder %v528, %v1989
            %vm2019 = vcmp.lt.s32.totalorder %v529, %v1989
            %vm2020 = vcmp.lt.s32.totalorder %v530, %v1989
            %vm2021 = vcmp.lt.s32.totalorder %v531, %v1989
            %vm2022 = vmand %vm1957, %vm1990
            %vm2023 = vmand %vm1958, %vm1991
            %vm2024 = vmand %vm1959, %vm1992
            %vm2025 = vmand %vm1960, %vm1993
            %vm2026 = vmand %vm1961, %vm1994
            %vm2027 = vmand %vm1962, %vm1995
            %vm2028 = vmand %vm1963, %vm1996
            %vm2029 = vmand %vm1964, %vm1997
            %vm2030 = vmand %vm1965, %vm1998
            %vm2031 = vmand %vm1966, %vm1999
            %vm2032 = vmand %vm1967, %vm2000
            %vm2033 = vmand %vm1968, %vm2001
            %vm2034 = vmand %vm1969, %vm2002
            %vm2035 = vmand %vm1970, %vm2003
            %vm2036 = vmand %vm1971, %vm2004
            %vm2037 = vmand %vm1972, %vm2005
            %vm2038 = vmand %vm1973, %vm2006
            %vm2039 = vmand %vm1974, %vm2007
            %vm2040 = vmand %vm1975, %vm2008
            %vm2041 = vmand %vm1976, %vm2009
            %vm2042 = vmand %vm1977, %vm2010
            %vm2043 = vmand %vm1978, %vm2011
            %vm2044 = vmand %vm1979, %vm2012
            %vm2045 = vmand %vm1980, %vm2013
            %vm2046 = vmand %vm1981, %vm2014
            %vm2047 = vmand %vm1982, %vm2015
            %vm2048 = vmand %vm1983, %vm2016
            %vm2049 = vmand %vm1984, %vm2017
            %vm2050 = vmand %vm1985, %vm2018
            %vm2051 = vmand %vm1986, %vm2019
            %vm2052 = vmand %vm1987, %vm2020
            %vm2053 = vmand %vm1988, %vm2021
            %v2054 = vsel %vm2022, 1, 0
            %v2055 = vsel %vm2023, 1, 0
            %v2056 = vsel %vm2024, 1, 0
            %v2057 = vsel %vm2025, 1, 0
            %v2058 = vsel %vm2026, 1, 0
            %v2059 = vsel %vm2027, 1, 0
            %v2060 = vsel %vm2028, 1, 0
            %v2061 = vsel %vm2029, 1, 0
            %v2062 = vsel %vm2030, 1, 0
            %v2063 = vsel %vm2031, 1, 0
            %v2064 = vsel %vm2032, 1, 0
            %v2065 = vsel %vm2033, 1, 0
            %v2066 = vsel %vm2034, 1, 0
            %v2067 = vsel %vm2035, 1, 0
            %v2068 = vsel %vm2036, 1, 0
            %v2069 = vsel %vm2037, 1, 0
            %v2070 = vsel %vm2038, 1, 0
            %v2071 = vsel %vm2039, 1, 0
            %v2072 = vsel %vm2040, 1, 0
            %v2073 = vsel %vm2041, 1, 0
            %v2074 = vsel %vm2042, 1, 0
            %v2075 = vsel %vm2043, 1, 0
            %v2076 = vsel %vm2044, 1, 0
            %v2077 = vsel %vm2045, 1, 0
            %v2078 = vsel %vm2046, 1, 0
            %v2079 = vsel %vm2047, 1, 0
            %v2080 = vsel %vm2048, 1, 0
            %v2081 = vsel %vm2049, 1, 0
            %v2082 = vsel %vm2050, 1, 0
            %v2083 = vsel %vm2051, 1, 0
            %v2084 = vsel %vm2052, 1, 0
            %v2085 = vsel %vm2053, 1, 0
            %vm2086 = vcmp.eq.s32.totalorder %v2054, 1
            %vm2087 = vcmp.eq.s32.totalorder %v2055, 1
            %vm2088 = vcmp.eq.s32.totalorder %v2056, 1
            %vm2089 = vcmp.eq.s32.totalorder %v2057, 1
            %vm2090 = vcmp.eq.s32.totalorder %v2058, 1
            %vm2091 = vcmp.eq.s32.totalorder %v2059, 1
            %vm2092 = vcmp.eq.s32.totalorder %v2060, 1
            %vm2093 = vcmp.eq.s32.totalorder %v2061, 1
            %vm2094 = vcmp.eq.s32.totalorder %v2062, 1
            %vm2095 = vcmp.eq.s32.totalorder %v2063, 1
            %vm2096 = vcmp.eq.s32.totalorder %v2064, 1
            %vm2097 = vcmp.eq.s32.totalorder %v2065, 1
            %vm2098 = vcmp.eq.s32.totalorder %v2066, 1
            %vm2099 = vcmp.eq.s32.totalorder %v2067, 1
            %vm2100 = vcmp.eq.s32.totalorder %v2068, 1
            %vm2101 = vcmp.eq.s32.totalorder %v2069, 1
            %vm2102 = vcmp.eq.s32.totalorder %v2070, 1
            %vm2103 = vcmp.eq.s32.totalorder %v2071, 1
            %vm2104 = vcmp.eq.s32.totalorder %v2072, 1
            %vm2105 = vcmp.eq.s32.totalorder %v2073, 1
            %vm2106 = vcmp.eq.s32.totalorder %v2074, 1
            %vm2107 = vcmp.eq.s32.totalorder %v2075, 1
            %vm2108 = vcmp.eq.s32.totalorder %v2076, 1
            %vm2109 = vcmp.eq.s32.totalorder %v2077, 1
            %vm2110 = vcmp.eq.s32.totalorder %v2078, 1
            %vm2111 = vcmp.eq.s32.totalorder %v2079, 1
            %vm2112 = vcmp.eq.s32.totalorder %v2080, 1
            %vm2113 = vcmp.eq.s32.totalorder %v2081, 1
            %vm2114 = vcmp.eq.s32.totalorder %v2082, 1
            %vm2115 = vcmp.eq.s32.totalorder %v2083, 1
            %vm2116 = vcmp.eq.s32.totalorder %v2084, 1
            %vm2117 = vcmp.eq.s32.totalorder %v2085, 1
            %v2118 = vsel %vm2086, %v1338, -inf
            %v2119 = vsel %vm2087, %v1341, -inf
            %v2120 = vsel %vm2088, %v1346, -inf
            %v2121 = vsel %vm2089, %v1349, -inf
            %v2122 = vsel %vm2090, %v1354, -inf
            %v2123 = vsel %vm2091, %v1357, -inf
            %v2124 = vsel %vm2092, %v1362, -inf
            %v2125 = vsel %vm2093, %v1365, -inf
            %v2126 = vsel %vm2094, %v1370, -inf
            %v2127 = vsel %vm2095, %v1373, -inf
            %v2128 = vsel %vm2096, %v1378, -inf
            %v2129 = vsel %vm2097, %v1381, -inf
            %v2130 = vsel %vm2098, %v1386, -inf
            %v2131 = vsel %vm2099, %v1389, -inf
            %v2132 = vsel %vm2100, %v1394, -inf
            %v2133 = vsel %vm2101, %v1397, -inf
            %v2134 = vsel %vm2102, %v1402, -inf
            %v2135 = vsel %vm2103, %v1405, -inf
            %v2136 = vsel %vm2104, %v1410, -inf
            %v2137 = vsel %vm2105, %v1413, -inf
            %v2138 = vsel %vm2106, %v1418, -inf
            %v2139 = vsel %vm2107, %v1421, -inf
            %v2140 = vsel %vm2108, %v1426, -inf
            %v2141 = vsel %vm2109, %v1429, -inf
            %v2142 = vsel %vm2110, %v1434, -inf
            %v2143 = vsel %vm2111, %v1437, -inf
            %v2144 = vsel %vm2112, %v1442, -inf
            %v2145 = vsel %vm2113, %v1445, -inf
            %v2146 = vsel %vm2114, %v1450, -inf
            %v2147 = vsel %vm2115, %v1453, -inf
            %v2148 = vsel %vm2116, %v1458, -inf
            %v2149 = vsel %vm2117, %v1461, -inf
            %v2150 = vmax.f32 %v2118, %v2122
            %v2151 = vmax.f32 %v2119, %v2123
            %v2152 = vmax.f32 %v2120, %v2124
            %v2153 = vmax.f32 %v2121, %v2125
            %v2154 = vmax.f32 %v2150, %v2126
            %v2155 = vmax.f32 %v2151, %v2127
            %v2156 = vmax.f32 %v2152, %v2128
            %v2157 = vmax.f32 %v2153, %v2129
            %v2158 = vmax.f32 %v2154, %v2130
            %v2159 = vmax.f32 %v2155, %v2131
            %v2160 = vmax.f32 %v2156, %v2132
            %v2161 = vmax.f32 %v2157, %v2133
            %v2162 = vmax.f32 %v2158, %v2134
            %v2163 = vmax.f32 %v2159, %v2135
            %v2164 = vmax.f32 %v2160, %v2136
            %v2165 = vmax.f32 %v2161, %v2137
            %v2166 = vmax.f32 %v2162, %v2138
            %v2167 = vmax.f32 %v2163, %v2139
            %v2168 = vmax.f32 %v2164, %v2140
            %v2169 = vmax.f32 %v2165, %v2141
            %v2170 = vmax.f32 %v2166, %v2142
            %v2171 = vmax.f32 %v2167, %v2143
            %v2172 = vmax.f32 %v2168, %v2144
            %v2173 = vmax.f32 %v2169, %v2145
            %v2174 = vmax.f32 %v2170, %v2146
            %v2175 = vmax.f32 %v2171, %v2147
            %v2176 = vmax.f32 %v2172, %v2148
            %v2177 = vmax.f32 %v2173, %v2149
            %v2178 = vmax.f32 %v2174, %v2175
            %v2179 = vmax.f32 %v2176, %v2177
            %v2180 = vmax.f32 %v2178, %v2179
            %v2181 = vrot.slane %v2180, 4
            %v2182 = vmax.f32 %v2180, %v2181
            %v2183 = vrot.slane %v2182, 2
            %v2184 = vmax.f32 %v2182, %v2183
            %v2185 = vrot.slane %v2184, 1
            %v2186 = vmax.f32 %v2184, %v2185
            %v2187 = vld [vmem:[#allocation2 + $0x2] sm:$0x1]
            %v2188 = vmax.f32 %v2187, %v2186
            %2189 = vst [vmem:[#allocation2 + $0x2] sm:$0x1] %v2188
          $region100: #{tpu_custom_call.1} parent=87 // pred_fallthru
            _
        $region88: #{tpu_custom_call.1} parent=67 // pred_fallthru
          _
        %p2190 = scmp.eq.s32.totalorder %s35, 1
        // Predicated region
        $region101: #{tpu_custom_call.1} parent=67 // pred_check
          %p2191 = pneg %p2190
        $region102: #{tpu_custom_call.1} parent=67 // pred_check_branch
          %2193 = sbr.rel (%p2191) target = $region104
        $region103: #{tpu_custom_call.1} parent=67 // pred_region
          %s2194 = sld [smem:[#allocation4 + $0x1]]
          %v2195 = vstv %s2194
          %vm2196 = vcmp.ge.s32.totalorder %v500, %v2195
          %vm2197 = vcmp.ge.s32.totalorder %v501, %v2195
          %vm2198 = vcmp.ge.s32.totalorder %v502, %v2195
          %vm2199 = vcmp.ge.s32.totalorder %v503, %v2195
          %vm2200 = vcmp.ge.s32.totalorder %v504, %v2195
          %vm2201 = vcmp.ge.s32.totalorder %v505, %v2195
          %vm2202 = vcmp.ge.s32.totalorder %v506, %v2195
          %vm2203 = vcmp.ge.s32.totalorder %v507, %v2195
          %vm2204 = vcmp.ge.s32.totalorder %v508, %v2195
          %vm2205 = vcmp.ge.s32.totalorder %v509, %v2195
          %vm2206 = vcmp.ge.s32.totalorder %v510, %v2195
          %vm2207 = vcmp.ge.s32.totalorder %v511, %v2195
          %vm2208 = vcmp.ge.s32.totalorder %v512, %v2195
          %vm2209 = vcmp.ge.s32.totalorder %v513, %v2195
          %vm2210 = vcmp.ge.s32.totalorder %v514, %v2195
          %vm2211 = vcmp.ge.s32.totalorder %v515, %v2195
          %vm2212 = vcmp.ge.s32.totalorder %v516, %v2195
          %vm2213 = vcmp.ge.s32.totalorder %v517, %v2195
          %vm2214 = vcmp.ge.s32.totalorder %v518, %v2195
          %vm2215 = vcmp.ge.s32.totalorder %v519, %v2195
          %vm2216 = vcmp.ge.s32.totalorder %v520, %v2195
          %vm2217 = vcmp.ge.s32.totalorder %v521, %v2195
          %vm2218 = vcmp.ge.s32.totalorder %v522, %v2195
          %vm2219 = vcmp.ge.s32.totalorder %v523, %v2195
          %vm2220 = vcmp.ge.s32.totalorder %v524, %v2195
          %vm2221 = vcmp.ge.s32.totalorder %v525, %v2195
          %vm2222 = vcmp.ge.s32.totalorder %v526, %v2195
          %vm2223 = vcmp.ge.s32.totalorder %v527, %v2195
          %vm2224 = vcmp.ge.s32.totalorder %v528, %v2195
          %vm2225 = vcmp.ge.s32.totalorder %v529, %v2195
          %vm2226 = vcmp.ge.s32.totalorder %v530, %v2195
          %vm2227 = vcmp.ge.s32.totalorder %v531, %v2195
          %v2228 = vsel %vm2196, 1, 0
          %v2229 = vsel %vm2197, 1, 0
          %v2230 = vsel %vm2198, 1, 0
          %v2231 = vsel %vm2199, 1, 0
          %v2232 = vsel %vm2200, 1, 0
          %v2233 = vsel %vm2201, 1, 0
          %v2234 = vsel %vm2202, 1, 0
          %v2235 = vsel %vm2203, 1, 0
          %v2236 = vsel %vm2204, 1, 0
          %v2237 = vsel %vm2205, 1, 0
          %v2238 = vsel %vm2206, 1, 0
          %v2239 = vsel %vm2207, 1, 0
          %v2240 = vsel %vm2208, 1, 0
          %v2241 = vsel %vm2209, 1, 0
          %v2242 = vsel %vm2210, 1, 0
          %v2243 = vsel %vm2211, 1, 0
          %v2244 = vsel %vm2212, 1, 0
          %v2245 = vsel %vm2213, 1, 0
          %v2246 = vsel %vm2214, 1, 0
          %v2247 = vsel %vm2215, 1, 0
          %v2248 = vsel %vm2216, 1, 0
          %v2249 = vsel %vm2217, 1, 0
          %v2250 = vsel %vm2218, 1, 0
          %v2251 = vsel %vm2219, 1, 0
          %v2252 = vsel %vm2220, 1, 0
          %v2253 = vsel %vm2221, 1, 0
          %v2254 = vsel %vm2222, 1, 0
          %v2255 = vsel %vm2223, 1, 0
          %v2256 = vsel %vm2224, 1, 0
          %v2257 = vsel %vm2225, 1, 0
          %v2258 = vsel %vm2226, 1, 0
          %v2259 = vsel %vm2227, 1, 0
          %s2260 = sld [smem:[#allocation4 + $0x2]]
          %v2261 = vstv %s2260
          %vm2262 = vcmp.ge.s32.totalorder %v500, %v2261
          %vm2263 = vcmp.ge.s32.totalorder %v501, %v2261
          %vm2264 = vcmp.ge.s32.totalorder %v502, %v2261
          %vm2265 = vcmp.ge.s32.totalorder %v503, %v2261
          %vm2266 = vcmp.ge.s32.totalorder %v504, %v2261
          %vm2267 = vcmp.ge.s32.totalorder %v505, %v2261
          %vm2268 = vcmp.ge.s32.totalorder %v506, %v2261
          %vm2269 = vcmp.ge.s32.totalorder %v507, %v2261
          %vm2270 = vcmp.ge.s32.totalorder %v508, %v2261
          %vm2271 = vcmp.ge.s32.totalorder %v509, %v2261
          %vm2272 = vcmp.ge.s32.totalorder %v510, %v2261
          %vm2273 = vcmp.ge.s32.totalorder %v511, %v2261
          %vm2274 = vcmp.ge.s32.totalorder %v512, %v2261
          %vm2275 = vcmp.ge.s32.totalorder %v513, %v2261
          %vm2276 = vcmp.ge.s32.totalorder %v514, %v2261
          %vm2277 = vcmp.ge.s32.totalorder %v515, %v2261
          %vm2278 = vcmp.ge.s32.totalorder %v516, %v2261
          %vm2279 = vcmp.ge.s32.totalorder %v517, %v2261
          %vm2280 = vcmp.ge.s32.totalorder %v518, %v2261
          %vm2281 = vcmp.ge.s32.totalorder %v519, %v2261
          %vm2282 = vcmp.ge.s32.totalorder %v520, %v2261
          %vm2283 = vcmp.ge.s32.totalorder %v521, %v2261
          %vm2284 = vcmp.ge.s32.totalorder %v522, %v2261
          %vm2285 = vcmp.ge.s32.totalorder %v523, %v2261
          %vm2286 = vcmp.ge.s32.totalorder %v524, %v2261
          %vm2287 = vcmp.ge.s32.totalorder %v525, %v2261
          %vm2288 = vcmp.ge.s32.totalorder %v526, %v2261
          %vm2289 = vcmp.ge.s32.totalorder %v527, %v2261
          %vm2290 = vcmp.ge.s32.totalorder %v528, %v2261
          %vm2291 = vcmp.ge.s32.totalorder %v529, %v2261
          %vm2292 = vcmp.ge.s32.totalorder %v530, %v2261
          %vm2293 = vcmp.ge.s32.totalorder %v531, %v2261
          %v2294 = vsel %vm2262, 1, 0
          %v2295 = vsel %vm2263, 1, 0
          %v2296 = vsel %vm2264, 1, 0
          %v2297 = vsel %vm2265, 1, 0
          %v2298 = vsel %vm2266, 1, 0
          %v2299 = vsel %vm2267, 1, 0
          %v2300 = vsel %vm2268, 1, 0
          %v2301 = vsel %vm2269, 1, 0
          %v2302 = vsel %vm2270, 1, 0
          %v2303 = vsel %vm2271, 1, 0
          %v2304 = vsel %vm2272, 1, 0
          %v2305 = vsel %vm2273, 1, 0
          %v2306 = vsel %vm2274, 1, 0
          %v2307 = vsel %vm2275, 1, 0
          %v2308 = vsel %vm2276, 1, 0
          %v2309 = vsel %vm2277, 1, 0
          %v2310 = vsel %vm2278, 1, 0
          %v2311 = vsel %vm2279, 1, 0
          %v2312 = vsel %vm2280, 1, 0
          %v2313 = vsel %vm2281, 1, 0
          %v2314 = vsel %vm2282, 1, 0
          %v2315 = vsel %vm2283, 1, 0
          %v2316 = vsel %vm2284, 1, 0
          %v2317 = vsel %vm2285, 1, 0
          %v2318 = vsel %vm2286, 1, 0
          %v2319 = vsel %vm2287, 1, 0
          %v2320 = vsel %vm2288, 1, 0
          %v2321 = vsel %vm2289, 1, 0
          %v2322 = vsel %vm2290, 1, 0
          %v2323 = vsel %vm2291, 1, 0
          %v2324 = vsel %vm2292, 1, 0
          %v2325 = vsel %vm2293, 1, 0
          %v2326 = vadd.s32 %v2228, %v2294
          %v2327 = vadd.s32 %v2229, %v2295
          %v2328 = vadd.s32 %v2230, %v2296
          %v2329 = vadd.s32 %v2231, %v2297
          %v2330 = vadd.s32 %v2232, %v2298
          %v2331 = vadd.s32 %v2233, %v2299
          %v2332 = vadd.s32 %v2234, %v2300
          %v2333 = vadd.s32 %v2235, %v2301
          %v2334 = vadd.s32 %v2236, %v2302
          %v2335 = vadd.s32 %v2237, %v2303
          %v2336 = vadd.s32 %v2238, %v2304
          %v2337 = vadd.s32 %v2239, %v2305
          %v2338 = vadd.s32 %v2240, %v2306
          %v2339 = vadd.s32 %v2241, %v2307
          %v2340 = vadd.s32 %v2242, %v2308
          %v2341 = vadd.s32 %v2243, %v2309
          %v2342 = vadd.s32 %v2244, %v2310
          %v2343 = vadd.s32 %v2245, %v2311
          %v2344 = vadd.s32 %v2246, %v2312
          %v2345 = vadd.s32 %v2247, %v2313
          %v2346 = vadd.s32 %v2248, %v2314
          %v2347 = vadd.s32 %v2249, %v2315
          %v2348 = vadd.s32 %v2250, %v2316
          %v2349 = vadd.s32 %v2251, %v2317
          %v2350 = vadd.s32 %v2252, %v2318
          %v2351 = vadd.s32 %v2253, %v2319
          %v2352 = vadd.s32 %v2254, %v2320
          %v2353 = vadd.s32 %v2255, %v2321
          %v2354 = vadd.s32 %v2256, %v2322
          %v2355 = vadd.s32 %v2257, %v2323
          %v2356 = vadd.s32 %v2258, %v2324
          %v2357 = vadd.s32 %v2259, %v2325
          %s2358 = sld [smem:[#allocation4 + $0x3]]
          %v2359 = vstv %s2358
          %vm2360 = vcmp.ge.s32.totalorder %v500, %v2359
          %vm2361 = vcmp.ge.s32.totalorder %v501, %v2359
          %vm2362 = vcmp.ge.s32.totalorder %v502, %v2359
          %vm2363 = vcmp.ge.s32.totalorder %v503, %v2359
          %vm2364 = vcmp.ge.s32.totalorder %v504, %v2359
          %vm2365 = vcmp.ge.s32.totalorder %v505, %v2359
          %vm2366 = vcmp.ge.s32.totalorder %v506, %v2359
          %vm2367 = vcmp.ge.s32.totalorder %v507, %v2359
          %vm2368 = vcmp.ge.s32.totalorder %v508, %v2359
          %vm2369 = vcmp.ge.s32.totalorder %v509, %v2359
          %vm2370 = vcmp.ge.s32.totalorder %v510, %v2359
          %vm2371 = vcmp.ge.s32.totalorder %v511, %v2359
          %vm2372 = vcmp.ge.s32.totalorder %v512, %v2359
          %vm2373 = vcmp.ge.s32.totalorder %v513, %v2359
          %vm2374 = vcmp.ge.s32.totalorder %v514, %v2359
          %vm2375 = vcmp.ge.s32.totalorder %v515, %v2359
          %vm2376 = vcmp.ge.s32.totalorder %v516, %v2359
          %vm2377 = vcmp.ge.s32.totalorder %v517, %v2359
          %vm2378 = vcmp.ge.s32.totalorder %v518, %v2359
          %vm2379 = vcmp.ge.s32.totalorder %v519, %v2359
          %vm2380 = vcmp.ge.s32.totalorder %v520, %v2359
          %vm2381 = vcmp.ge.s32.totalorder %v521, %v2359
          %vm2382 = vcmp.ge.s32.totalorder %v522, %v2359
          %vm2383 = vcmp.ge.s32.totalorder %v523, %v2359
          %vm2384 = vcmp.ge.s32.totalorder %v524, %v2359
          %vm2385 = vcmp.ge.s32.totalorder %v525, %v2359
          %vm2386 = vcmp.ge.s32.totalorder %v526, %v2359
          %vm2387 = vcmp.ge.s32.totalorder %v527, %v2359
          %vm2388 = vcmp.ge.s32.totalorder %v528, %v2359
          %vm2389 = vcmp.ge.s32.totalorder %v529, %v2359
          %vm2390 = vcmp.ge.s32.totalorder %v530, %v2359
          %vm2391 = vcmp.ge.s32.totalorder %v531, %v2359
          %v2392 = vsel %vm2360, 1, 0
          %v2393 = vsel %vm2361, 1, 0
          %v2394 = vsel %vm2362, 1, 0
          %v2395 = vsel %vm2363, 1, 0
          %v2396 = vsel %vm2364, 1, 0
          %v2397 = vsel %vm2365, 1, 0
          %v2398 = vsel %vm2366, 1, 0
          %v2399 = vsel %vm2367, 1, 0
          %v2400 = vsel %vm2368, 1, 0
          %v2401 = vsel %vm2369, 1, 0
          %v2402 = vsel %vm2370, 1, 0
          %v2403 = vsel %vm2371, 1, 0
          %v2404 = vsel %vm2372, 1, 0
          %v2405 = vsel %vm2373, 1, 0
          %v2406 = vsel %vm2374, 1, 0
          %v2407 = vsel %vm2375, 1, 0
          %v2408 = vsel %vm2376, 1, 0
          %v2409 = vsel %vm2377, 1, 0
          %v2410 = vsel %vm2378, 1, 0
          %v2411 = vsel %vm2379, 1, 0
          %v2412 = vsel %vm2380, 1, 0
          %v2413 = vsel %vm2381, 1, 0
          %v2414 = vsel %vm2382, 1, 0
          %v2415 = vsel %vm2383, 1, 0
          %v2416 = vsel %vm2384, 1, 0
          %v2417 = vsel %vm2385, 1, 0
          %v2418 = vsel %vm2386, 1, 0
          %v2419 = vsel %vm2387, 1, 0
          %v2420 = vsel %vm2388, 1, 0
          %v2421 = vsel %vm2389, 1, 0
          %v2422 = vsel %vm2390, 1, 0
          %v2423 = vsel %vm2391, 1, 0
          %v2424 = vadd.s32 %v2326, %v2392
          %v2425 = vadd.s32 %v2327, %v2393
          %v2426 = vadd.s32 %v2328, %v2394
          %v2427 = vadd.s32 %v2329, %v2395
          %v2428 = vadd.s32 %v2330, %v2396
          %v2429 = vadd.s32 %v2331, %v2397
          %v2430 = vadd.s32 %v2332, %v2398
          %v2431 = vadd.s32 %v2333, %v2399
          %v2432 = vadd.s32 %v2334, %v2400
          %v2433 = vadd.s32 %v2335, %v2401
          %v2434 = vadd.s32 %v2336, %v2402
          %v2435 = vadd.s32 %v2337, %v2403
          %v2436 = vadd.s32 %v2338, %v2404
          %v2437 = vadd.s32 %v2339, %v2405
          %v2438 = vadd.s32 %v2340, %v2406
          %v2439 = vadd.s32 %v2341, %v2407
          %v2440 = vadd.s32 %v2342, %v2408
          %v2441 = vadd.s32 %v2343, %v2409
          %v2442 = vadd.s32 %v2344, %v2410
          %v2443 = vadd.s32 %v2345, %v2411
          %v2444 = vadd.s32 %v2346, %v2412
          %v2445 = vadd.s32 %v2347, %v2413
          %v2446 = vadd.s32 %v2348, %v2414
          %v2447 = vadd.s32 %v2349, %v2415
          %v2448 = vadd.s32 %v2350, %v2416
          %v2449 = vadd.s32 %v2351, %v2417
          %v2450 = vadd.s32 %v2352, %v2418
          %v2451 = vadd.s32 %v2353, %v2419
          %v2452 = vadd.s32 %v2354, %v2420
          %v2453 = vadd.s32 %v2355, %v2421
          %v2454 = vadd.s32 %v2356, %v2422
          %v2455 = vadd.s32 %v2357, %v2423
          %v2456 = vld [vmem:[#allocation2] sm:$0xff]
          %vm2457 = vcmp.gt.f32.partialorder %v2456, -inf
          %v2458 = vsel %vm2457, %v2456, 0.0
          %v2459 = vpack.c.bf16 %v2458, %v2458
          %v2460 = vlaneseq
          %v2461 = vand.u32 %v2460, 127
          %vm2462 = vcmp.eq.s32.totalorder %v2424, %v2461
          %vm2463 = vcmp.eq.s32.totalorder %v2425, %v2461
          %vm2464 = vcmp.eq.s32.totalorder %v2426, %v2461
          %vm2465 = vcmp.eq.s32.totalorder %v2427, %v2461
          %vm2466 = vcmp.eq.s32.totalorder %v2428, %v2461
          %vm2467 = vcmp.eq.s32.totalorder %v2429, %v2461
          %vm2468 = vcmp.eq.s32.totalorder %v2430, %v2461
          %vm2469 = vcmp.eq.s32.totalorder %v2431, %v2461
          %vm2470 = vcmp.eq.s32.totalorder %v2432, %v2461
          %vm2471 = vcmp.eq.s32.totalorder %v2433, %v2461
          %vm2472 = vcmp.eq.s32.totalorder %v2434, %v2461
          %vm2473 = vcmp.eq.s32.totalorder %v2435, %v2461
          %vm2474 = vcmp.eq.s32.totalorder %v2436, %v2461
          %vm2475 = vcmp.eq.s32.totalorder %v2437, %v2461
          %vm2476 = vcmp.eq.s32.totalorder %v2438, %v2461
          %vm2477 = vcmp.eq.s32.totalorder %v2439, %v2461
          %vm2478 = vcmp.eq.s32.totalorder %v2440, %v2461
          %vm2479 = vcmp.eq.s32.totalorder %v2441, %v2461
          %vm2480 = vcmp.eq.s32.totalorder %v2442, %v2461
          %vm2481 = vcmp.eq.s32.totalorder %v2443, %v2461
          %vm2482 = vcmp.eq.s32.totalorder %v2444, %v2461
          %vm2483 = vcmp.eq.s32.totalorder %v2445, %v2461
          %vm2484 = vcmp.eq.s32.totalorder %v2446, %v2461
          %vm2485 = vcmp.eq.s32.totalorder %v2447, %v2461
          %vm2486 = vcmp.eq.s32.totalorder %v2448, %v2461
          %vm2487 = vcmp.eq.s32.totalorder %v2449, %v2461
          %vm2488 = vcmp.eq.s32.totalorder %v2450, %v2461
          %vm2489 = vcmp.eq.s32.totalorder %v2451, %v2461
          %vm2490 = vcmp.eq.s32.totalorder %v2452, %v2461
          %vm2491 = vcmp.eq.s32.totalorder %v2453, %v2461
          %vm2492 = vcmp.eq.s32.totalorder %v2454, %v2461
          %vm2493 = vcmp.eq.s32.totalorder %v2455, %v2461
          %v2494 = vsel %vm2462, 1, 0
          %v2495 = vsel %vm2463, 1, 0
          %v2496 = vsel %vm2464, 1, 0
          %v2497 = vsel %vm2465, 1, 0
          %v2498 = vsel %vm2466, 1, 0
          %v2499 = vsel %vm2467, 1, 0
          %v2500 = vsel %vm2468, 1, 0
          %v2501 = vsel %vm2469, 1, 0
          %v2502 = vsel %vm2470, 1, 0
          %v2503 = vsel %vm2471, 1, 0
          %v2504 = vsel %vm2472, 1, 0
          %v2505 = vsel %vm2473, 1, 0
          %v2506 = vsel %vm2474, 1, 0
          %v2507 = vsel %vm2475, 1, 0
          %v2508 = vsel %vm2476, 1, 0
          %v2509 = vsel %vm2477, 1, 0
          %v2510 = vsel %vm2478, 1, 0
          %v2511 = vsel %vm2479, 1, 0
          %v2512 = vsel %vm2480, 1, 0
          %v2513 = vsel %vm2481, 1, 0
          %v2514 = vsel %vm2482, 1, 0
          %v2515 = vsel %vm2483, 1, 0
          %v2516 = vsel %vm2484, 1, 0
          %v2517 = vsel %vm2485, 1, 0
          %v2518 = vsel %vm2486, 1, 0
          %v2519 = vsel %vm2487, 1, 0
          %v2520 = vsel %vm2488, 1, 0
          %v2521 = vsel %vm2489, 1, 0
          %v2522 = vsel %vm2490, 1, 0
          %v2523 = vsel %vm2491, 1, 0
          %v2524 = vsel %vm2492, 1, 0
          %v2525 = vsel %vm2493, 1, 0
          %v2526 = vcvt.s32.f32 %v2494
          %v2527 = vcvt.s32.f32 %v2495
          %v2528 = vcvt.s32.f32 %v2496
          %v2529 = vcvt.s32.f32 %v2497
          %v2530 = vcvt.s32.f32 %v2498
          %v2531 = vcvt.s32.f32 %v2499
          %v2532 = vcvt.s32.f32 %v2500
          %v2533 = vcvt.s32.f32 %v2501
          %v2534 = vcvt.s32.f32 %v2502
          %v2535 = vcvt.s32.f32 %v2503
          %v2536 = vcvt.s32.f32 %v2504
          %v2537 = vcvt.s32.f32 %v2505
          %v2538 = vcvt.s32.f32 %v2506
          %v2539 = vcvt.s32.f32 %v2507
          %v2540 = vcvt.s32.f32 %v2508
          %v2541 = vcvt.s32.f32 %v2509
          %v2542 = vcvt.s32.f32 %v2510
          %v2543 = vcvt.s32.f32 %v2511
          %v2544 = vcvt.s32.f32 %v2512
          %v2545 = vcvt.s32.f32 %v2513
          %v2546 = vcvt.s32.f32 %v2514
          %v2547 = vcvt.s32.f32 %v2515
          %v2548 = vcvt.s32.f32 %v2516
          %v2549 = vcvt.s32.f32 %v2517
          %v2550 = vcvt.s32.f32 %v2518
          %v2551 = vcvt.s32.f32 %v2519
          %v2552 = vcvt.s32.f32 %v2520
          %v2553 = vcvt.s32.f32 %v2521
          %v2554 = vcvt.s32.f32 %v2522
          %v2555 = vcvt.s32.f32 %v2523
          %v2556 = vcvt.s32.f32 %v2524
          %v2557 = vcvt.s32.f32 %v2525
          %v2558 = vpack.c.bf16 %v2527, %v2526
          %v2559 = vpack.c.bf16 %v2529, %v2528
          %v2560 = vpack.c.bf16 %v2531, %v2530
          %v2561 = vpack.c.bf16 %v2533, %v2532
          %v2562 = vpack.c.bf16 %v2535, %v2534
          %v2563 = vpack.c.bf16 %v2537, %v2536
          %v2564 = vpack.c.bf16 %v2539, %v2538
          %v2565 = vpack.c.bf16 %v2541, %v2540
          %v2566 = vpack.c.bf16 %v2543, %v2542
          %v2567 = vpack.c.bf16 %v2545, %v2544
          %v2568 = vpack.c.bf16 %v2547, %v2546
          %v2569 = vpack.c.bf16 %v2549, %v2548
          %v2570 = vpack.c.bf16 %v2551, %v2550
          %v2571 = vpack.c.bf16 %v2553, %v2552
          %v2572 = vpack.c.bf16 %v2555, %v2554
          %v2573 = vpack.c.bf16 %v2557, %v2556
          %vm2574 = vcmask 64512
          %v2576 = vsel %vm2574, %v2558, 0
          %v2579 = vsel %vm2574, %v2559, 0
          %v2582 = vsel %vm2574, %v2560, 0
          %v2585 = vsel %vm2574, %v2561, 0
          %v2588 = vsel %vm2574, %v2562, 0
          %v2591 = vsel %vm2574, %v2563, 0
          %v2594 = vsel %vm2574, %v2564, 0
          %v2597 = vsel %vm2574, %v2565, 0
          %v2600 = vsel %vm2574, %v2566, 0
          %v2603 = vsel %vm2574, %v2567, 0
          %v2606 = vsel %vm2574, %v2568, 0
          %v2609 = vsel %vm2574, %v2569, 0
          %v2612 = vsel %vm2574, %v2570, 0
          %v2615 = vsel %vm2574, %v2571, 0
          %v2618 = vsel %vm2574, %v2572, 0
          %v2621 = vsel %vm2574, %v2573, 0
          %vm2623 = vcmask 1043456
          %v2625 = vsel %vm2623, %v2459, 0
          %2627 = vmatprep.subr.bf16.mxu0 0
          %2628 = vmatpush1.bf16.msra.mxu0 %v2625
          %2629 = vmatprep.subr.bf16.mxu0 0
          %2630 = vmatpush1.bf16.msra.mxu0 0
          %2631 = vmatprep.subr.bf16.mxu0 0
          %2632 = vmatpush1.bf16.msra.mxu0 0
          %2633 = vmatprep.subr.bf16.mxu0 0
          %2634 = vmatpush1.bf16.msra.mxu0 0
          %2635 = vmatprep.subr.bf16.mxu0 0
          %2636 = vmatpush1.bf16.msra.mxu0 0
          %2637 = vmatprep.subr.bf16.mxu0 0
          %2638 = vmatpush1.bf16.msra.mxu0 0
          %2639 = vmatprep.subr.bf16.mxu0 0
          %2640 = vmatpush1.bf16.msra.mxu0 0
          %2641 = vmatprep.subr.bf16.mxu0 0
          %2642 = vmatpush1.bf16.msra.mxu0 0
          %2643 = vmatprep.subr.bf16.mxu0 0
          %2644 = vmatpush1.bf16.msra.mxu0 0
          %2645 = vmatprep.subr.bf16.mxu0 0
          %2646 = vmatpush1.bf16.msra.mxu0 0
          %2647 = vmatprep.subr.bf16.mxu0 0
          %2648 = vmatpush1.bf16.msra.mxu0 0
          %2649 = vmatprep.subr.bf16.mxu0 0
          %2650 = vmatpush1.bf16.msra.mxu0 0
          %2651 = vmatprep.subr.bf16.mxu0 0
          %2652 = vmatpush1.bf16.msra.mxu0 0
          %2653 = vmatprep.subr.bf16.mxu0 0
          %2654 = vmatpush1.bf16.msra.mxu0 0
          %2655 = vmatprep.subr.bf16.mxu0 0
          %2656 = vmatpush1.bf16.msra.mxu0 0
          %2657 = vmatprep.subr.bf16.mxu0 0
          %2658 = vmatpush1.bf16.msra.mxu0 0
          %2659 = vmatprep.mubr.bf16.mxu0 0
          %2660 = vmatmul.mubr.bf16.gmra.mrb[0].mxu0 %v2576
          %v2661 = vpop.f32.mrb[0].mxu0
          %v2662 = vadd.f32 0.0, %v2661
          %v2663 = vpop.f32.mrb[0].mxu0
          %v2664 = vpop.f32.mrb[0].mxu0
          %v2665 = vadd.f32 0.0, %v2664
          %v2666 = vpop.f32.mrb[0].mxu0
          %2667 = vmatprep.mubr.bf16.mxu0 0
          %2668 = vmatmul.mubr.bf16.gmra.mrb[0].mxu0 %v2579
          %v2669 = vpop.f32.mrb[0].mxu0
          %v2670 = vadd.f32 0.0, %v2669
          %v2671 = vpop.f32.mrb[0].mxu0
          %v2672 = vpop.f32.mrb[0].mxu0
          %v2673 = vadd.f32 0.0, %v2672
          %v2674 = vpop.f32.mrb[0].mxu0
          %2675 = vmatprep.mubr.bf16.mxu0 0
          %2676 = vmatmul.mubr.bf16.gmra.mrb[0].mxu0 %v2582
          %v2677 = vpop.f32.mrb[0].mxu0
          %v2678 = vadd.f32 0.0, %v2677
          %v2679 = vpop.f32.mrb[0].mxu0
          %v2680 = vpop.f32.mrb[0].mxu0
          %v2681 = vadd.f32 0.0, %v2680
          %v2682 = vpop.f32.mrb[0].mxu0
          %2683 = vmatprep.mubr.bf16.mxu0 0
          %2684 = vmatmul.mubr.bf16.gmra.mrb[0].mxu0 %v2585
          %v2685 = vpop.f32.mrb[0].mxu0
          %v2686 = vadd.f32 0.0, %v2685
          %v2687 = vpop.f32.mrb[0].mxu0
          %v2688 = vpop.f32.mrb[0].mxu0
          %v2689 = vadd.f32 0.0, %v2688
          %v2690 = vpop.f32.mrb[0].mxu0
          %2691 = vmatprep.mubr.bf16.mxu0 0
          %2692 = vmatmul.mubr.bf16.gmra.mrb[0].mxu0 %v2588
          %v2693 = vpop.f32.mrb[0].mxu0
          %v2694 = vadd.f32 0.0, %v2693
          %v2695 = vpop.f32.mrb[0].mxu0
          %v2696 = vpop.f32.mrb[0].mxu0
          %v2697 = vadd.f32 0.0, %v2696
          %v2698 = vpop.f32.mrb[0].mxu0
          %2699 = vmatprep.mubr.bf16.mxu0 0
          %2700 = vmatmul.mubr.bf16.gmra.mrb[0].mxu0 %v2591
          %v2701 = vpop.f32.mrb[0].mxu0
          %v2702 = vadd.f32 0.0, %v2701
          %v2703 = vpop.f32.mrb[0].mxu0
          %v2704 = vpop.f32.mrb[0].mxu0
          %v2705 = vadd.f32 0.0, %v2704
          %v2706 = vpop.f32.mrb[0].mxu0
          %2707 = vmatprep.mubr.bf16.mxu0 0
          %2708 = vmatmul.mubr.bf16.gmra.mrb[0].mxu0 %v2594
          %v2709 = vpop.f32.mrb[0].mxu0
          %v2710 = vadd.f32 0.0, %v2709
          %v2711 = vpop.f32.mrb[0].mxu0
          %v2712 = vpop.f32.mrb[0].mxu0
          %v2713 = vadd.f32 0.0, %v2712
          %v2714 = vpop.f32.mrb[0].mxu0
          %2715 = vmatprep.mubr.bf16.mxu0 0
          %2716 = vmatmul.mubr.bf16.gmra.mrb[0].mxu0 %v2597
          %v2717 = vpop.f32.mrb[0].mxu0
          %v2718 = vadd.f32 0.0, %v2717
          %v2719 = vpop.f32.mrb[0].mxu0
          %v2720 = vpop.f32.mrb[0].mxu0
          %v2721 = vadd.f32 0.0, %v2720
          %v2722 = vpop.f32.mrb[0].mxu0
          %2723 = vmatprep.mubr.bf16.mxu0 0
          %2724 = vmatmul.mubr.bf16.gmra.mrb[0].mxu0 %v2600
          %v2725 = vpop.f32.mrb[0].mxu0
          %v2726 = vadd.f32 0.0, %v2725
          %v2727 = vpop.f32.mrb[0].mxu0
          %v2728 = vpop.f32.mrb[0].mxu0
          %v2729 = vadd.f32 0.0, %v2728
          %v2730 = vpop.f32.mrb[0].mxu0
          %2731 = vmatprep.mubr.bf16.mxu0 0
          %2732 = vmatmul.mubr.bf16.gmra.mrb[0].mxu0 %v2603
          %v2733 = vpop.f32.mrb[0].mxu0
          %v2734 = vadd.f32 0.0, %v2733
          %v2735 = vpop.f32.mrb[0].mxu0
          %v2736 = vpop.f32.mrb[0].mxu0
          %v2737 = vadd.f32 0.0, %v2736
          %v2738 = vpop.f32.mrb[0].mxu0
          %2739 = vmatprep.mubr.bf16.mxu0 0
          %2740 = vmatmul.mubr.bf16.gmra.mrb[0].mxu0 %v2606
          %v2741 = vpop.f32.mrb[0].mxu0
          %v2742 = vadd.f32 0.0, %v2741
          %v2743 = vpop.f32.mrb[0].mxu0
          %v2744 = vpop.f32.mrb[0].mxu0
          %v2745 = vadd.f32 0.0, %v2744
          %v2746 = vpop.f32.mrb[0].mxu0
          %2747 = vmatprep.mubr.bf16.mxu0 0
          %2748 = vmatmul.mubr.bf16.gmra.mrb[0].mxu0 %v2609
          %v2749 = vpop.f32.mrb[0].mxu0
          %v2750 = vadd.f32 0.0, %v2749
          %v2751 = vpop.f32.mrb[0].mxu0
          %v2752 = vpop.f32.mrb[0].mxu0
          %v2753 = vadd.f32 0.0, %v2752
          %v2754 = vpop.f32.mrb[0].mxu0
          %2755 = vmatprep.mubr.bf16.mxu0 0
          %2756 = vmatmul.mubr.bf16.gmra.mrb[0].mxu0 %v2612
          %v2757 = vpop.f32.mrb[0].mxu0
          %v2758 = vadd.f32 0.0, %v2757
          %v2759 = vpop.f32.mrb[0].mxu0
          %v2760 = vpop.f32.mrb[0].mxu0
          %v2761 = vadd.f32 0.0, %v2760
          %v2762 = vpop.f32.mrb[0].mxu0
          %2763 = vmatprep.mubr.bf16.mxu0 0
          %2764 = vmatmul.mubr.bf16.gmra.mrb[0].mxu0 %v2615
          %v2765 = vpop.f32.mrb[0].mxu0
          %v2766 = vadd.f32 0.0, %v2765
          %v2767 = vpop.f32.mrb[0].mxu0
          %v2768 = vpop.f32.mrb[0].mxu0
          %v2769 = vadd.f32 0.0, %v2768
          %v2770 = vpop.f32.mrb[0].mxu0
          %2771 = vmatprep.mubr.bf16.mxu0 0
          %2772 = vmatmul.mubr.bf16.gmra.mrb[0].mxu0 %v2618
          %v2773 = vpop.f32.mrb[0].mxu0
          %v2774 = vadd.f32 0.0, %v2773
          %v2775 = vpop.f32.mrb[0].mxu0
          %v2776 = vpop.f32.mrb[0].mxu0
          %v2777 = vadd.f32 0.0, %v2776
          %v2778 = vpop.f32.mrb[0].mxu0
          %2779 = vmatprep.mubr.bf16.mxu0 0
          %2780 = vmatmul.mubr.bf16.gmra.mrb[0].mxu0 %v2621
          %v2781 = vpop.f32.mrb[0].mxu0
          %v2782 = vadd.f32 0.0, %v2781
          %v2783 = vpop.f32.mrb[0].mxu0
          %v2784 = vpop.f32.mrb[0].mxu0
          %v2785 = vadd.f32 0.0, %v2784
          %v2786 = vpop.f32.mrb[0].mxu0
          %2787 = vdwg.mxu0
          %v2788 = vld [vmem:[#allocation8] sm:$0xf]
          %v2789 = vld [vmem:[#allocation8 + $0x4] sm:$0xf]
          %v2790 = vld [vmem:[#allocation8 + $0x8] sm:$0xf]
          %v2791 = vld [vmem:[#allocation8 + $0xc] sm:$0xf]
          %v2792 = vld [vmem:[#allocation8 + $0x10] sm:$0xf]
          %v2793 = vld [vmem:[#allocation8 + $0x14] sm:$0xf]
          %v2794 = vld [vmem:[#allocation8 + $0x18] sm:$0xf]
          %v2795 = vld [vmem:[#allocation8 + $0x1c] sm:$0xf]
          %v2796 = vpack.c.bf16 %v2665, %v2662
          %v2797 = vpack.c.bf16 %v2673, %v2670
          %v2798 = vpack.c.bf16 %v2681, %v2678
          %v2799 = vpack.c.bf16 %v2689, %v2686
          %v2800 = vpack.c.bf16 %v2697, %v2694
          %v2801 = vpack.c.bf16 %v2705, %v2702
          %v2802 = vpack.c.bf16 %v2713, %v2710
          %v2803 = vpack.c.bf16 %v2721, %v2718
          %v2804 = vpack.c.bf16 %v2729, %v2726
          %v2805 = vpack.c.bf16 %v2737, %v2734
          %v2806 = vpack.c.bf16 %v2745, %v2742
          %v2807 = vpack.c.bf16 %v2753, %v2750
          %v2808 = vpack.c.bf16 %v2761, %v2758
          %v2809 = vpack.c.bf16 %v2769, %v2766
          %v2810 = vpack.c.bf16 %v2777, %v2774
          %v2811 = vpack.c.bf16 %v2785, %v2782
          %v2812 = vld [vmem:[%s9] sm:$0xf]
          %v2813 = vld [vmem:[%s9 + $0x4] sm:$0xf]
          %v2814 = vld [vmem:[%s9 + $0x8] sm:$0xf]
          %v2815 = vld [vmem:[%s9 + $0xc] sm:$0xf]
          %v2816 = vld [vmem:[%s9 + $0x10] sm:$0xf]
          %v2817 = vld [vmem:[%s9 + $0x14] sm:$0xf]
          %v2818 = vld [vmem:[%s9 + $0x18] sm:$0xf]
          %v2819 = vld [vmem:[%s9 + $0x1c] sm:$0xf]
          %v2820 = vld [vmem:[%s9 + $0x20] sm:$0xf]
          %v2821 = vld [vmem:[%s9 + $0x24] sm:$0xf]
          %v2822 = vld [vmem:[%s9 + $0x28] sm:$0xf]
          %v2823 = vld [vmem:[%s9 + $0x2c] sm:$0xf]
          %v2824 = vld [vmem:[%s9 + $0x30] sm:$0xf]
          %v2825 = vld [vmem:[%s9 + $0x34] sm:$0xf]
          %v2826 = vld [vmem:[%s9 + $0x38] sm:$0xf]
          %v2827 = vld [vmem:[%s9 + $0x3c] sm:$0xf]
          %v2844 = vunpack.c.l.b16 %v2812
          %v2845 = vunpack.c.l.b16 %v2813
          %v2846 = vunpack.c.l.b16 %v2814
          %v2847 = vunpack.c.l.b16 %v2815
          %v2848 = vunpack.c.l.b16 %v2816
          %v2849 = vunpack.c.l.b16 %v2817
          %v2850 = vunpack.c.l.b16 %v2818
          %v2851 = vunpack.c.l.b16 %v2819
          %v2852 = vunpack.c.l.b16 %v2820
          %v2853 = vunpack.c.l.b16 %v2821
          %v2854 = vunpack.c.l.b16 %v2822
          %v2855 = vunpack.c.l.b16 %v2823
          %v2856 = vunpack.c.l.b16 %v2824
          %v2857 = vunpack.c.l.b16 %v2825
          %v2858 = vunpack.c.l.b16 %v2826
          %v2859 = vunpack.c.l.b16 %v2827
          %v2860 = vpack.c.b16 %v2845, %v2844
          %v2861 = vpack.c.b16 %v2847, %v2846
          %v2862 = vpack.c.b16 %v2849, %v2848
          %v2863 = vpack.c.b16 %v2851, %v2850
          %v2864 = vpack.c.b16 %v2853, %v2852
          %v2865 = vpack.c.b16 %v2855, %v2854
          %v2866 = vpack.c.b16 %v2857, %v2856
          %v2867 = vpack.c.b16 %v2859, %v2858
          %2876 = vmatprep.subr.bf16.mxu0 0
          %2877 = vmatpush1.bf16.msra.mxu0 %v2860
          %2878 = vmatprep.subr.bf16.mxu0 0
          %2879 = vmatpush1.bf16.msra.mxu0 %v2861
          %2880 = vmatprep.subr.bf16.mxu0 0
          %2881 = vmatpush1.bf16.msra.mxu0 %v2862
          %2882 = vmatprep.subr.bf16.mxu0 0
          %2883 = vmatpush1.bf16.msra.mxu0 %v2863
          %2884 = vmatprep.subr.bf16.mxu0 0
          %2885 = vmatpush1.bf16.msra.mxu0 %v2864
          %2886 = vmatprep.subr.bf16.mxu0 0
          %2887 = vmatpush1.bf16.msra.mxu0 %v2865
          %2888 = vmatprep.subr.bf16.mxu0 0
          %2889 = vmatpush1.bf16.msra.mxu0 %v2866
          %2890 = vmatprep.subr.bf16.mxu0 0
          %2891 = vmatpush1.bf16.msra.mxu0 %v2867
          %2892 = vmatprep.subr.bf16.mxu0 0
          %2893 = vmatpush1.bf16.msra.mxu0 0
          %2894 = vmatprep.subr.bf16.mxu0 0
          %2895 = vmatpush1.bf16.msra.mxu0 0
          %2896 = vmatprep.subr.bf16.mxu0 0
          %2897 = vmatpush1.bf16.msra.mxu0 0
          %2898 = vmatprep.subr.bf16.mxu0 0
          %2899 = vmatpush1.bf16.msra.mxu0 0
          %2900 = vmatprep.subr.bf16.mxu0 0
          %2901 = vmatpush1.bf16.msra.mxu0 0
          %2902 = vmatprep.subr.bf16.mxu0 0
          %2903 = vmatpush1.bf16.msra.mxu0 0
          %2904 = vmatprep.subr.bf16.mxu0 0
          %2905 = vmatpush1.bf16.msra.mxu0 0
          %2906 = vmatprep.subr.bf16.mxu0 0
          %2907 = vmatpush1.bf16.msra.mxu0 0
          %2908 = vmatprep.mubr.bf16.mxu0 0
          %2909 = vmatmul.mubr.bf16.gmra.mrb[0].mxu0 %v2796
          %v2910 = vpop.f32.mrb[0].mxu0
          %v2911 = vadd.f32 0.0, %v2910
          %v2912 = vpop.f32.mrb[0].mxu0
          %v2913 = vpop.f32.mrb[0].mxu0
          %v2914 = vadd.f32 0.0, %v2913
          %v2915 = vpop.f32.mrb[0].mxu0
          %2916 = vmatprep.mubr.bf16.mxu0 0
          %2917 = vmatmul.mubr.bf16.gmra.mrb[0].mxu0 %v2797
          %v2918 = vpop.f32.mrb[0].mxu0
          %v2919 = vadd.f32 0.0, %v2918
          %v2920 = vpop.f32.mrb[0].mxu0
          %v2921 = vpop.f32.mrb[0].mxu0
          %v2922 = vadd.f32 0.0, %v2921
          %v2923 = vpop.f32.mrb[0].mxu0
          %2924 = vmatprep.mubr.bf16.mxu0 0
          %2925 = vmatmul.mubr.bf16.gmra.mrb[0].mxu0 %v2798
          %v2926 = vpop.f32.mrb[0].mxu0
          %v2927 = vadd.f32 0.0, %v2926
          %v2928 = vpop.f32.mrb[0].mxu0
          %v2929 = vpop.f32.mrb[0].mxu0
          %v2930 = vadd.f32 0.0, %v2929
          %v2931 = vpop.f32.mrb[0].mxu0
          %2932 = vmatprep.mubr.bf16.mxu0 0
          %2933 = vmatmul.mubr.bf16.gmra.mrb[0].mxu0 %v2799
          %v2934 = vpop.f32.mrb[0].mxu0
          %v2935 = vadd.f32 0.0, %v2934
          %v2936 = vpop.f32.mrb[0].mxu0
          %v2937 = vpop.f32.mrb[0].mxu0
          %v2938 = vadd.f32 0.0, %v2937
          %v2939 = vpop.f32.mrb[0].mxu0
          %2940 = vmatprep.mubr.bf16.mxu0 0
          %2941 = vmatmul.mubr.bf16.gmra.mrb[0].mxu0 %v2800
          %v2942 = vpop.f32.mrb[0].mxu0
          %v2943 = vadd.f32 0.0, %v2942
          %v2944 = vpop.f32.mrb[0].mxu0
          %v2945 = vpop.f32.mrb[0].mxu0
          %v2946 = vadd.f32 0.0, %v2945
          %v2947 = vpop.f32.mrb[0].mxu0
          %2948 = vmatprep.mubr.bf16.mxu0 0
          %2949 = vmatmul.mubr.bf16.gmra.mrb[0].mxu0 %v2801
          %v2950 = vpop.f32.mrb[0].mxu0
          %v2951 = vadd.f32 0.0, %v2950
          %v2952 = vpop.f32.mrb[0].mxu0
          %v2953 = vpop.f32.mrb[0].mxu0
          %v2954 = vadd.f32 0.0, %v2953
          %v2955 = vpop.f32.mrb[0].mxu0
          %2956 = vmatprep.mubr.bf16.mxu0 0
          %2957 = vmatmul.mubr.bf16.gmra.mrb[0].mxu0 %v2802
          %v2958 = vpop.f32.mrb[0].mxu0
          %v2959 = vadd.f32 0.0, %v2958
          %v2960 = vpop.f32.mrb[0].mxu0
          %v2961 = vpop.f32.mrb[0].mxu0
          %v2962 = vadd.f32 0.0, %v2961
          %v2963 = vpop.f32.mrb[0].mxu0
          %2964 = vmatprep.mubr.bf16.mxu0 0
          %2965 = vmatmul.mubr.bf16.gmra.mrb[0].mxu0 %v2803
          %v2966 = vpop.f32.mrb[0].mxu0
          %v2967 = vadd.f32 0.0, %v2966
          %v2968 = vpop.f32.mrb[0].mxu0
          %v2969 = vpop.f32.mrb[0].mxu0
          %v2970 = vadd.f32 0.0, %v2969
          %v2971 = vpop.f32.mrb[0].mxu0
          %2972 = vmatprep.mubr.bf16.mxu0 0
          %2973 = vmatmul.mubr.bf16.gmra.mrb[0].mxu0 %v2804
          %v2974 = vpop.f32.mrb[0].mxu0
          %v2975 = vadd.f32 0.0, %v2974
          %v2976 = vpop.f32.mrb[0].mxu0
          %v2977 = vpop.f32.mrb[0].mxu0
          %v2978 = vadd.f32 0.0, %v2977
          %v2979 = vpop.f32.mrb[0].mxu0
          %2980 = vmatprep.mubr.bf16.mxu0 0
          %2981 = vmatmul.mubr.bf16.gmra.mrb[0].mxu0 %v2805
          %v2982 = vpop.f32.mrb[0].mxu0
          %v2983 = vadd.f32 0.0, %v2982
          %v2984 = vpop.f32.mrb[0].mxu0
          %v2985 = vpop.f32.mrb[0].mxu0
          %v2986 = vadd.f32 0.0, %v2985
          %v2987 = vpop.f32.mrb[0].mxu0
          %2988 = vmatprep.mubr.bf16.mxu0 0
          %2989 = vmatmul.mubr.bf16.gmra.mrb[0].mxu0 %v2806
          %v2990 = vpop.f32.mrb[0].mxu0
          %v2991 = vadd.f32 0.0, %v2990
          %v2992 = vpop.f32.mrb[0].mxu0
          %v2993 = vpop.f32.mrb[0].mxu0
          %v2994 = vadd.f32 0.0, %v2993
          %v2995 = vpop.f32.mrb[0].mxu0
          %2996 = vmatprep.mubr.bf16.mxu0 0
          %2997 = vmatmul.mubr.bf16.gmra.mrb[0].mxu0 %v2807
          %v2998 = vpop.f32.mrb[0].mxu0
          %v2999 = vadd.f32 0.0, %v2998
          %v3000 = vpop.f32.mrb[0].mxu0
          %v3001 = vpop.f32.mrb[0].mxu0
          %v3002 = vadd.f32 0.0, %v3001
          %v3003 = vpop.f32.mrb[0].mxu0
          %3004 = vmatprep.mubr.bf16.mxu0 0
          %3005 = vmatmul.mubr.bf16.gmra.mrb[0].mxu0 %v2808
          %v3006 = vpop.f32.mrb[0].mxu0
          %v3007 = vadd.f32 0.0, %v3006
          %v3008 = vpop.f32.mrb[0].mxu0
          %v3009 = vpop.f32.mrb[0].mxu0
          %v3010 = vadd.f32 0.0, %v3009
          %v3011 = vpop.f32.mrb[0].mxu0
          %3012 = vmatprep.mubr.bf16.mxu0 0
          %3013 = vmatmul.mubr.bf16.gmra.mrb[0].mxu0 %v2809
          %v3014 = vpop.f32.mrb[0].mxu0
          %v3015 = vadd.f32 0.0, %v3014
          %v3016 = vpop.f32.mrb[0].mxu0
          %v3017 = vpop.f32.mrb[0].mxu0
          %v3018 = vadd.f32 0.0, %v3017
          %v3019 = vpop.f32.mrb[0].mxu0
          %3020 = vmatprep.mubr.bf16.mxu0 0
          %3021 = vmatmul.mubr.bf16.gmra.mrb[0].mxu0 %v2810
          %v3022 = vpop.f32.mrb[0].mxu0
          %v3023 = vadd.f32 0.0, %v3022
          %v3024 = vpop.f32.mrb[0].mxu0
          %v3025 = vpop.f32.mrb[0].mxu0
          %v3026 = vadd.f32 0.0, %v3025
          %v3027 = vpop.f32.mrb[0].mxu0
          %3028 = vmatprep.mubr.bf16.mxu0 0
          %3029 = vmatmul.mubr.bf16.gmra.mrb[0].mxu0 %v2811
          %v3030 = vpop.f32.mrb[0].mxu0
          %v3031 = vadd.f32 0.0, %v3030
          %v3032 = vpop.f32.mrb[0].mxu0
          %v3033 = vpop.f32.mrb[0].mxu0
          %v3034 = vadd.f32 0.0, %v3033
          %v3035 = vpop.f32.mrb[0].mxu0
          %3036 = vdwg.mxu0
          %v3069 = vunpack.c.l.b16 %v532
          %v3070 = vunpack.c.l.b16 %v533
          %v3071 = vunpack.c.l.b16 %v534
          %v3072 = vunpack.c.l.b16 %v535
          %v3073 = vunpack.c.l.b16 %v536
          %v3074 = vunpack.c.l.b16 %v537
          %v3075 = vunpack.c.l.b16 %v538
          %v3076 = vunpack.c.l.b16 %v539
          %v3077 = vunpack.c.l.b16 %v540
          %v3078 = vunpack.c.l.b16 %v541
          %v3079 = vunpack.c.l.b16 %v542
          %v3080 = vunpack.c.l.b16 %v543
          %v3081 = vunpack.c.l.b16 %v544
          %v3082 = vunpack.c.l.b16 %v545
          %v3083 = vunpack.c.l.b16 %v546
          %v3084 = vunpack.c.l.b16 %v547
          %v3085 = vunpack.c.l.b16 %v548
          %v3086 = vunpack.c.l.b16 %v549
          %v3087 = vunpack.c.l.b16 %v550
          %v3088 = vunpack.c.l.b16 %v551
          %v3089 = vunpack.c.l.b16 %v552
          %v3090 = vunpack.c.l.b16 %v553
          %v3091 = vunpack.c.l.b16 %v554
          %v3092 = vunpack.c.l.b16 %v555
          %v3093 = vunpack.c.l.b16 %v556
          %v3094 = vunpack.c.l.b16 %v557
          %v3095 = vunpack.c.l.b16 %v558
          %v3096 = vunpack.c.l.b16 %v559
          %v3097 = vunpack.c.l.b16 %v560
          %v3098 = vunpack.c.l.b16 %v561
          %v3099 = vunpack.c.l.b16 %v562
          %v3100 = vunpack.c.l.b16 %v563
          %v3101 = vpack.c.b16 %v3070, %v3069
          %v3102 = vpack.c.b16 %v3072, %v3071
          %v3103 = vpack.c.b16 %v3074, %v3073
          %v3104 = vpack.c.b16 %v3076, %v3075
          %v3105 = vpack.c.b16 %v3078, %v3077
          %v3106 = vpack.c.b16 %v3080, %v3079
          %v3107 = vpack.c.b16 %v3082, %v3081
          %v3108 = vpack.c.b16 %v3084, %v3083
          %v3109 = vpack.c.b16 %v3086, %v3085
          %v3110 = vpack.c.b16 %v3088, %v3087
          %v3111 = vpack.c.b16 %v3090, %v3089
          %v3112 = vpack.c.b16 %v3092, %v3091
          %v3113 = vpack.c.b16 %v3094, %v3093
          %v3114 = vpack.c.b16 %v3096, %v3095
          %v3115 = vpack.c.b16 %v3098, %v3097
          %v3116 = vpack.c.b16 %v3100, %v3099
          %v3125 = vunpack.c.l.b16 %v2788
          %v3126 = vunpack.c.l.b16 %v2789
          %v3127 = vunpack.c.l.b16 %v2790
          %v3128 = vunpack.c.l.b16 %v2791
          %v3129 = vunpack.c.l.b16 %v2792
          %v3130 = vunpack.c.l.b16 %v2793
          %v3131 = vunpack.c.l.b16 %v2794
          %v3132 = vunpack.c.l.b16 %v2795
          %v3133 = vpack.c.b16 %v3126, %v3125
          %v3134 = vpack.c.b16 %v3128, %v3127
          %v3135 = vpack.c.b16 %v3130, %v3129
          %v3136 = vpack.c.b16 %v3132, %v3131
          %vm3141 = vcmask 523264
          %v3143 = vsel %vm3141, %v3101, 0
          %v3146 = vsel %vm3141, %v3102, 0
          %v3149 = vsel %vm3141, %v3103, 0
          %v3152 = vsel %vm3141, %v3104, 0
          %v3155 = vsel %vm3141, %v3105, 0
          %v3158 = vsel %vm3141, %v3106, 0
          %v3161 = vsel %vm3141, %v3107, 0
          %v3164 = vsel %vm3141, %v3108, 0
          %v3167 = vsel %vm3141, %v3109, 0
          %v3170 = vsel %vm3141, %v3110, 0
          %v3173 = vsel %vm3141, %v3111, 0
          %v3176 = vsel %vm3141, %v3112, 0
          %v3179 = vsel %vm3141, %v3113, 0
          %v3182 = vsel %vm3141, %v3114, 0
          %v3185 = vsel %vm3141, %v3115, 0
          %v3188 = vsel %vm3141, %v3116, 0
          %3190 = vmatprep.subr.bf16.mxu0 0
          %3191 = vmatpush1.bf16.msra.mxu0 %v3133
          %3192 = vmatprep.subr.bf16.mxu0 0
          %3193 = vmatpush1.bf16.msra.mxu0 %v3134
          %3194 = vmatprep.subr.bf16.mxu0 0
          %3195 = vmatpush1.bf16.msra.mxu0 %v3135
          %3196 = vmatprep.subr.bf16.mxu0 0
          %3197 = vmatpush1.bf16.msra.mxu0 %v3136
          %3198 = vmatprep.subr.bf16.mxu0 0
          %3199 = vmatpush1.bf16.msra.mxu0 0
          %3200 = vmatprep.subr.bf16.mxu0 0
          %3201 = vmatpush1.bf16.msra.mxu0 0
          %3202 = vmatprep.subr.bf16.mxu0 0
          %3203 = vmatpush1.bf16.msra.mxu0 0
          %3204 = vmatprep.subr.bf16.mxu0 0
          %3205 = vmatpush1.bf16.msra.mxu0 0
          %3206 = vmatprep.subr.bf16.mxu0 0
          %3207 = vmatpush1.bf16.msra.mxu0 0
          %3208 = vmatprep.subr.bf16.mxu0 0
          %3209 = vmatpush1.bf16.msra.mxu0 0
          %3210 = vmatprep.subr.bf16.mxu0 0
          %3211 = vmatpush1.bf16.msra.mxu0 0
          %3212 = vmatprep.subr.bf16.mxu0 0
          %3213 = vmatpush1.bf16.msra.mxu0 0
          %3214 = vmatprep.subr.bf16.mxu0 0
          %3215 = vmatpush1.bf16.msra.mxu0 0
          %3216 = vmatprep.subr.bf16.mxu0 0
          %3217 = vmatpush1.bf16.msra.mxu0 0
          %3218 = vmatprep.subr.bf16.mxu0 0
          %3219 = vmatpush1.bf16.msra.mxu0 0
          %3220 = vmatprep.subr.bf16.mxu0 0
          %3221 = vmatpush1.bf16.msra.mxu0 0
          %3222 = vmatprep.mubr.bf16.mxu0 0
          %3223 = vmatmul.mubr.bf16.gmra.mrb[0].mxu0 %v3143
          %v3224 = vpop.f32.mrb[0].mxu0
          %v3225 = vadd.f32 %v2911, %v3224
          %v3226 = vpop.f32.mrb[0].mxu0
          %v3227 = vpop.f32.mrb[0].mxu0
          %v3228 = vadd.f32 %v2914, %v3227
          %v3229 = vpop.f32.mrb[0].mxu0
          %3230 = vmatprep.mubr.bf16.mxu0 0
          %3231 = vmatmul.mubr.bf16.gmra.mrb[0].mxu0 %v3146
          %v3232 = vpop.f32.mrb[0].mxu0
          %v3233 = vadd.f32 %v2919, %v3232
          %v3234 = vpop.f32.mrb[0].mxu0
          %v3235 = vpop.f32.mrb[0].mxu0
          %v3236 = vadd.f32 %v2922, %v3235
          %v3237 = vpop.f32.mrb[0].mxu0
          %3238 = vmatprep.mubr.bf16.mxu0 0
          %3239 = vmatmul.mubr.bf16.gmra.mrb[0].mxu0 %v3149
          %v3240 = vpop.f32.mrb[0].mxu0
          %v3241 = vadd.f32 %v2927, %v3240
          %v3242 = vpop.f32.mrb[0].mxu0
          %v3243 = vpop.f32.mrb[0].mxu0
          %v3244 = vadd.f32 %v2930, %v3243
          %v3245 = vpop.f32.mrb[0].mxu0
          %3246 = vmatprep.mubr.bf16.mxu0 0
          %3247 = vmatmul.mubr.bf16.gmra.mrb[0].mxu0 %v3152
          %v3248 = vpop.f32.mrb[0].mxu0
          %v3249 = vadd.f32 %v2935, %v3248
          %v3250 = vpop.f32.mrb[0].mxu0
          %v3251 = vpop.f32.mrb[0].mxu0
          %v3252 = vadd.f32 %v2938, %v3251
          %v3253 = vpop.f32.mrb[0].mxu0
          %3254 = vmatprep.mubr.bf16.mxu0 0
          %3255 = vmatmul.mubr.bf16.gmra.mrb[0].mxu0 %v3155
          %v3256 = vpop.f32.mrb[0].mxu0
          %v3257 = vadd.f32 %v2943, %v3256
          %v3258 = vpop.f32.mrb[0].mxu0
          %v3259 = vpop.f32.mrb[0].mxu0
          %v3260 = vadd.f32 %v2946, %v3259
          %v3261 = vpop.f32.mrb[0].mxu0
          %3262 = vmatprep.mubr.bf16.mxu0 0
          %3263 = vmatmul.mubr.bf16.gmra.mrb[0].mxu0 %v3158
          %v3264 = vpop.f32.mrb[0].mxu0
          %v3265 = vadd.f32 %v2951, %v3264
          %v3266 = vpop.f32.mrb[0].mxu0
          %v3267 = vpop.f32.mrb[0].mxu0
          %v3268 = vadd.f32 %v2954, %v3267
          %v3269 = vpop.f32.mrb[0].mxu0
          %3270 = vmatprep.mubr.bf16.mxu0 0
          %3271 = vmatmul.mubr.bf16.gmra.mrb[0].mxu0 %v3161
          %v3272 = vpop.f32.mrb[0].mxu0
          %v3273 = vadd.f32 %v2959, %v3272
          %v3274 = vpop.f32.mrb[0].mxu0
          %v3275 = vpop.f32.mrb[0].mxu0
          %v3276 = vadd.f32 %v2962, %v3275
          %v3277 = vpop.f32.mrb[0].mxu0
          %3278 = vmatprep.mubr.bf16.mxu0 0
          %3279 = vmatmul.mubr.bf16.gmra.mrb[0].mxu0 %v3164
          %v3280 = vpop.f32.mrb[0].mxu0
          %v3281 = vadd.f32 %v2967, %v3280
          %v3282 = vpop.f32.mrb[0].mxu0
          %v3283 = vpop.f32.mrb[0].mxu0
          %v3284 = vadd.f32 %v2970, %v3283
          %v3285 = vpop.f32.mrb[0].mxu0
          %3286 = vmatprep.mubr.bf16.mxu0 0
          %3287 = vmatmul.mubr.bf16.gmra.mrb[0].mxu0 %v3167
          %v3288 = vpop.f32.mrb[0].mxu0
          %v3289 = vadd.f32 %v2975, %v3288
          %v3290 = vpop.f32.mrb[0].mxu0
          %v3291 = vpop.f32.mrb[0].mxu0
          %v3292 = vadd.f32 %v2978, %v3291
          %v3293 = vpop.f32.mrb[0].mxu0
          %3294 = vmatprep.mubr.bf16.mxu0 0
          %3295 = vmatmul.mubr.bf16.gmra.mrb[0].mxu0 %v3170
          %v3296 = vpop.f32.mrb[0].mxu0
          %v3297 = vadd.f32 %v2983, %v3296
          %v3298 = vpop.f32.mrb[0].mxu0
          %v3299 = vpop.f32.mrb[0].mxu0
          %v3300 = vadd.f32 %v2986, %v3299
          %v3301 = vpop.f32.mrb[0].mxu0
          %3302 = vmatprep.mubr.bf16.mxu0 0
          %3303 = vmatmul.mubr.bf16.gmra.mrb[0].mxu0 %v3173
          %v3304 = vpop.f32.mrb[0].mxu0
          %v3305 = vadd.f32 %v2991, %v3304
          %v3306 = vpop.f32.mrb[0].mxu0
          %v3307 = vpop.f32.mrb[0].mxu0
          %v3308 = vadd.f32 %v2994, %v3307
          %v3309 = vpop.f32.mrb[0].mxu0
          %3310 = vmatprep.mubr.bf16.mxu0 0
          %3311 = vmatmul.mubr.bf16.gmra.mrb[0].mxu0 %v3176
          %v3312 = vpop.f32.mrb[0].mxu0
          %v3313 = vadd.f32 %v2999, %v3312
          %v3314 = vpop.f32.mrb[0].mxu0
          %v3315 = vpop.f32.mrb[0].mxu0
          %v3316 = vadd.f32 %v3002, %v3315
          %v3317 = vpop.f32.mrb[0].mxu0
          %3318 = vmatprep.mubr.bf16.mxu0 0
          %3319 = vmatmul.mubr.bf16.gmra.mrb[0].mxu0 %v3179
          %v3320 = vpop.f32.mrb[0].mxu0
          %v3321 = vadd.f32 %v3007, %v3320
          %v3322 = vpop.f32.mrb[0].mxu0
          %v3323 = vpop.f32.mrb[0].mxu0
          %v3324 = vadd.f32 %v3010, %v3323
          %v3325 = vpop.f32.mrb[0].mxu0
          %3326 = vmatprep.mubr.bf16.mxu0 0
          %3327 = vmatmul.mubr.bf16.gmra.mrb[0].mxu0 %v3182
          %v3328 = vpop.f32.mrb[0].mxu0
          %v3329 = vadd.f32 %v3015, %v3328
          %v3330 = vpop.f32.mrb[0].mxu0
          %v3331 = vpop.f32.mrb[0].mxu0
          %v3332 = vadd.f32 %v3018, %v3331
          %v3333 = vpop.f32.mrb[0].mxu0
          %3334 = vmatprep.mubr.bf16.mxu0 0
          %3335 = vmatmul.mubr.bf16.gmra.mrb[0].mxu0 %v3185
          %v3336 = vpop.f32.mrb[0].mxu0
          %v3337 = vadd.f32 %v3023, %v3336
          %v3338 = vpop.f32.mrb[0].mxu0
          %v3339 = vpop.f32.mrb[0].mxu0
          %v3340 = vadd.f32 %v3026, %v3339
          %v3341 = vpop.f32.mrb[0].mxu0
          %3342 = vmatprep.mubr.bf16.mxu0 0
          %3343 = vmatmul.mubr.bf16.gmra.mrb[0].mxu0 %v3188
          %v3344 = vpop.f32.mrb[0].mxu0
          %v3345 = vadd.f32 %v3031, %v3344
          %v3346 = vpop.f32.mrb[0].mxu0
          %v3347 = vpop.f32.mrb[0].mxu0
          %v3348 = vadd.f32 %v3034, %v3347
          %v3349 = vpop.f32.mrb[0].mxu0
          %3350 = vdwg.mxu0
          %v3351 = vld [vmem:[%s10] sm:$0x1]
          %v3353 = vlaneseq
          %v3354 = vshrl.u32 %v3353, 7
          %v3355 = vsub.s32 0, %v3354
          %v3356 = vrot.slane %v3351, %v3355
          %v3358 = vadd.f32 %v3225, %v3356
          %v3359 = vadd.f32 %v3228, %v3356
          %v3360 = vadd.f32 %v3233, %v3356
          %v3361 = vadd.f32 %v3236, %v3356
          %v3362 = vadd.f32 %v3241, %v3356
          %v3363 = vadd.f32 %v3244, %v3356
          %v3364 = vadd.f32 %v3249, %v3356
          %v3365 = vadd.f32 %v3252, %v3356
          %v3366 = vadd.f32 %v3257, %v3356
          %v3367 = vadd.f32 %v3260, %v3356
          %v3368 = vadd.f32 %v3265, %v3356
          %v3369 = vadd.f32 %v3268, %v3356
          %v3370 = vadd.f32 %v3273, %v3356
          %v3371 = vadd.f32 %v3276, %v3356
          %v3372 = vadd.f32 %v3281, %v3356
          %v3373 = vadd.f32 %v3284, %v3356
          %v3374 = vadd.f32 %v3289, %v3356
          %v3375 = vadd.f32 %v3292, %v3356
          %v3376 = vadd.f32 %v3297, %v3356
          %v3377 = vadd.f32 %v3300, %v3356
          %v3378 = vadd.f32 %v3305, %v3356
          %v3379 = vadd.f32 %v3308, %v3356
          %v3380 = vadd.f32 %v3313, %v3356
          %v3381 = vadd.f32 %v3316, %v3356
          %v3382 = vadd.f32 %v3321, %v3356
          %v3383 = vadd.f32 %v3324, %v3356
          %v3384 = vadd.f32 %v3329, %v3356
          %v3385 = vadd.f32 %v3332, %v3356
          %v3386 = vadd.f32 %v3337, %v3356
          %v3387 = vadd.f32 %v3340, %v3356
          %v3388 = vadd.f32 %v3345, %v3356
          %v3389 = vadd.f32 %v3348, %v3356
          %v3390 = vmax.f32 %v3358, 0.0
          %v3391 = vmax.f32 %v3359, 0.0
          %v3392 = vmax.f32 %v3360, 0.0
          %v3393 = vmax.f32 %v3361, 0.0
          %v3394 = vmax.f32 %v3362, 0.0
          %v3395 = vmax.f32 %v3363, 0.0
          %v3396 = vmax.f32 %v3364, 0.0
          %v3397 = vmax.f32 %v3365, 0.0
          %v3398 = vmax.f32 %v3366, 0.0
          %v3399 = vmax.f32 %v3367, 0.0
          %v3400 = vmax.f32 %v3368, 0.0
          %v3401 = vmax.f32 %v3369, 0.0
          %v3402 = vmax.f32 %v3370, 0.0
          %v3403 = vmax.f32 %v3371, 0.0
          %v3404 = vmax.f32 %v3372, 0.0
          %v3405 = vmax.f32 %v3373, 0.0
          %v3406 = vmax.f32 %v3374, 0.0
          %v3407 = vmax.f32 %v3375, 0.0
          %v3408 = vmax.f32 %v3376, 0.0
          %v3409 = vmax.f32 %v3377, 0.0
          %v3410 = vmax.f32 %v3378, 0.0
          %v3411 = vmax.f32 %v3379, 0.0
          %v3412 = vmax.f32 %v3380, 0.0
          %v3413 = vmax.f32 %v3381, 0.0
          %v3414 = vmax.f32 %v3382, 0.0
          %v3415 = vmax.f32 %v3383, 0.0
          %v3416 = vmax.f32 %v3384, 0.0
          %v3417 = vmax.f32 %v3385, 0.0
          %v3418 = vmax.f32 %v3386, 0.0
          %v3419 = vmax.f32 %v3387, 0.0
          %v3420 = vmax.f32 %v3388, 0.0
          %v3421 = vmax.f32 %v3389, 0.0
          %v3422 = vpack.c.bf16 %v3391, %v3390
          %v3423 = vpack.c.bf16 %v3393, %v3392
          %v3424 = vpack.c.bf16 %v3395, %v3394
          %v3425 = vpack.c.bf16 %v3397, %v3396
          %v3426 = vpack.c.bf16 %v3399, %v3398
          %v3427 = vpack.c.bf16 %v3401, %v3400
          %v3428 = vpack.c.bf16 %v3403, %v3402
          %v3429 = vpack.c.bf16 %v3405, %v3404
          %v3430 = vpack.c.bf16 %v3407, %v3406
          %v3431 = vpack.c.bf16 %v3409, %v3408
          %v3432 = vpack.c.bf16 %v3411, %v3410
          %v3433 = vpack.c.bf16 %v3413, %v3412
          %v3434 = vpack.c.bf16 %v3415, %v3414
          %v3435 = vpack.c.bf16 %v3417, %v3416
          %v3436 = vpack.c.bf16 %v3419, %v3418
          %v3437 = vpack.c.bf16 %v3421, %v3420
          %v3438 = vld [vmem:[#allocation10] sm:$0xf]
          %v3439 = vld [vmem:[#allocation10 + $0x4] sm:$0xf]
          %v3440 = vld [vmem:[#allocation10 + $0x8] sm:$0xf]
          %v3441 = vld [vmem:[#allocation10 + $0xc] sm:$0xf]
          %v3442 = vld [vmem:[#allocation10 + $0x10] sm:$0xf]
          %v3443 = vld [vmem:[#allocation10 + $0x14] sm:$0xf]
          %v3444 = vld [vmem:[#allocation10 + $0x18] sm:$0xf]
          %v3445 = vld [vmem:[#allocation10 + $0x1c] sm:$0xf]
          %v3446 = vld [vmem:[#allocation10 + $0x20] sm:$0xf]
          %v3447 = vld [vmem:[#allocation10 + $0x24] sm:$0xf]
          %v3448 = vld [vmem:[#allocation10 + $0x28] sm:$0xf]
          %v3449 = vld [vmem:[#allocation10 + $0x2c] sm:$0xf]
          %v3450 = vld [vmem:[#allocation10 + $0x30] sm:$0xf]
          %v3451 = vld [vmem:[#allocation10 + $0x34] sm:$0xf]
          %v3452 = vld [vmem:[#allocation10 + $0x38] sm:$0xf]
          %v3453 = vld [vmem:[#allocation10 + $0x3c] sm:$0xf]
          %v3454 = vld [vmem:[%s12] sm:$0x1]
          %v3456 = vlaneseq
          %v3457 = vshrl.u32 %v3456, 7
          %v3458 = vsub.s32 0, %v3457
          %v3459 = vrot.slane %v3454, %v3458
          %v3477 = vunpack.c.l.b16 %v3438
          %v3478 = vunpack.c.l.b16 %v3439
          %v3479 = vunpack.c.l.b16 %v3440
          %v3480 = vunpack.c.l.b16 %v3441
          %v3481 = vunpack.c.l.b16 %v3442
          %v3482 = vunpack.c.l.b16 %v3443
          %v3483 = vunpack.c.l.b16 %v3444
          %v3484 = vunpack.c.l.b16 %v3445
          %v3485 = vunpack.c.l.b16 %v3446
          %v3486 = vunpack.c.l.b16 %v3447
          %v3487 = vunpack.c.l.b16 %v3448
          %v3488 = vunpack.c.l.b16 %v3449
          %v3489 = vunpack.c.l.b16 %v3450
          %v3490 = vunpack.c.l.b16 %v3451
          %v3491 = vunpack.c.l.b16 %v3452
          %v3492 = vunpack.c.l.b16 %v3453
          %v3493 = vpack.c.b16 %v3478, %v3477
          %v3494 = vpack.c.b16 %v3480, %v3479
          %v3495 = vpack.c.b16 %v3482, %v3481
          %v3496 = vpack.c.b16 %v3484, %v3483
          %v3497 = vpack.c.b16 %v3486, %v3485
          %v3498 = vpack.c.b16 %v3488, %v3487
          %v3499 = vpack.c.b16 %v3490, %v3489
          %v3500 = vpack.c.b16 %v3492, %v3491
          %3509 = vmatprep.subr.bf16.mxu0 0
          %3510 = vmatpush1.bf16.msra.mxu0 %v3493
          %3511 = vmatprep.subr.bf16.mxu0 0
          %3512 = vmatpush1.bf16.msra.mxu0 %v3494
          %3513 = vmatprep.subr.bf16.mxu0 0
          %3514 = vmatpush1.bf16.msra.mxu0 %v3495
          %3515 = vmatprep.subr.bf16.mxu0 0
          %3516 = vmatpush1.bf16.msra.mxu0 %v3496
          %3517 = vmatprep.subr.bf16.mxu0 0
          %3518 = vmatpush1.bf16.msra.mxu0 %v3497
          %3519 = vmatprep.subr.bf16.mxu0 0
          %3520 = vmatpush1.bf16.msra.mxu0 %v3498
          %3521 = vmatprep.subr.bf16.mxu0 0
          %3522 = vmatpush1.bf16.msra.mxu0 %v3499
          %3523 = vmatprep.subr.bf16.mxu0 0
          %3524 = vmatpush1.bf16.msra.mxu0 %v3500
          %3525 = vmatprep.subr.bf16.mxu0 0
          %3526 = vmatpush1.bf16.msra.mxu0 0
          %3527 = vmatprep.subr.bf16.mxu0 0
          %3528 = vmatpush1.bf16.msra.mxu0 0
          %3529 = vmatprep.subr.bf16.mxu0 0
          %3530 = vmatpush1.bf16.msra.mxu0 0
          %3531 = vmatprep.subr.bf16.mxu0 0
          %3532 = vmatpush1.bf16.msra.mxu0 0
          %3533 = vmatprep.subr.bf16.mxu0 0
          %3534 = vmatpush1.bf16.msra.mxu0 0
          %3535 = vmatprep.subr.bf16.mxu0 0
          %3536 = vmatpush1.bf16.msra.mxu0 0
          %3537 = vmatprep.subr.bf16.mxu0 0
          %3538 = vmatpush1.bf16.msra.mxu0 0
          %3539 = vmatprep.subr.bf16.mxu0 0
          %3540 = vmatpush1.bf16.msra.mxu0 0
          %3541 = vmatprep.mubr.bf16.mxu0 0
          %3542 = vmatmul.mubr.bf16.gmra.mrb[0].mxu0 %v3422
          %v3543 = vpop.f32.mrb[0].mxu0
          %v3544 = vadd.f32 %v3459, %v3543
          %v3545 = vpop.f32.mrb[0].mxu0
          %v3546 = vpop.f32.mrb[0].mxu0
          %v3547 = vadd.f32 %v3459, %v3546
          %v3548 = vpop.f32.mrb[0].mxu0
          %3549 = vmatprep.mubr.bf16.mxu0 0
          %3550 = vmatmul.mubr.bf16.gmra.mrb[0].mxu0 %v3423
          %v3551 = vpop.f32.mrb[0].mxu0
          %v3552 = vadd.f32 %v3459, %v3551
          %v3553 = vpop.f32.mrb[0].mxu0
          %v3554 = vpop.f32.mrb[0].mxu0
          %v3555 = vadd.f32 %v3459, %v3554
          %v3556 = vpop.f32.mrb[0].mxu0
          %3557 = vmatprep.mubr.bf16.mxu0 0
          %3558 = vmatmul.mubr.bf16.gmra.mrb[0].mxu0 %v3424
          %v3559 = vpop.f32.mrb[0].mxu0
          %v3560 = vadd.f32 %v3459, %v3559
          %v3561 = vpop.f32.mrb[0].mxu0
          %v3562 = vpop.f32.mrb[0].mxu0
          %v3563 = vadd.f32 %v3459, %v3562
          %v3564 = vpop.f32.mrb[0].mxu0
          %3565 = vmatprep.mubr.bf16.mxu0 0
          %3566 = vmatmul.mubr.bf16.gmra.mrb[0].mxu0 %v3425
          %v3567 = vpop.f32.mrb[0].mxu0
          %v3568 = vadd.f32 %v3459, %v3567
          %v3569 = vpop.f32.mrb[0].mxu0
          %v3570 = vpop.f32.mrb[0].mxu0
          %v3571 = vadd.f32 %v3459, %v3570
          %v3572 = vpop.f32.mrb[0].mxu0
          %3573 = vmatprep.mubr.bf16.mxu0 0
          %3574 = vmatmul.mubr.bf16.gmra.mrb[0].mxu0 %v3426
          %v3575 = vpop.f32.mrb[0].mxu0
          %v3576 = vadd.f32 %v3459, %v3575
          %v3577 = vpop.f32.mrb[0].mxu0
          %v3578 = vpop.f32.mrb[0].mxu0
          %v3579 = vadd.f32 %v3459, %v3578
          %v3580 = vpop.f32.mrb[0].mxu0
          %3581 = vmatprep.mubr.bf16.mxu0 0
          %3582 = vmatmul.mubr.bf16.gmra.mrb[0].mxu0 %v3427
          %v3583 = vpop.f32.mrb[0].mxu0
          %v3584 = vadd.f32 %v3459, %v3583
          %v3585 = vpop.f32.mrb[0].mxu0
          %v3586 = vpop.f32.mrb[0].mxu0
          %v3587 = vadd.f32 %v3459, %v3586
          %v3588 = vpop.f32.mrb[0].mxu0
          %3589 = vmatprep.mubr.bf16.mxu0 0
          %3590 = vmatmul.mubr.bf16.gmra.mrb[0].mxu0 %v3428
          %v3591 = vpop.f32.mrb[0].mxu0
          %v3592 = vadd.f32 %v3459, %v3591
          %v3593 = vpop.f32.mrb[0].mxu0
          %v3594 = vpop.f32.mrb[0].mxu0
          %v3595 = vadd.f32 %v3459, %v3594
          %v3596 = vpop.f32.mrb[0].mxu0
          %3597 = vmatprep.mubr.bf16.mxu0 0
          %3598 = vmatmul.mubr.bf16.gmra.mrb[0].mxu0 %v3429
          %v3599 = vpop.f32.mrb[0].mxu0
          %v3600 = vadd.f32 %v3459, %v3599
          %v3601 = vpop.f32.mrb[0].mxu0
          %v3602 = vpop.f32.mrb[0].mxu0
          %v3603 = vadd.f32 %v3459, %v3602
          %v3604 = vpop.f32.mrb[0].mxu0
          %3605 = vmatprep.mubr.bf16.mxu0 0
          %3606 = vmatmul.mubr.bf16.gmra.mrb[0].mxu0 %v3430
          %v3607 = vpop.f32.mrb[0].mxu0
          %v3608 = vadd.f32 %v3459, %v3607
          %v3609 = vpop.f32.mrb[0].mxu0
          %v3610 = vpop.f32.mrb[0].mxu0
          %v3611 = vadd.f32 %v3459, %v3610
          %v3612 = vpop.f32.mrb[0].mxu0
          %3613 = vmatprep.mubr.bf16.mxu0 0
          %3614 = vmatmul.mubr.bf16.gmra.mrb[0].mxu0 %v3431
          %v3615 = vpop.f32.mrb[0].mxu0
          %v3616 = vadd.f32 %v3459, %v3615
          %v3617 = vpop.f32.mrb[0].mxu0
          %v3618 = vpop.f32.mrb[0].mxu0
          %v3619 = vadd.f32 %v3459, %v3618
          %v3620 = vpop.f32.mrb[0].mxu0
          %3621 = vmatprep.mubr.bf16.mxu0 0
          %3622 = vmatmul.mubr.bf16.gmra.mrb[0].mxu0 %v3432
          %v3623 = vpop.f32.mrb[0].mxu0
          %v3624 = vadd.f32 %v3459, %v3623
          %v3625 = vpop.f32.mrb[0].mxu0
          %v3626 = vpop.f32.mrb[0].mxu0
          %v3627 = vadd.f32 %v3459, %v3626
          %v3628 = vpop.f32.mrb[0].mxu0
          %3629 = vmatprep.mubr.bf16.mxu0 0
          %3630 = vmatmul.mubr.bf16.gmra.mrb[0].mxu0 %v3433
          %v3631 = vpop.f32.mrb[0].mxu0
          %v3632 = vadd.f32 %v3459, %v3631
          %v3633 = vpop.f32.mrb[0].mxu0
          %v3634 = vpop.f32.mrb[0].mxu0
          %v3635 = vadd.f32 %v3459, %v3634
          %v3636 = vpop.f32.mrb[0].mxu0
          %3637 = vmatprep.mubr.bf16.mxu0 0
          %3638 = vmatmul.mubr.bf16.gmra.mrb[0].mxu0 %v3434
          %v3639 = vpop.f32.mrb[0].mxu0
          %v3640 = vadd.f32 %v3459, %v3639
          %v3641 = vpop.f32.mrb[0].mxu0
          %v3642 = vpop.f32.mrb[0].mxu0
          %v3643 = vadd.f32 %v3459, %v3642
          %v3644 = vpop.f32.mrb[0].mxu0
          %3645 = vmatprep.mubr.bf16.mxu0 0
          %3646 = vmatmul.mubr.bf16.gmra.mrb[0].mxu0 %v3435
          %v3647 = vpop.f32.mrb[0].mxu0
          %v3648 = vadd.f32 %v3459, %v3647
          %v3649 = vpop.f32.mrb[0].mxu0
          %v3650 = vpop.f32.mrb[0].mxu0
          %v3651 = vadd.f32 %v3459, %v3650
          %v3652 = vpop.f32.mrb[0].mxu0
          %3653 = vmatprep.mubr.bf16.mxu0 0
          %3654 = vmatmul.mubr.bf16.gmra.mrb[0].mxu0 %v3436
          %v3655 = vpop.f32.mrb[0].mxu0
          %v3656 = vadd.f32 %v3459, %v3655
          %v3657 = vpop.f32.mrb[0].mxu0
          %v3658 = vpop.f32.mrb[0].mxu0
          %v3659 = vadd.f32 %v3459, %v3658
          %v3660 = vpop.f32.mrb[0].mxu0
          %3661 = vmatprep.mubr.bf16.mxu0 0
          %3662 = vmatmul.mubr.bf16.gmra.mrb[0].mxu0 %v3437
          %v3663 = vpop.f32.mrb[0].mxu0
          %v3664 = vadd.f32 %v3459, %v3663
          %v3665 = vpop.f32.mrb[0].mxu0
          %v3666 = vpop.f32.mrb[0].mxu0
          %v3667 = vadd.f32 %v3459, %v3666
          %v3668 = vpop.f32.mrb[0].mxu0
          %3669 = vdwg.mxu0
          %s3670 = sld [smem:[#allocation4]]
          %p3671 = scmp.lt.s32.totalorder %s3670, %s465
          %p3672 = scmp.gt.s32.totalorder %s2194, %s464
          %p3673 = pnand %p3671, %p3672
          %p3674 = pneg %p3673
          // Predicated region
          $region105: #{tpu_custom_call.1} parent=103 // pred_check
            _
          $region106: #{tpu_custom_call.1} parent=103 // pred_check_branch
            %3676 = sbr.rel (%p3673) target = $region108
          $region107: #{tpu_custom_call.1} parent=103 // pred_region
            %vm3677 = vcmp.eq.s32.totalorder %v2424, 0
            %vm3678 = vcmp.eq.s32.totalorder %v2425, 0
            %vm3679 = vcmp.eq.s32.totalorder %v2426, 0
            %vm3680 = vcmp.eq.s32.totalorder %v2427, 0
            %vm3681 = vcmp.eq.s32.totalorder %v2428, 0
            %vm3682 = vcmp.eq.s32.totalorder %v2429, 0
            %vm3683 = vcmp.eq.s32.totalorder %v2430, 0
            %vm3684 = vcmp.eq.s32.totalorder %v2431, 0
            %vm3685 = vcmp.eq.s32.totalorder %v2432, 0
            %vm3686 = vcmp.eq.s32.totalorder %v2433, 0
            %vm3687 = vcmp.eq.s32.totalorder %v2434, 0
            %vm3688 = vcmp.eq.s32.totalorder %v2435, 0
            %vm3689 = vcmp.eq.s32.totalorder %v2436, 0
            %vm3690 = vcmp.eq.s32.totalorder %v2437, 0
            %vm3691 = vcmp.eq.s32.totalorder %v2438, 0
            %vm3692 = vcmp.eq.s32.totalorder %v2439, 0
            %vm3693 = vcmp.eq.s32.totalorder %v2440, 0
            %vm3694 = vcmp.eq.s32.totalorder %v2441, 0
            %vm3695 = vcmp.eq.s32.totalorder %v2442, 0
            %vm3696 = vcmp.eq.s32.totalorder %v2443, 0
            %vm3697 = vcmp.eq.s32.totalorder %v2444, 0
            %vm3698 = vcmp.eq.s32.totalorder %v2445, 0
            %vm3699 = vcmp.eq.s32.totalorder %v2446, 0
            %vm3700 = vcmp.eq.s32.totalorder %v2447, 0
            %vm3701 = vcmp.eq.s32.totalorder %v2448, 0
            %vm3702 = vcmp.eq.s32.totalorder %v2449, 0
            %vm3703 = vcmp.eq.s32.totalorder %v2450, 0
            %vm3704 = vcmp.eq.s32.totalorder %v2451, 0
            %vm3705 = vcmp.eq.s32.totalorder %v2452, 0
            %vm3706 = vcmp.eq.s32.totalorder %v2453, 0
            %vm3707 = vcmp.eq.s32.totalorder %v2454, 0
            %vm3708 = vcmp.eq.s32.totalorder %v2455, 0
            %v3709 = vsel %vm3677, 1, 0
            %v3710 = vsel %vm3678, 1, 0
            %v3711 = vsel %vm3679, 1, 0
            %v3712 = vsel %vm3680, 1, 0
            %v3713 = vsel %vm3681, 1, 0
            %v3714 = vsel %vm3682, 1, 0
            %v3715 = vsel %vm3683, 1, 0
            %v3716 = vsel %vm3684, 1, 0
            %v3717 = vsel %vm3685, 1, 0
            %v3718 = vsel %vm3686, 1, 0
            %v3719 = vsel %vm3687, 1, 0
            %v3720 = vsel %vm3688, 1, 0
            %v3721 = vsel %vm3689, 1, 0
            %v3722 = vsel %vm3690, 1, 0
            %v3723 = vsel %vm3691, 1, 0
            %v3724 = vsel %vm3692, 1, 0
            %v3725 = vsel %vm3693, 1, 0
            %v3726 = vsel %vm3694, 1, 0
            %v3727 = vsel %vm3695, 1, 0
            %v3728 = vsel %vm3696, 1, 0
            %v3729 = vsel %vm3697, 1, 0
            %v3730 = vsel %vm3698, 1, 0
            %v3731 = vsel %vm3699, 1, 0
            %v3732 = vsel %vm3700, 1, 0
            %v3733 = vsel %vm3701, 1, 0
            %v3734 = vsel %vm3702, 1, 0
            %v3735 = vsel %vm3703, 1, 0
            %v3736 = vsel %vm3704, 1, 0
            %v3737 = vsel %vm3705, 1, 0
            %v3738 = vsel %vm3706, 1, 0
            %v3739 = vsel %vm3707, 1, 0
            %v3740 = vsel %vm3708, 1, 0
            %vm3741 = vcmp.eq.s32.totalorder %v3709, 1
            %vm3742 = vcmp.eq.s32.totalorder %v3710, 1
            %vm3743 = vcmp.eq.s32.totalorder %v3711, 1
            %vm3744 = vcmp.eq.s32.totalorder %v3712, 1
            %vm3745 = vcmp.eq.s32.totalorder %v3713, 1
            %vm3746 = vcmp.eq.s32.totalorder %v3714, 1
            %vm3747 = vcmp.eq.s32.totalorder %v3715, 1
            %vm3748 = vcmp.eq.s32.totalorder %v3716, 1
            %vm3749 = vcmp.eq.s32.totalorder %v3717, 1
            %vm3750 = vcmp.eq.s32.totalorder %v3718, 1
            %vm3751 = vcmp.eq.s32.totalorder %v3719, 1
            %vm3752 = vcmp.eq.s32.totalorder %v3720, 1
            %vm3753 = vcmp.eq.s32.totalorder %v3721, 1
            %vm3754 = vcmp.eq.s32.totalorder %v3722, 1
            %vm3755 = vcmp.eq.s32.totalorder %v3723, 1
            %vm3756 = vcmp.eq.s32.totalorder %v3724, 1
            %vm3757 = vcmp.eq.s32.totalorder %v3725, 1
            %vm3758 = vcmp.eq.s32.totalorder %v3726, 1
            %vm3759 = vcmp.eq.s32.totalorder %v3727, 1
            %vm3760 = vcmp.eq.s32.totalorder %v3728, 1
            %vm3761 = vcmp.eq.s32.totalorder %v3729, 1
            %vm3762 = vcmp.eq.s32.totalorder %v3730, 1
            %vm3763 = vcmp.eq.s32.totalorder %v3731, 1
            %vm3764 = vcmp.eq.s32.totalorder %v3732, 1
            %vm3765 = vcmp.eq.s32.totalorder %v3733, 1
            %vm3766 = vcmp.eq.s32.totalorder %v3734, 1
            %vm3767 = vcmp.eq.s32.totalorder %v3735, 1
            %vm3768 = vcmp.eq.s32.totalorder %v3736, 1
            %vm3769 = vcmp.eq.s32.totalorder %v3737, 1
            %vm3770 = vcmp.eq.s32.totalorder %v3738, 1
            %vm3771 = vcmp.eq.s32.totalorder %v3739, 1
            %vm3772 = vcmp.eq.s32.totalorder %v3740, 1
            %v3773 = vsel %vm3741, %v3544, -inf
            %v3774 = vsel %vm3742, %v3547, -inf
            %v3775 = vsel %vm3743, %v3552, -inf
            %v3776 = vsel %vm3744, %v3555, -inf
            %v3777 = vsel %vm3745, %v3560, -inf
            %v3778 = vsel %vm3746, %v3563, -inf
            %v3779 = vsel %vm3747, %v3568, -inf
            %v3780 = vsel %vm3748, %v3571, -inf
            %v3781 = vsel %vm3749, %v3576, -inf
            %v3782 = vsel %vm3750, %v3579, -inf
            %v3783 = vsel %vm3751, %v3584, -inf
            %v3784 = vsel %vm3752, %v3587, -inf
            %v3785 = vsel %vm3753, %v3592, -inf
            %v3786 = vsel %vm3754, %v3595, -inf
            %v3787 = vsel %vm3755, %v3600, -inf
            %v3788 = vsel %vm3756, %v3603, -inf
            %v3789 = vsel %vm3757, %v3608, -inf
            %v3790 = vsel %vm3758, %v3611, -inf
            %v3791 = vsel %vm3759, %v3616, -inf
            %v3792 = vsel %vm3760, %v3619, -inf
            %v3793 = vsel %vm3761, %v3624, -inf
            %v3794 = vsel %vm3762, %v3627, -inf
            %v3795 = vsel %vm3763, %v3632, -inf
            %v3796 = vsel %vm3764, %v3635, -inf
            %v3797 = vsel %vm3765, %v3640, -inf
            %v3798 = vsel %vm3766, %v3643, -inf
            %v3799 = vsel %vm3767, %v3648, -inf
            %v3800 = vsel %vm3768, %v3651, -inf
            %v3801 = vsel %vm3769, %v3656, -inf
            %v3802 = vsel %vm3770, %v3659, -inf
            %v3803 = vsel %vm3771, %v3664, -inf
            %v3804 = vsel %vm3772, %v3667, -inf
            %v3805 = vmax.f32 %v3773, %v3777
            %v3806 = vmax.f32 %v3774, %v3778
            %v3807 = vmax.f32 %v3775, %v3779
            %v3808 = vmax.f32 %v3776, %v3780
            %v3809 = vmax.f32 %v3805, %v3781
            %v3810 = vmax.f32 %v3806, %v3782
            %v3811 = vmax.f32 %v3807, %v3783
            %v3812 = vmax.f32 %v3808, %v3784
            %v3813 = vmax.f32 %v3809, %v3785
            %v3814 = vmax.f32 %v3810, %v3786
            %v3815 = vmax.f32 %v3811, %v3787
            %v3816 = vmax.f32 %v3812, %v3788
            %v3817 = vmax.f32 %v3813, %v3789
            %v3818 = vmax.f32 %v3814, %v3790
            %v3819 = vmax.f32 %v3815, %v3791
            %v3820 = vmax.f32 %v3816, %v3792
            %v3821 = vmax.f32 %v3817, %v3793
            %v3822 = vmax.f32 %v3818, %v3794
            %v3823 = vmax.f32 %v3819, %v3795
            %v3824 = vmax.f32 %v3820, %v3796
            %v3825 = vmax.f32 %v3821, %v3797
            %v3826 = vmax.f32 %v3822, %v3798
            %v3827 = vmax.f32 %v3823, %v3799
            %v3828 = vmax.f32 %v3824, %v3800
            %v3829 = vmax.f32 %v3825, %v3801
            %v3830 = vmax.f32 %v3826, %v3802
            %v3831 = vmax.f32 %v3827, %v3803
            %v3832 = vmax.f32 %v3828, %v3804
            %v3833 = vmax.f32 %v3829, %v3830
            %v3834 = vmax.f32 %v3831, %v3832
            %v3835 = vmax.f32 %v3833, %v3834
            %v3836 = vrot.slane %v3835, 4
            %v3837 = vmax.f32 %v3835, %v3836
            %v3838 = vrot.slane %v3837, 2
            %v3839 = vmax.f32 %v3837, %v3838
            %v3840 = vrot.slane %v3839, 1
            %v3841 = vmax.f32 %v3839, %v3840
            %v3842 = vld [vmem:[#allocation11] sm:$0x1]
            %v3843 = vmax.f32 %v3842, %v3841
            %3844 = vst [vmem:[#allocation11] sm:$0x1] %v3843
          $region108: #{tpu_custom_call.1} parent=103 // pred_fallthru
            _
          %s3845 = sld [smem:[#allocation4 + $0x1]]
          %s3846 = sld [smem:[#allocation4 + $0x2]]
          %p3847 = scmp.lt.s32.totalorder %s3845, %s465
          %p3848 = scmp.gt.s32.totalorder %s3846, %s464
          %p3849 = pnand %p3847, %p3848
          %p3850 = pneg %p3849
          // Predicated region
          $region109: #{tpu_custom_call.1} parent=103 // pred_check
            _
          $region110: #{tpu_custom_call.1} parent=103 // pred_check_branch
            %3852 = sbr.rel (%p3849) target = $region112
          $region111: #{tpu_custom_call.1} parent=103 // pred_region
            %vm3853 = vcmp.eq.s32.totalorder %v2424, 1
            %vm3854 = vcmp.eq.s32.totalorder %v2425, 1
            %vm3855 = vcmp.eq.s32.totalorder %v2426, 1
            %vm3856 = vcmp.eq.s32.totalorder %v2427, 1
            %vm3857 = vcmp.eq.s32.totalorder %v2428, 1
            %vm3858 = vcmp.eq.s32.totalorder %v2429, 1
            %vm3859 = vcmp.eq.s32.totalorder %v2430, 1
            %vm3860 = vcmp.eq.s32.totalorder %v2431, 1
            %vm3861 = vcmp.eq.s32.totalorder %v2432, 1
            %vm3862 = vcmp.eq.s32.totalorder %v2433, 1
            %vm3863 = vcmp.eq.s32.totalorder %v2434, 1
            %vm3864 = vcmp.eq.s32.totalorder %v2435, 1
            %vm3865 = vcmp.eq.s32.totalorder %v2436, 1
            %vm3866 = vcmp.eq.s32.totalorder %v2437, 1
            %vm3867 = vcmp.eq.s32.totalorder %v2438, 1
            %vm3868 = vcmp.eq.s32.totalorder %v2439, 1
            %vm3869 = vcmp.eq.s32.totalorder %v2440, 1
            %vm3870 = vcmp.eq.s32.totalorder %v2441, 1
            %vm3871 = vcmp.eq.s32.totalorder %v2442, 1
            %vm3872 = vcmp.eq.s32.totalorder %v2443, 1
            %vm3873 = vcmp.eq.s32.totalorder %v2444, 1
            %vm3874 = vcmp.eq.s32.totalorder %v2445, 1
            %vm3875 = vcmp.eq.s32.totalorder %v2446, 1
            %vm3876 = vcmp.eq.s32.totalorder %v2447, 1
            %vm3877 = vcmp.eq.s32.totalorder %v2448, 1
            %vm3878 = vcmp.eq.s32.totalorder %v2449, 1
            %vm3879 = vcmp.eq.s32.totalorder %v2450, 1
            %vm3880 = vcmp.eq.s32.totalorder %v2451, 1
            %vm3881 = vcmp.eq.s32.totalorder %v2452, 1
            %vm3882 = vcmp.eq.s32.totalorder %v2453, 1
            %vm3883 = vcmp.eq.s32.totalorder %v2454, 1
            %vm3884 = vcmp.eq.s32.totalorder %v2455, 1
            %v3885 = vsel %vm3853, 1, 0
            %v3886 = vsel %vm3854, 1, 0
            %v3887 = vsel %vm3855, 1, 0
            %v3888 = vsel %vm3856, 1, 0
            %v3889 = vsel %vm3857, 1, 0
            %v3890 = vsel %vm3858, 1, 0
            %v3891 = vsel %vm3859, 1, 0
            %v3892 = vsel %vm3860, 1, 0
            %v3893 = vsel %vm3861, 1, 0
            %v3894 = vsel %vm3862, 1, 0
            %v3895 = vsel %vm3863, 1, 0
            %v3896 = vsel %vm3864, 1, 0
            %v3897 = vsel %vm3865, 1, 0
            %v3898 = vsel %vm3866, 1, 0
            %v3899 = vsel %vm3867, 1, 0
            %v3900 = vsel %vm3868, 1, 0
            %v3901 = vsel %vm3869, 1, 0
            %v3902 = vsel %vm3870, 1, 0
            %v3903 = vsel %vm3871, 1, 0
            %v3904 = vsel %vm3872, 1, 0
            %v3905 = vsel %vm3873, 1, 0
            %v3906 = vsel %vm3874, 1, 0
            %v3907 = vsel %vm3875, 1, 0
            %v3908 = vsel %vm3876, 1, 0
            %v3909 = vsel %vm3877, 1, 0
            %v3910 = vsel %vm3878, 1, 0
            %v3911 = vsel %vm3879, 1, 0
            %v3912 = vsel %vm3880, 1, 0
            %v3913 = vsel %vm3881, 1, 0
            %v3914 = vsel %vm3882, 1, 0
            %v3915 = vsel %vm3883, 1, 0
            %v3916 = vsel %vm3884, 1, 0
            %vm3917 = vcmp.eq.s32.totalorder %v3885, 1
            %vm3918 = vcmp.eq.s32.totalorder %v3886, 1
            %vm3919 = vcmp.eq.s32.totalorder %v3887, 1
            %vm3920 = vcmp.eq.s32.totalorder %v3888, 1
            %vm3921 = vcmp.eq.s32.totalorder %v3889, 1
            %vm3922 = vcmp.eq.s32.totalorder %v3890, 1
            %vm3923 = vcmp.eq.s32.totalorder %v3891, 1
            %vm3924 = vcmp.eq.s32.totalorder %v3892, 1
            %vm3925 = vcmp.eq.s32.totalorder %v3893, 1
            %vm3926 = vcmp.eq.s32.totalorder %v3894, 1
            %vm3927 = vcmp.eq.s32.totalorder %v3895, 1
            %vm3928 = vcmp.eq.s32.totalorder %v3896, 1
            %vm3929 = vcmp.eq.s32.totalorder %v3897, 1
            %vm3930 = vcmp.eq.s32.totalorder %v3898, 1
            %vm3931 = vcmp.eq.s32.totalorder %v3899, 1
            %vm3932 = vcmp.eq.s32.totalorder %v3900, 1
            %vm3933 = vcmp.eq.s32.totalorder %v3901, 1
            %vm3934 = vcmp.eq.s32.totalorder %v3902, 1
            %vm3935 = vcmp.eq.s32.totalorder %v3903, 1
            %vm3936 = vcmp.eq.s32.totalorder %v3904, 1
            %vm3937 = vcmp.eq.s32.totalorder %v3905, 1
            %vm3938 = vcmp.eq.s32.totalorder %v3906, 1
            %vm3939 = vcmp.eq.s32.totalorder %v3907, 1
            %vm3940 = vcmp.eq.s32.totalorder %v3908, 1
            %vm3941 = vcmp.eq.s32.totalorder %v3909, 1
            %vm3942 = vcmp.eq.s32.totalorder %v3910, 1
            %vm3943 = vcmp.eq.s32.totalorder %v3911, 1
            %vm3944 = vcmp.eq.s32.totalorder %v3912, 1
            %vm3945 = vcmp.eq.s32.totalorder %v3913, 1
            %vm3946 = vcmp.eq.s32.totalorder %v3914, 1
            %vm3947 = vcmp.eq.s32.totalorder %v3915, 1
            %vm3948 = vcmp.eq.s32.totalorder %v3916, 1
            %v3949 = vsel %vm3917, %v3544, -inf
            %v3950 = vsel %vm3918, %v3547, -inf
            %v3951 = vsel %vm3919, %v3552, -inf
            %v3952 = vsel %vm3920, %v3555, -inf
            %v3953 = vsel %vm3921, %v3560, -inf
            %v3954 = vsel %vm3922, %v3563, -inf
            %v3955 = vsel %vm3923, %v3568, -inf
            %v3956 = vsel %vm3924, %v3571, -inf
            %v3957 = vsel %vm3925, %v3576, -inf
            %v3958 = vsel %vm3926, %v3579, -inf
            %v3959 = vsel %vm3927, %v3584, -inf
            %v3960 = vsel %vm3928, %v3587, -inf
            %v3961 = vsel %vm3929, %v3592, -inf
            %v3962 = vsel %vm3930, %v3595, -inf
            %v3963 = vsel %vm3931, %v3600, -inf
            %v3964 = vsel %vm3932, %v3603, -inf
            %v3965 = vsel %vm3933, %v3608, -inf
            %v3966 = vsel %vm3934, %v3611, -inf
            %v3967 = vsel %vm3935, %v3616, -inf
            %v3968 = vsel %vm3936, %v3619, -inf
            %v3969 = vsel %vm3937, %v3624, -inf
            %v3970 = vsel %vm3938, %v3627, -inf
            %v3971 = vsel %vm3939, %v3632, -inf
            %v3972 = vsel %vm3940, %v3635, -inf
            %v3973 = vsel %vm3941, %v3640, -inf
            %v3974 = vsel %vm3942, %v3643, -inf
            %v3975 = vsel %vm3943, %v3648, -inf
            %v3976 = vsel %vm3944, %v3651, -inf
            %v3977 = vsel %vm3945, %v3656, -inf
            %v3978 = vsel %vm3946, %v3659, -inf
            %v3979 = vsel %vm3947, %v3664, -inf
            %v3980 = vsel %vm3948, %v3667, -inf
            %v3981 = vmax.f32 %v3949, %v3953
            %v3982 = vmax.f32 %v3950, %v3954
            %v3983 = vmax.f32 %v3951, %v3955
            %v3984 = vmax.f32 %v3952, %v3956
            %v3985 = vmax.f32 %v3981, %v3957
            %v3986 = vmax.f32 %v3982, %v3958
            %v3987 = vmax.f32 %v3983, %v3959
            %v3988 = vmax.f32 %v3984, %v3960
            %v3989 = vmax.f32 %v3985, %v3961
            %v3990 = vmax.f32 %v3986, %v3962
            %v3991 = vmax.f32 %v3987, %v3963
            %v3992 = vmax.f32 %v3988, %v3964
            %v3993 = vmax.f32 %v3989, %v3965
            %v3994 = vmax.f32 %v3990, %v3966
            %v3995 = vmax.f32 %v3991, %v3967
            %v3996 = vmax.f32 %v3992, %v3968
            %v3997 = vmax.f32 %v3993, %v3969
            %v3998 = vmax.f32 %v3994, %v3970
            %v3999 = vmax.f32 %v3995, %v3971
            %v4000 = vmax.f32 %v3996, %v3972
            %v4001 = vmax.f32 %v3997, %v3973
            %v4002 = vmax.f32 %v3998, %v3974
            %v4003 = vmax.f32 %v3999, %v3975
            %v4004 = vmax.f32 %v4000, %v3976
            %v4005 = vmax.f32 %v4001, %v3977
            %v4006 = vmax.f32 %v4002, %v3978
            %v4007 = vmax.f32 %v4003, %v3979
            %v4008 = vmax.f32 %v4004, %v3980
            %v4009 = vmax.f32 %v4005, %v4006
            %v4010 = vmax.f32 %v4007, %v4008
            %v4011 = vmax.f32 %v4009, %v4010
            %v4012 = vrot.slane %v4011, 4
            %v4013 = vmax.f32 %v4011, %v4012
            %v4014 = vrot.slane %v4013, 2
            %v4015 = vmax.f32 %v4013, %v4014
            %v4016 = vrot.slane %v4015, 1
            %v4017 = vmax.f32 %v4015, %v4016
            %v4018 = vld [vmem:[#allocation11 + $0x1] sm:$0x1]
            %v4019 = vmax.f32 %v4018, %v4017
            %4020 = vst [vmem:[#allocation11 + $0x1] sm:$0x1] %v4019
          $region112: #{tpu_custom_call.1} parent=103 // pred_fallthru
            _
          %s4021 = sld [smem:[#allocation4 + $0x2]]
          %s4022 = sld [smem:[#allocation4 + $0x3]]
          %p4023 = scmp.lt.s32.totalorder %s4021, %s465
          %p4024 = scmp.gt.s32.totalorder %s4022, %s464
          %p4025 = pnand %p4023, %p4024
          %p4026 = pneg %p4025
          // Predicated region
          $region113: #{tpu_custom_call.1} parent=103 // pred_check
            _
          $region114: #{tpu_custom_call.1} parent=103 // pred_check_branch
            %4028 = sbr.rel (%p4025) target = $region116
          $region115: #{tpu_custom_call.1} parent=103 // pred_region
            %vm4029 = vcmp.eq.s32.totalorder %v2424, 2
            %vm4030 = vcmp.eq.s32.totalorder %v2425, 2
            %vm4031 = vcmp.eq.s32.totalorder %v2426, 2
            %vm4032 = vcmp.eq.s32.totalorder %v2427, 2
            %vm4033 = vcmp.eq.s32.totalorder %v2428, 2
            %vm4034 = vcmp.eq.s32.totalorder %v2429, 2
            %vm4035 = vcmp.eq.s32.totalorder %v2430, 2
            %vm4036 = vcmp.eq.s32.totalorder %v2431, 2
            %vm4037 = vcmp.eq.s32.totalorder %v2432, 2
            %vm4038 = vcmp.eq.s32.totalorder %v2433, 2
            %vm4039 = vcmp.eq.s32.totalorder %v2434, 2
            %vm4040 = vcmp.eq.s32.totalorder %v2435, 2
            %vm4041 = vcmp.eq.s32.totalorder %v2436, 2
            %vm4042 = vcmp.eq.s32.totalorder %v2437, 2
            %vm4043 = vcmp.eq.s32.totalorder %v2438, 2
            %vm4044 = vcmp.eq.s32.totalorder %v2439, 2
            %vm4045 = vcmp.eq.s32.totalorder %v2440, 2
            %vm4046 = vcmp.eq.s32.totalorder %v2441, 2
            %vm4047 = vcmp.eq.s32.totalorder %v2442, 2
            %vm4048 = vcmp.eq.s32.totalorder %v2443, 2
            %vm4049 = vcmp.eq.s32.totalorder %v2444, 2
            %vm4050 = vcmp.eq.s32.totalorder %v2445, 2
            %vm4051 = vcmp.eq.s32.totalorder %v2446, 2
            %vm4052 = vcmp.eq.s32.totalorder %v2447, 2
            %vm4053 = vcmp.eq.s32.totalorder %v2448, 2
            %vm4054 = vcmp.eq.s32.totalorder %v2449, 2
            %vm4055 = vcmp.eq.s32.totalorder %v2450, 2
            %vm4056 = vcmp.eq.s32.totalorder %v2451, 2
            %vm4057 = vcmp.eq.s32.totalorder %v2452, 2
            %vm4058 = vcmp.eq.s32.totalorder %v2453, 2
            %vm4059 = vcmp.eq.s32.totalorder %v2454, 2
            %vm4060 = vcmp.eq.s32.totalorder %v2455, 2
            %v4061 = vsel %vm4029, 1, 0
            %v4062 = vsel %vm4030, 1, 0
            %v4063 = vsel %vm4031, 1, 0
            %v4064 = vsel %vm4032, 1, 0
            %v4065 = vsel %vm4033, 1, 0
            %v4066 = vsel %vm4034, 1, 0
            %v4067 = vsel %vm4035, 1, 0
            %v4068 = vsel %vm4036, 1, 0
            %v4069 = vsel %vm4037, 1, 0
            %v4070 = vsel %vm4038, 1, 0
            %v4071 = vsel %vm4039, 1, 0
            %v4072 = vsel %vm4040, 1, 0
            %v4073 = vsel %vm4041, 1, 0
            %v4074 = vsel %vm4042, 1, 0
            %v4075 = vsel %vm4043, 1, 0
            %v4076 = vsel %vm4044, 1, 0
            %v4077 = vsel %vm4045, 1, 0
            %v4078 = vsel %vm4046, 1, 0
            %v4079 = vsel %vm4047, 1, 0
            %v4080 = vsel %vm4048, 1, 0
            %v4081 = vsel %vm4049, 1, 0
            %v4082 = vsel %vm4050, 1, 0
            %v4083 = vsel %vm4051, 1, 0
            %v4084 = vsel %vm4052, 1, 0
            %v4085 = vsel %vm4053, 1, 0
            %v4086 = vsel %vm4054, 1, 0
            %v4087 = vsel %vm4055, 1, 0
            %v4088 = vsel %vm4056, 1, 0
            %v4089 = vsel %vm4057, 1, 0
            %v4090 = vsel %vm4058, 1, 0
            %v4091 = vsel %vm4059, 1, 0
            %v4092 = vsel %vm4060, 1, 0
            %vm4093 = vcmp.eq.s32.totalorder %v4061, 1
            %vm4094 = vcmp.eq.s32.totalorder %v4062, 1
            %vm4095 = vcmp.eq.s32.totalorder %v4063, 1
            %vm4096 = vcmp.eq.s32.totalorder %v4064, 1
            %vm4097 = vcmp.eq.s32.totalorder %v4065, 1
            %vm4098 = vcmp.eq.s32.totalorder %v4066, 1
            %vm4099 = vcmp.eq.s32.totalorder %v4067, 1
            %vm4100 = vcmp.eq.s32.totalorder %v4068, 1
            %vm4101 = vcmp.eq.s32.totalorder %v4069, 1
            %vm4102 = vcmp.eq.s32.totalorder %v4070, 1
            %vm4103 = vcmp.eq.s32.totalorder %v4071, 1
            %vm4104 = vcmp.eq.s32.totalorder %v4072, 1
            %vm4105 = vcmp.eq.s32.totalorder %v4073, 1
            %vm4106 = vcmp.eq.s32.totalorder %v4074, 1
            %vm4107 = vcmp.eq.s32.totalorder %v4075, 1
            %vm4108 = vcmp.eq.s32.totalorder %v4076, 1
            %vm4109 = vcmp.eq.s32.totalorder %v4077, 1
            %vm4110 = vcmp.eq.s32.totalorder %v4078, 1
            %vm4111 = vcmp.eq.s32.totalorder %v4079, 1
            %vm4112 = vcmp.eq.s32.totalorder %v4080, 1
            %vm4113 = vcmp.eq.s32.totalorder %v4081, 1
            %vm4114 = vcmp.eq.s32.totalorder %v4082, 1
            %vm4115 = vcmp.eq.s32.totalorder %v4083, 1
            %vm4116 = vcmp.eq.s32.totalorder %v4084, 1
            %vm4117 = vcmp.eq.s32.totalorder %v4085, 1
            %vm4118 = vcmp.eq.s32.totalorder %v4086, 1
            %vm4119 = vcmp.eq.s32.totalorder %v4087, 1
            %vm4120 = vcmp.eq.s32.totalorder %v4088, 1
            %vm4121 = vcmp.eq.s32.totalorder %v4089, 1
            %vm4122 = vcmp.eq.s32.totalorder %v4090, 1
            %vm4123 = vcmp.eq.s32.totalorder %v4091, 1
            %vm4124 = vcmp.eq.s32.totalorder %v4092, 1
            %v4125 = vsel %vm4093, %v3544, -inf
            %v4126 = vsel %vm4094, %v3547, -inf
            %v4127 = vsel %vm4095, %v3552, -inf
            %v4128 = vsel %vm4096, %v3555, -inf
            %v4129 = vsel %vm4097, %v3560, -inf
            %v4130 = vsel %vm4098, %v3563, -inf
            %v4131 = vsel %vm4099, %v3568, -inf
            %v4132 = vsel %vm4100, %v3571, -inf
            %v4133 = vsel %vm4101, %v3576, -inf
            %v4134 = vsel %vm4102, %v3579, -inf
            %v4135 = vsel %vm4103, %v3584, -inf
            %v4136 = vsel %vm4104, %v3587, -inf
            %v4137 = vsel %vm4105, %v3592, -inf
            %v4138 = vsel %vm4106, %v3595, -inf
            %v4139 = vsel %vm4107, %v3600, -inf
            %v4140 = vsel %vm4108, %v3603, -inf
            %v4141 = vsel %vm4109, %v3608, -inf
            %v4142 = vsel %vm4110, %v3611, -inf
            %v4143 = vsel %vm4111, %v3616, -inf
            %v4144 = vsel %vm4112, %v3619, -inf
            %v4145 = vsel %vm4113, %v3624, -inf
            %v4146 = vsel %vm4114, %v3627, -inf
            %v4147 = vsel %vm4115, %v3632, -inf
            %v4148 = vsel %vm4116, %v3635, -inf
            %v4149 = vsel %vm4117, %v3640, -inf
            %v4150 = vsel %vm4118, %v3643, -inf
            %v4151 = vsel %vm4119, %v3648, -inf
            %v4152 = vsel %vm4120, %v3651, -inf
            %v4153 = vsel %vm4121, %v3656, -inf
            %v4154 = vsel %vm4122, %v3659, -inf
            %v4155 = vsel %vm4123, %v3664, -inf
            %v4156 = vsel %vm4124, %v3667, -inf
            %v4157 = vmax.f32 %v4125, %v4129
            %v4158 = vmax.f32 %v4126, %v4130
            %v4159 = vmax.f32 %v4127, %v4131
            %v4160 = vmax.f32 %v4128, %v4132
            %v4161 = vmax.f32 %v4157, %v4133
            %v4162 = vmax.f32 %v4158, %v4134
            %v4163 = vmax.f32 %v4159, %v4135
            %v4164 = vmax.f32 %v4160, %v4136
            %v4165 = vmax.f32 %v4161, %v4137
            %v4166 = vmax.f32 %v4162, %v4138
            %v4167 = vmax.f32 %v4163, %v4139
            %v4168 = vmax.f32 %v4164, %v4140
            %v4169 = vmax.f32 %v4165, %v4141
            %v4170 = vmax.f32 %v4166, %v4142
            %v4171 = vmax.f32 %v4167, %v4143
            %v4172 = vmax.f32 %v4168, %v4144
            %v4173 = vmax.f32 %v4169, %v4145
            %v4174 = vmax.f32 %v4170, %v4146
            %v4175 = vmax.f32 %v4171, %v4147
            %v4176 = vmax.f32 %v4172, %v4148
            %v4177 = vmax.f32 %v4173, %v4149
            %v4178 = vmax.f32 %v4174, %v4150
            %v4179 = vmax.f32 %v4175, %v4151
            %v4180 = vmax.f32 %v4176, %v4152
            %v4181 = vmax.f32 %v4177, %v4153
            %v4182 = vmax.f32 %v4178, %v4154
            %v4183 = vmax.f32 %v4179, %v4155
            %v4184 = vmax.f32 %v4180, %v4156
            %v4185 = vmax.f32 %v4181, %v4182
            %v4186 = vmax.f32 %v4183, %v4184
            %v4187 = vmax.f32 %v4185, %v4186
            %v4188 = vrot.slane %v4187, 4
            %v4189 = vmax.f32 %v4187, %v4188
            %v4190 = vrot.slane %v4189, 2
            %v4191 = vmax.f32 %v4189, %v4190
            %v4192 = vrot.slane %v4191, 1
            %v4193 = vmax.f32 %v4191, %v4192
            %v4194 = vld [vmem:[#allocation11 + $0x2] sm:$0x1]
            %v4195 = vmax.f32 %v4194, %v4193
            %4196 = vst [vmem:[#allocation11 + $0x2] sm:$0x1] %v4195
          $region116: #{tpu_custom_call.1} parent=103 // pred_fallthru
            _
        $region104: #{tpu_custom_call.1} parent=67 // pred_fallthru
          _
        // Predicated region
        $region117: #{tpu_custom_call.1} parent=67 // pred_check
          %p4197 = pneg %p313
        $region118: #{tpu_custom_call.1} parent=67 // pred_check_branch
          %4199 = sbr.rel (%p4197) target = $region120
        $region119: #{tpu_custom_call.1} parent=67 // pred_region
          %s4201 = ssub.s32 64, 64
          %4202 = vsyncadd [#allocation7], %s4201
          %s4204 = sshll.u32 [#allocation11], 4
          %s4205 = int_to_ptr.vmem [resolvable:$true] %s4204
          %4207 = dma.vmem_to_hbm [thread:$0]  %s4205, 64, %s13, [#allocation7]
        $region120: #{tpu_custom_call.1} parent=67 // pred_fallthru
          _
        // Predicated region
        $region121: #{tpu_custom_call.1} parent=67 // pred_check
          %p4208 = pneg %p313
        $region122: #{tpu_custom_call.1} parent=67 // pred_check_branch
          %4210 = sbr.rel (%p4208) target = $region124
        $region123: #{tpu_custom_call.1} parent=67 // pred_region
          %4211 = dma.done [#allocation7], 64
        $region124: #{tpu_custom_call.1} parent=67 // pred_fallthru
          _
      $region68: #{tpu_custom_call.1} parent=5 // pred_fallthru
        _
      %p4212 = scmp.le.s32.totalorder 2, %s26
      // Predicated region
      $region125: #{tpu_custom_call.1} parent=5 // pred_check
        %p4213 = pneg %p4212
      $region126: #{tpu_custom_call.1} parent=5 // pred_check_branch
        %4215 = sbr.rel (%p4213) target = $region128
      $region127: #{tpu_custom_call.1} parent=5 // pred_region
        %s4216 = ssub.s32 %s26, 2
      $region128: #{tpu_custom_call.1} parent=5 // pred_fallthru
        _
    $region6: #{tpu_custom_call.1} parent=1 // loop_footer
      %s30 = sadd.s32 1, %s26
    $region7: #{tpu_custom_call.1} parent=1 // loop_footer_branch
      %25 = sbr.rel target = $region3
    $region8: #{tpu_custom_call.1} parent=1 // loop_exit
      _
    %4217 = vsyncpa [#allocation6], 1
    %s4218 = scalar_lea.sflag [#allocation6], 1
    %4219 = vsyncpa %s4218, 1
    %4220 = vsyncpa [#allocation9], 1
    %4221 = vsyncpa [#allocation7], 1
    %s4222 = scalar_lea.sflag [#allocation7], 1
    %4223 = vsyncpa %s4222, 1

</llo_original>
